<compile_context>
chip_gen: v7x
topology: tpu7x:2x2x1
jax: 0.10.0
libtpu: 0.0.40
codegen_flags: <defaults>
</compile_context>

<pallas_src>
import functools

import jax
import jax.numpy as jnp
from jax import lax
from jax.experimental import pallas as pl
from jax.experimental.pallas import tpu as pltpu


def _shift_rows(a, off, row_pos, num_rows):
    """out[r, :] = a[r + off, :] if the source row stays inside its image, else 0.

    `row_pos` is each flattened row's index inside its H-image; zeroing rows
    whose source falls outside [0, num_rows) also kills the roll wrap-around
    and any bleed across image boundaries in the flattened (B*C*H, W) layout.
    Lowers to a sublane rotation + select (no padded scratch buffer).
    """
    if off == 0:
        return a
    rolled = jnp.roll(a, -off, axis=0)
    valid = (row_pos + off >= 0) & (row_pos + off <= num_rows - 1)
    return jnp.where(valid, rolled, 0.0)


def _shift_cols(a, off, col_pos, num_cols):
    """Same as _shift_rows but along the lane (W) axis."""
    if off == 0:
        return a
    rolled = jnp.roll(a, -off, axis=1)
    valid = (col_pos + off >= 0) & (col_pos + off <= num_cols - 1)
    return jnp.where(valid, rolled, 0.0)


def _dropblock_kernel(hpos_ref, x_ref, out_ref, *, bs, pad, k, H):
    R, W = x_ref.shape                          # R = B*C*H, lane axis = W
    offs = list(range(-pad, bs - pad))          # stride-1 window offsets
    inv_area = 1.0 / float(bs * bs)

    x = x_ref[...]
    hpos = hpos_ref[...]                        # (R, 1) row index inside each image
    wpos = lax.broadcasted_iota(jnp.int32, (R, W), 1)
    xa = jnp.abs(x).astype(jnp.float32)

    # ---- avg_pool2d(|x|, k=bs, stride=1, pad=bs//2, count_include_pad) as a
    # separable box filter: bs sublane-shifted adds + bs lane-shifted adds.
    # Even bs: offsets [-pad, bs-1-pad] reproduce torch's [:-1, :-1] trim.
    # Exact f32 adds keep the element ranking faithful to the PyTorch module.
    col = _shift_rows(xa, offs[0], hpos, H)
    for o in offs[1:]:
        col = col + _shift_rows(xa, o, hpos, H)
    thr = _shift_cols(col, offs[0], wpos, W)
    for o in offs[1:]:
        thr = thr + _shift_cols(col, o, wpos, W)
    thr = thr * inv_area

    # ---- k-th largest element of thr (== torch.topk(thr.flatten(), k)[0][-1]).
    # thr >= 0, so its int32 bit patterns order identically to the floats; a
    # greedy MSB->LSB search finds the largest v with count(thr >= v) >= k.
    # Counts accumulate in int32 (exact for any tensor size), compared to int k.
    bits = pltpu.bitcast(thr, jnp.int32)
    kth = jnp.int32(0)
    for b in range(30, -1, -1):
        cand = kth | jnp.int32(1 << b)
        cnt = jnp.sum((bits >= cand).astype(jnp.int32))
        kth = jnp.where(cnt >= k, cand, kth)
    # TODO(synk): an O(1)-pass histogram/radix top-k needs a vector scatter,
    # which Pallas TPU does not expose; the 31 lane-parallel compare+reduce
    # passes are kept to preserve torch-exact rank semantics.

    mask = (bits > kth).astype(jnp.float32)     # strict >, exactly like torch

    # ---- max_pool2d(mask, k=bs, stride=1, pad=bs//2) == (box-count > 0) for a
    # 0/1 mask.  W-direction box-count runs on the (otherwise idle) MXU via a
    # banded 0/1 matrix; 0/1 matmuls are exact in any MXU precision.
    jj = lax.broadcasted_iota(jnp.int32, (W, W), 0)   # input column
    ww = lax.broadcasted_iota(jnp.int32, (W, W), 1)   # output column
    band_w = ((jj >= ww - pad) & (jj <= ww + (bs - 1 - pad))).astype(jnp.float32)
    cnt_w = jnp.dot(mask, band_w, preferred_element_type=jnp.float32)
    cnt_hw = _shift_rows(cnt_w, offs[0], hpos, H)
    for o in offs[1:]:
        cnt_hw = cnt_hw + _shift_rows(cnt_w, o, hpos, H)
    dropped = cnt_hw > 0.5                      # block_mask == 0 here

    # out = x * block_mask, fused as a select (block_mask is exactly 0/1).
    out_ref[...] = jnp.where(dropped, jnp.zeros_like(x), x).astype(out_ref.dtype)


def adaptive_dropblock_channel2d(x, *, drop_prob, block_size, training=True):
    assert x.ndim == 4, "Expected (bsize, channels, height, width)"
    if (not training) or drop_prob <= 0.0:
        return x  # eval / zero-prob path is identity, same as the torch module

    B, C, H, W = x.shape
    pad = block_size // 2
    gamma = drop_prob / float(block_size ** 2)
    numel = B * C * H * W
    k = int(numel * gamma)
    if k < 1:
        # torch.topk(..., 0)[0][-1] would raise; mirror that instead of faking it
        raise ValueError("drop_prob too small: top-k with k=0")

    R = B * C * H
    x2 = x.reshape(R, W)                         # free XLA reshape, W on lanes
    hpos = jnp.tile(jnp.arange(H, dtype=jnp.int32), B * C).reshape(R, 1)

    kernel = functools.partial(_dropblock_kernel, bs=block_size, pad=pad, k=k, H=H)

    itemsize = jnp.dtype(x.dtype).itemsize
    cost = pl.CostEstimate(
        flops=int(numel * (6 * block_size + 2 * 31 + 8) + 2 * R * W * W),
        transcendentals=0,
        bytes_accessed=int(2 * numel * itemsize + R * 4))
    # Scoped-VMEM budget sized from the actual live f32 temporaries (per review).
    vmem_bytes = int(min(64 * 2 ** 20, max(16 * 2 ** 20, 14 * numel * 4 + (1 << 21))))

    out2 = pl.pallas_call(
        kernel,
        out_shape=jax.ShapeDtypeStruct((R, W), x.dtype),
        grid=(1,),  # global top-k couples every element => one grid step
        in_specs=[pl.BlockSpec((R, 1), lambda i: (0, 0)),
                  pl.BlockSpec((R, W), lambda i: (0, 0))],
        out_specs=pl.BlockSpec((R, W), lambda i: (0, 0)),
        compiler_params=pltpu.CompilerParams(
            dimension_semantics=("arbitrary",),
            vmem_limit_bytes=vmem_bytes),
        cost_estimate=cost,
    )(hpos, x2)
    return out2.reshape(B, C, H, W)


def _reference(x, *, drop_prob, block_size):
    """Pure-JAX reference mirroring the kernel's exact arithmetic order."""
    B, C, H, W = x.shape
    bs = block_size
    pad = bs // 2
    offs = list(range(-pad, bs - pad))
    R = B * C * H
    x2 = x.reshape(R, W)
    hpos = jnp.tile(jnp.arange(H, dtype=jnp.int32), B * C).reshape(R, 1)
    wpos = jnp.arange(W, dtype=jnp.int32).reshape(1, W)

    xa = jnp.abs(x2).astype(jnp.float32)
    col = _shift_rows(xa, offs[0], hpos, H)
    for o in offs[1:]:
        col = col + _shift_rows(xa, o, hpos, H)
    thr = _shift_cols(col, offs[0], wpos, W)
    for o in offs[1:]:
        thr = thr + _shift_cols(col, o, wpos, W)
    thr = thr * (1.0 / float(bs * bs))

    k = int(B * C * H * W * drop_prob / float(bs * bs))
    kth = jnp.sort(thr.reshape(-1))[::-1][k - 1]
    mask = (thr > kth).astype(jnp.float32)

    mw = _shift_cols(mask, offs[0], wpos, W)
    for o in offs[1:]:
        mw = jnp.maximum(mw, _shift_cols(mask, o, wpos, W))
    bm = _shift_rows(mw, offs[0], hpos, H)
    for o in offs[1:]:
        bm = jnp.maximum(bm, _shift_rows(mw, o, hpos, H))
    out2 = jnp.where(bm > 0.5, jnp.zeros_like(x2), x2)
    return out2.reshape(B, C, H, W)


if __name__ == "__main__":
    key = jax.random.PRNGKey(0)
    x = jax.random.normal(key, (2, 4, 16, 16), dtype=jnp.float32)

    drop_prob = 0.25
    block_size = 3

    out = adaptive_dropblock_channel2d(
        x, drop_prob=drop_prob, block_size=block_size, training=True)
    out = jax.block_until_ready(out)

    ref = _reference(x, drop_prob=drop_prob, block_size=block_size)
    assert out.shape == x.shape and out.dtype == x.dtype
    assert bool(jnp.array_equal(out, ref)), "Pallas kernel mismatch vs JAX reference"

    print("KERNEL_OK")
</pallas_src>

<mosaic_0001>
module attributes {stable_mosaic.version = 11 : i64} {
  func.func @_dropblock_kernel(%arg0: i32, %arg1: memref<128x1xi32, #tpu.memory_space<vmem>>, %arg2: memref<128x16xf32, #tpu.memory_space<vmem>>, %arg3: memref<128x16xf32, #tpu.memory_space<vmem>>) attributes {dimension_semantics = [#tpu.dimension_semantics<arbitrary>], iteration_bounds = array<i64: 1>, scalar_prefetch = 0 : i64, scratch_operands = 0 : i64, tpu.core_type = #tpu.core_type<tc>, window_params = [{pipeline_mode = #tpu.pipeline_mode<synchronous>, transform_indices = @transform_0, window_bounds = array<i64: 128, 1>}, {pipeline_mode = #tpu.pipeline_mode<synchronous>, transform_indices = @transform_1, window_bounds = array<i64: 128, 16>}, {pipeline_mode = #tpu.pipeline_mode<synchronous>, transform_indices = @transform_2, window_bounds = array<i64: 128, 16>}]} {
    %c0 = arith.constant 0 : index
    %c0_0 = arith.constant 0 : index
    %0 = vector.load %arg2[%c0, %c0_0] : memref<128x16xf32, #tpu.memory_space<vmem>>, vector<128x16xf32>
    %c0_1 = arith.constant 0 : index
    %c0_2 = arith.constant 0 : index
    %1 = vector.load %arg1[%c0_1, %c0_2] : memref<128x1xi32, #tpu.memory_space<vmem>>, vector<128x1xi32>
    %2 = tpu.iota {dimensions = array<i32: 1>} : vector<128x16xi32>
    %3 = math.absf %0 : vector<128x16xf32>
    %4 = vector.extract_strided_slice %3 {offsets = [127, 0], sizes = [1, 16], strides = [1, 1]} : vector<128x16xf32> to vector<1x16xf32>
    %5 = vector.extract_strided_slice %3 {offsets = [0, 0], sizes = [127, 16], strides = [1, 1]} : vector<128x16xf32> to vector<127x16xf32>
    %6 = tpu.concatenate %4, %5 in 0 : vector<1x16xf32>, vector<127x16xf32> -> vector<128x16xf32>
    %c-1_i32 = arith.constant -1 : i32
    %7 = vector.broadcast %c-1_i32 : i32 to vector<128x1xi32>
    %8 = arith.addi %1, %7 : vector<128x1xi32>
    %c0_i32 = arith.constant 0 : i32
    %9 = vector.broadcast %c0_i32 : i32 to vector<128x1xi32>
    %10 = arith.cmpi sge, %8, %9 : vector<128x1xi32>
    %c-1_i32_3 = arith.constant -1 : i32
    %11 = vector.broadcast %c-1_i32_3 : i32 to vector<128x1xi32>
    %12 = arith.addi %1, %11 : vector<128x1xi32>
    %c15_i32 = arith.constant 15 : i32
    %13 = vector.broadcast %c15_i32 : i32 to vector<128x1xi32>
    %14 = arith.cmpi sle, %12, %13 : vector<128x1xi32>
    %15 = arith.andi %10, %14 : vector<128x1xi1>
    %cst = arith.constant 0.000000e+00 : f32
    %16 = vector.shape_cast %15 : vector<128x1xi1> to vector<128x1xi1>
    %17 = vector.broadcast %16 : vector<128x1xi1> to vector<128x16xi1>
    %18 = vector.broadcast %cst : f32 to vector<128x16xf32>
    %19 = arith.select %17, %6, %18 : vector<128x16xi1>, vector<128x16xf32>
    %20 = arith.addf %19, %3 : vector<128x16xf32>
    %21 = vector.extract_strided_slice %3 {offsets = [1, 0], sizes = [127, 16], strides = [1, 1]} : vector<128x16xf32> to vector<127x16xf32>
    %22 = vector.extract_strided_slice %3 {offsets = [0, 0], sizes = [1, 16], strides = [1, 1]} : vector<128x16xf32> to vector<1x16xf32>
    %23 = tpu.concatenate %21, %22 in 0 : vector<127x16xf32>, vector<1x16xf32> -> vector<128x16xf32>
    %c1_i32 = arith.constant 1 : i32
    %24 = vector.broadcast %c1_i32 : i32 to vector<128x1xi32>
    %25 = arith.addi %1, %24 : vector<128x1xi32>
    %c0_i32_4 = arith.constant 0 : i32
    %26 = vector.broadcast %c0_i32_4 : i32 to vector<128x1xi32>
    %27 = arith.cmpi sge, %25, %26 : vector<128x1xi32>
    %c1_i32_5 = arith.constant 1 : i32
    %28 = vector.broadcast %c1_i32_5 : i32 to vector<128x1xi32>
    %29 = arith.addi %1, %28 : vector<128x1xi32>
    %c15_i32_6 = arith.constant 15 : i32
    %30 = vector.broadcast %c15_i32_6 : i32 to vector<128x1xi32>
    %31 = arith.cmpi sle, %29, %30 : vector<128x1xi32>
    %32 = arith.andi %27, %31 : vector<128x1xi1>
    %cst_7 = arith.constant 0.000000e+00 : f32
    %33 = vector.shape_cast %32 : vector<128x1xi1> to vector<128x1xi1>
    %34 = vector.broadcast %33 : vector<128x1xi1> to vector<128x16xi1>
    %35 = vector.broadcast %cst_7 : f32 to vector<128x16xf32>
    %36 = arith.select %34, %23, %35 : vector<128x16xi1>, vector<128x16xf32>
    %37 = arith.addf %20, %36 : vector<128x16xf32>
    %38 = vector.extract_strided_slice %37 {offsets = [0, 15], sizes = [128, 1], strides = [1, 1]} : vector<128x16xf32> to vector<128x1xf32>
    %39 = vector.extract_strided_slice %37 {offsets = [0, 0], sizes = [128, 15], strides = [1, 1]} : vector<128x16xf32> to vector<128x15xf32>
    %40 = tpu.concatenate %38, %39 in 1 : vector<128x1xf32>, vector<128x15xf32> -> vector<128x16xf32>
    %c-1_i32_8 = arith.constant -1 : i32
    %41 = vector.broadcast %c-1_i32_8 : i32 to vector<128x16xi32>
    %42 = arith.addi %2, %41 : vector<128x16xi32>
    %c0_i32_9 = arith.constant 0 : i32
    %43 = vector.broadcast %c0_i32_9 : i32 to vector<128x16xi32>
    %44 = arith.cmpi sge, %42, %43 : vector<128x16xi32>
    %c-1_i32_10 = arith.constant -1 : i32
    %45 = vector.broadcast %c-1_i32_10 : i32 to vector<128x16xi32>
    %46 = arith.addi %2, %45 : vector<128x16xi32>
    %c15_i32_11 = arith.constant 15 : i32
    %47 = vector.broadcast %c15_i32_11 : i32 to vector<128x16xi32>
    %48 = arith.cmpi sle, %46, %47 : vector<128x16xi32>
    %49 = arith.andi %44, %48 : vector<128x16xi1>
    %cst_12 = arith.constant 0.000000e+00 : f32
    %50 = vector.broadcast %cst_12 : f32 to vector<128x16xf32>
    %51 = arith.select %49, %40, %50 : vector<128x16xi1>, vector<128x16xf32>
    %52 = arith.addf %51, %37 : vector<128x16xf32>
    %53 = vector.extract_strided_slice %37 {offsets = [0, 1], sizes = [128, 15], strides = [1, 1]} : vector<128x16xf32> to vector<128x15xf32>
    %54 = vector.extract_strided_slice %37 {offsets = [0, 0], sizes = [128, 1], strides = [1, 1]} : vector<128x16xf32> to vector<128x1xf32>
    %55 = tpu.concatenate %53, %54 in 1 : vector<128x15xf32>, vector<128x1xf32> -> vector<128x16xf32>
    %c1_i32_13 = arith.constant 1 : i32
    %56 = vector.broadcast %c1_i32_13 : i32 to vector<128x16xi32>
    %57 = arith.addi %2, %56 : vector<128x16xi32>
    %c0_i32_14 = arith.constant 0 : i32
    %58 = vector.broadcast %c0_i32_14 : i32 to vector<128x16xi32>
    %59 = arith.cmpi sge, %57, %58 : vector<128x16xi32>
    %c1_i32_15 = arith.constant 1 : i32
    %60 = vector.broadcast %c1_i32_15 : i32 to vector<128x16xi32>
    %61 = arith.addi %2, %60 : vector<128x16xi32>
    %c15_i32_16 = arith.constant 15 : i32
    %62 = vector.broadcast %c15_i32_16 : i32 to vector<128x16xi32>
    %63 = arith.cmpi sle, %61, %62 : vector<128x16xi32>
    %64 = arith.andi %59, %63 : vector<128x16xi1>
    %cst_17 = arith.constant 0.000000e+00 : f32
    %65 = vector.broadcast %cst_17 : f32 to vector<128x16xf32>
    %66 = arith.select %64, %55, %65 : vector<128x16xi1>, vector<128x16xf32>
    %67 = arith.addf %52, %66 : vector<128x16xf32>
    %cst_18 = arith.constant 0.111111112 : f32
    %68 = vector.broadcast %cst_18 : f32 to vector<128x16xf32>
    %69 = arith.mulf %67, %68 : vector<128x16xf32>
    %70 = tpu.bitcast %69 : vector<128x16xf32> -> vector<128x16xi32>
    %c0_i32_19 = arith.constant 0 : i32
    %c1073741824_i32 = arith.constant 1073741824 : i32
    %71 = arith.ori %c0_i32_19, %c1073741824_i32 : i32
    %72 = vector.broadcast %71 : i32 to vector<128x16xi32>
    %73 = arith.cmpi sge, %70, %72 : vector<128x16xi32>
    %74 = arith.extui %73 : vector<128x16xi1> to vector<128x16xi32>
    %75 = vector.shape_cast %74 : vector<128x16xi32> to vector<1x128x16xi32>
    %cst_20 = arith.constant dense<0> : vector<1xi32>
    %76 = vector.multi_reduction <add>, %75, %cst_20 [1, 2] : vector<1x128x16xi32> to vector<1xi32>
    %77 = vector.shape_cast %76 : vector<1xi32> to vector<1x1x1xi32>
    %78 = vector.extract %77[0, 0, 0] : i32 from vector<1x1x1xi32>
    %c56_i32 = arith.constant 56 : i32
    %79 = arith.cmpi sge, %78, %c56_i32 : i32
    %c0_i32_21 = arith.constant 0 : i32
    %80 = arith.select %79, %71, %c0_i32_21 : i32
    %c536870912_i32 = arith.constant 536870912 : i32
    %81 = arith.ori %80, %c536870912_i32 : i32
    %82 = vector.broadcast %81 : i32 to vector<128x16xi32>
    %83 = arith.cmpi sge, %70, %82 : vector<128x16xi32>
    %84 = arith.extui %83 : vector<128x16xi1> to vector<128x16xi32>
    %85 = vector.shape_cast %84 : vector<128x16xi32> to vector<1x128x16xi32>
    %cst_22 = arith.constant dense<0> : vector<1xi32>
    %86 = vector.multi_reduction <add>, %85, %cst_22 [1, 2] : vector<1x128x16xi32> to vector<1xi32>
    %87 = vector.shape_cast %86 : vector<1xi32> to vector<1x1x1xi32>
    %88 = vector.extract %87[0, 0, 0] : i32 from vector<1x1x1xi32>
    %c56_i32_23 = arith.constant 56 : i32
    %89 = arith.cmpi sge, %88, %c56_i32_23 : i32
    %90 = arith.select %89, %81, %80 : i32
    %c268435456_i32 = arith.constant 268435456 : i32
    %91 = arith.ori %90, %c268435456_i32 : i32
    %92 = vector.broadcast %91 : i32 to vector<128x16xi32>
    %93 = arith.cmpi sge, %70, %92 : vector<128x16xi32>
    %94 = arith.extui %93 : vector<128x16xi1> to vector<128x16xi32>
    %95 = vector.shape_cast %94 : vector<128x16xi32> to vector<1x128x16xi32>
    %cst_24 = arith.constant dense<0> : vector<1xi32>
    %96 = vector.multi_reduction <add>, %95, %cst_24 [1, 2] : vector<1x128x16xi32> to vector<1xi32>
    %97 = vector.shape_cast %96 : vector<1xi32> to vector<1x1x1xi32>
    %98 = vector.extract %97[0, 0, 0] : i32 from vector<1x1x1xi32>
    %c56_i32_25 = arith.constant 56 : i32
    %99 = arith.cmpi sge, %98, %c56_i32_25 : i32
    %100 = arith.select %99, %91, %90 : i32
    %c134217728_i32 = arith.constant 134217728 : i32
    %101 = arith.ori %100, %c134217728_i32 : i32
    %102 = vector.broadcast %101 : i32 to vector<128x16xi32>
    %103 = arith.cmpi sge, %70, %102 : vector<128x16xi32>
    %104 = arith.extui %103 : vector<128x16xi1> to vector<128x16xi32>
    %105 = vector.shape_cast %104 : vector<128x16xi32> to vector<1x128x16xi32>
    %cst_26 = arith.constant dense<0> : vector<1xi32>
    %106 = vector.multi_reduction <add>, %105, %cst_26 [1, 2] : vector<1x128x16xi32> to vector<1xi32>
    %107 = vector.shape_cast %106 : vector<1xi32> to vector<1x1x1xi32>
    %108 = vector.extract %107[0, 0, 0] : i32 from vector<1x1x1xi32>
    %c56_i32_27 = arith.constant 56 : i32
    %109 = arith.cmpi sge, %108, %c56_i32_27 : i32
    %110 = arith.select %109, %101, %100 : i32
    %c67108864_i32 = arith.constant 67108864 : i32
    %111 = arith.ori %110, %c67108864_i32 : i32
    %112 = vector.broadcast %111 : i32 to vector<128x16xi32>
    %113 = arith.cmpi sge, %70, %112 : vector<128x16xi32>
    %114 = arith.extui %113 : vector<128x16xi1> to vector<128x16xi32>
    %115 = vector.shape_cast %114 : vector<128x16xi32> to vector<1x128x16xi32>
    %cst_28 = arith.constant dense<0> : vector<1xi32>
    %116 = vector.multi_reduction <add>, %115, %cst_28 [1, 2] : vector<1x128x16xi32> to vector<1xi32>
    %117 = vector.shape_cast %116 : vector<1xi32> to vector<1x1x1xi32>
    %118 = vector.extract %117[0, 0, 0] : i32 from vector<1x1x1xi32>
    %c56_i32_29 = arith.constant 56 : i32
    %119 = arith.cmpi sge, %118, %c56_i32_29 : i32
    %120 = arith.select %119, %111, %110 : i32
    %c33554432_i32 = arith.constant 33554432 : i32
    %121 = arith.ori %120, %c33554432_i32 : i32
    %122 = vector.broadcast %121 : i32 to vector<128x16xi32>
    %123 = arith.cmpi sge, %70, %122 : vector<128x16xi32>
    %124 = arith.extui %123 : vector<128x16xi1> to vector<128x16xi32>
    %125 = vector.shape_cast %124 : vector<128x16xi32> to vector<1x128x16xi32>
    %cst_30 = arith.constant dense<0> : vector<1xi32>
    %126 = vector.multi_reduction <add>, %125, %cst_30 [1, 2] : vector<1x128x16xi32> to vector<1xi32>
    %127 = vector.shape_cast %126 : vector<1xi32> to vector<1x1x1xi32>
    %128 = vector.extract %127[0, 0, 0] : i32 from vector<1x1x1xi32>
    %c56_i32_31 = arith.constant 56 : i32
    %129 = arith.cmpi sge, %128, %c56_i32_31 : i32
    %130 = arith.select %129, %121, %120 : i32
    %c16777216_i32 = arith.constant 16777216 : i32
    %131 = arith.ori %130, %c16777216_i32 : i32
    %132 = vector.broadcast %131 : i32 to vector<128x16xi32>
    %133 = arith.cmpi sge, %70, %132 : vector<128x16xi32>
    %134 = arith.extui %133 : vector<128x16xi1> to vector<128x16xi32>
    %135 = vector.shape_cast %134 : vector<128x16xi32> to vector<1x128x16xi32>
    %cst_32 = arith.constant dense<0> : vector<1xi32>
    %136 = vector.multi_reduction <add>, %135, %cst_32 [1, 2] : vector<1x128x16xi32> to vector<1xi32>
    %137 = vector.shape_cast %136 : vector<1xi32> to vector<1x1x1xi32>
    %138 = vector.extract %137[0, 0, 0] : i32 from vector<1x1x1xi32>
    %c56_i32_33 = arith.constant 56 : i32
    %139 = arith.cmpi sge, %138, %c56_i32_33 : i32
    %140 = arith.select %139, %131, %130 : i32
    %c8388608_i32 = arith.constant 8388608 : i32
    %141 = arith.ori %140, %c8388608_i32 : i32
    %142 = vector.broadcast %141 : i32 to vector<128x16xi32>
    %143 = arith.cmpi sge, %70, %142 : vector<128x16xi32>
    %144 = arith.extui %143 : vector<128x16xi1> to vector<128x16xi32>
    %145 = vector.shape_cast %144 : vector<128x16xi32> to vector<1x128x16xi32>
    %cst_34 = arith.constant dense<0> : vector<1xi32>
    %146 = vector.multi_reduction <add>, %145, %cst_34 [1, 2] : vector<1x128x16xi32> to vector<1xi32>
    %147 = vector.shape_cast %146 : vector<1xi32> to vector<1x1x1xi32>
    %148 = vector.extract %147[0, 0, 0] : i32 from vector<1x1x1xi32>
    %c56_i32_35 = arith.constant 56 : i32
    %149 = arith.cmpi sge, %148, %c56_i32_35 : i32
    %150 = arith.select %149, %141, %140 : i32
    %c4194304_i32 = arith.constant 4194304 : i32
    %151 = arith.ori %150, %c4194304_i32 : i32
    %152 = vector.broadcast %151 : i32 to vector<128x16xi32>
    %153 = arith.cmpi sge, %70, %152 : vector<128x16xi32>
    %154 = arith.extui %153 : vector<128x16xi1> to vector<128x16xi32>
    %155 = vector.shape_cast %154 : vector<128x16xi32> to vector<1x128x16xi32>
    %cst_36 = arith.constant dense<0> : vector<1xi32>
    %156 = vector.multi_reduction <add>, %155, %cst_36 [1, 2] : vector<1x128x16xi32> to vector<1xi32>
    %157 = vector.shape_cast %156 : vector<1xi32> to vector<1x1x1xi32>
    %158 = vector.extract %157[0, 0, 0] : i32 from vector<1x1x1xi32>
    %c56_i32_37 = arith.constant 56 : i32
    %159 = arith.cmpi sge, %158, %c56_i32_37 : i32
    %160 = arith.select %159, %151, %150 : i32
    %c2097152_i32 = arith.constant 2097152 : i32
    %161 = arith.ori %160, %c2097152_i32 : i32
    %162 = vector.broadcast %161 : i32 to vector<128x16xi32>
    %163 = arith.cmpi sge, %70, %162 : vector<128x16xi32>
    %164 = arith.extui %163 : vector<128x16xi1> to vector<128x16xi32>
    %165 = vector.shape_cast %164 : vector<128x16xi32> to vector<1x128x16xi32>
    %cst_38 = arith.constant dense<0> : vector<1xi32>
    %166 = vector.multi_reduction <add>, %165, %cst_38 [1, 2] : vector<1x128x16xi32> to vector<1xi32>
    %167 = vector.shape_cast %166 : vector<1xi32> to vector<1x1x1xi32>
    %168 = vector.extract %167[0, 0, 0] : i32 from vector<1x1x1xi32>
    %c56_i32_39 = arith.constant 56 : i32
    %169 = arith.cmpi sge, %168, %c56_i32_39 : i32
    %170 = arith.select %169, %161, %160 : i32
    %c1048576_i32 = arith.constant 1048576 : i32
    %171 = arith.ori %170, %c1048576_i32 : i32
    %172 = vector.broadcast %171 : i32 to vector<128x16xi32>
    %173 = arith.cmpi sge, %70, %172 : vector<128x16xi32>
    %174 = arith.extui %173 : vector<128x16xi1> to vector<128x16xi32>
    %175 = vector.shape_cast %174 : vector<128x16xi32> to vector<1x128x16xi32>
    %cst_40 = arith.constant dense<0> : vector<1xi32>
    %176 = vector.multi_reduction <add>, %175, %cst_40 [1, 2] : vector<1x128x16xi32> to vector<1xi32>
    %177 = vector.shape_cast %176 : vector<1xi32> to vector<1x1x1xi32>
    %178 = vector.extract %177[0, 0, 0] : i32 from vector<1x1x1xi32>
    %c56_i32_41 = arith.constant 56 : i32
    %179 = arith.cmpi sge, %178, %c56_i32_41 : i32
    %180 = arith.select %179, %171, %170 : i32
    %c524288_i32 = arith.constant 524288 : i32
    %181 = arith.ori %180, %c524288_i32 : i32
    %182 = vector.broadcast %181 : i32 to vector<128x16xi32>
    %183 = arith.cmpi sge, %70, %182 : vector<128x16xi32>
    %184 = arith.extui %183 : vector<128x16xi1> to vector<128x16xi32>
    %185 = vector.shape_cast %184 : vector<128x16xi32> to vector<1x128x16xi32>
    %cst_42 = arith.constant dense<0> : vector<1xi32>
    %186 = vector.multi_reduction <add>, %185, %cst_42 [1, 2] : vector<1x128x16xi32> to vector<1xi32>
    %187 = vector.shape_cast %186 : vector<1xi32> to vector<1x1x1xi32>
    %188 = vector.extract %187[0, 0, 0] : i32 from vector<1x1x1xi32>
    %c56_i32_43 = arith.constant 56 : i32
    %189 = arith.cmpi sge, %188, %c56_i32_43 : i32
    %190 = arith.select %189, %181, %180 : i32
    %c262144_i32 = arith.constant 262144 : i32
    %191 = arith.ori %190, %c262144_i32 : i32
    %192 = vector.broadcast %191 : i32 to vector<128x16xi32>
    %193 = arith.cmpi sge, %70, %192 : vector<128x16xi32>
    %194 = arith.extui %193 : vector<128x16xi1> to vector<128x16xi32>
    %195 = vector.shape_cast %194 : vector<128x16xi32> to vector<1x128x16xi32>
    %cst_44 = arith.constant dense<0> : vector<1xi32>
    %196 = vector.multi_reduction <add>, %195, %cst_44 [1, 2] : vector<1x128x16xi32> to vector<1xi32>
    %197 = vector.shape_cast %196 : vector<1xi32> to vector<1x1x1xi32>
    %198 = vector.extract %197[0, 0, 0] : i32 from vector<1x1x1xi32>
    %c56_i32_45 = arith.constant 56 : i32
    %199 = arith.cmpi sge, %198, %c56_i32_45 : i32
    %200 = arith.select %199, %191, %190 : i32
    %c131072_i32 = arith.constant 131072 : i32
    %201 = arith.ori %200, %c131072_i32 : i32
    %202 = vector.broadcast %201 : i32 to vector<128x16xi32>
    %203 = arith.cmpi sge, %70, %202 : vector<128x16xi32>
    %204 = arith.extui %203 : vector<128x16xi1> to vector<128x16xi32>
    %205 = vector.shape_cast %204 : vector<128x16xi32> to vector<1x128x16xi32>
    %cst_46 = arith.constant dense<0> : vector<1xi32>
    %206 = vector.multi_reduction <add>, %205, %cst_46 [1, 2] : vector<1x128x16xi32> to vector<1xi32>
    %207 = vector.shape_cast %206 : vector<1xi32> to vector<1x1x1xi32>
    %208 = vector.extract %207[0, 0, 0] : i32 from vector<1x1x1xi32>
    %c56_i32_47 = arith.constant 56 : i32
    %209 = arith.cmpi sge, %208, %c56_i32_47 : i32
    %210 = arith.select %209, %201, %200 : i32
    %c65536_i32 = arith.constant 65536 : i32
    %211 = arith.ori %210, %c65536_i32 : i32
    %212 = vector.broadcast %211 : i32 to vector<128x16xi32>
    %213 = arith.cmpi sge, %70, %212 : vector<128x16xi32>
    %214 = arith.extui %213 : vector<128x16xi1> to vector<128x16xi32>
    %215 = vector.shape_cast %214 : vector<128x16xi32> to vector<1x128x16xi32>
    %cst_48 = arith.constant dense<0> : vector<1xi32>
    %216 = vector.multi_reduction <add>, %215, %cst_48 [1, 2] : vector<1x128x16xi32> to vector<1xi32>
    %217 = vector.shape_cast %216 : vector<1xi32> to vector<1x1x1xi32>
    %218 = vector.extract %217[0, 0, 0] : i32 from vector<1x1x1xi32>
    %c56_i32_49 = arith.constant 56 : i32
    %219 = arith.cmpi sge, %218, %c56_i32_49 : i32
    %220 = arith.select %219, %211, %210 : i32
    %c32768_i32 = arith.constant 32768 : i32
    %221 = arith.ori %220, %c32768_i32 : i32
    %222 = vector.broadcast %221 : i32 to vector<128x16xi32>
    %223 = arith.cmpi sge, %70, %222 : vector<128x16xi32>
    %224 = arith.extui %223 : vector<128x16xi1> to vector<128x16xi32>
    %225 = vector.shape_cast %224 : vector<128x16xi32> to vector<1x128x16xi32>
    %cst_50 = arith.constant dense<0> : vector<1xi32>
    %226 = vector.multi_reduction <add>, %225, %cst_50 [1, 2] : vector<1x128x16xi32> to vector<1xi32>
    %227 = vector.shape_cast %226 : vector<1xi32> to vector<1x1x1xi32>
    %228 = vector.extract %227[0, 0, 0] : i32 from vector<1x1x1xi32>
    %c56_i32_51 = arith.constant 56 : i32
    %229 = arith.cmpi sge, %228, %c56_i32_51 : i32
    %230 = arith.select %229, %221, %220 : i32
    %c16384_i32 = arith.constant 16384 : i32
    %231 = arith.ori %230, %c16384_i32 : i32
    %232 = vector.broadcast %231 : i32 to vector<128x16xi32>
    %233 = arith.cmpi sge, %70, %232 : vector<128x16xi32>
    %234 = arith.extui %233 : vector<128x16xi1> to vector<128x16xi32>
    %235 = vector.shape_cast %234 : vector<128x16xi32> to vector<1x128x16xi32>
    %cst_52 = arith.constant dense<0> : vector<1xi32>
    %236 = vector.multi_reduction <add>, %235, %cst_52 [1, 2] : vector<1x128x16xi32> to vector<1xi32>
    %237 = vector.shape_cast %236 : vector<1xi32> to vector<1x1x1xi32>
    %238 = vector.extract %237[0, 0, 0] : i32 from vector<1x1x1xi32>
    %c56_i32_53 = arith.constant 56 : i32
    %239 = arith.cmpi sge, %238, %c56_i32_53 : i32
    %240 = arith.select %239, %231, %230 : i32
    %c8192_i32 = arith.constant 8192 : i32
    %241 = arith.ori %240, %c8192_i32 : i32
    %242 = vector.broadcast %241 : i32 to vector<128x16xi32>
    %243 = arith.cmpi sge, %70, %242 : vector<128x16xi32>
    %244 = arith.extui %243 : vector<128x16xi1> to vector<128x16xi32>
    %245 = vector.shape_cast %244 : vector<128x16xi32> to vector<1x128x16xi32>
    %cst_54 = arith.constant dense<0> : vector<1xi32>
    %246 = vector.multi_reduction <add>, %245, %cst_54 [1, 2] : vector<1x128x16xi32> to vector<1xi32>
    %247 = vector.shape_cast %246 : vector<1xi32> to vector<1x1x1xi32>
    %248 = vector.extract %247[0, 0, 0] : i32 from vector<1x1x1xi32>
    %c56_i32_55 = arith.constant 56 : i32
    %249 = arith.cmpi sge, %248, %c56_i32_55 : i32
    %250 = arith.select %249, %241, %240 : i32
    %c4096_i32 = arith.constant 4096 : i32
    %251 = arith.ori %250, %c4096_i32 : i32
    %252 = vector.broadcast %251 : i32 to vector<128x16xi32>
    %253 = arith.cmpi sge, %70, %252 : vector<128x16xi32>
    %254 = arith.extui %253 : vector<128x16xi1> to vector<128x16xi32>
    %255 = vector.shape_cast %254 : vector<128x16xi32> to vector<1x128x16xi32>
    %cst_56 = arith.constant dense<0> : vector<1xi32>
    %256 = vector.multi_reduction <add>, %255, %cst_56 [1, 2] : vector<1x128x16xi32> to vector<1xi32>
    %257 = vector.shape_cast %256 : vector<1xi32> to vector<1x1x1xi32>
    %258 = vector.extract %257[0, 0, 0] : i32 from vector<1x1x1xi32>
    %c56_i32_57 = arith.constant 56 : i32
    %259 = arith.cmpi sge, %258, %c56_i32_57 : i32
    %260 = arith.select %259, %251, %250 : i32
    %c2048_i32 = arith.constant 2048 : i32
    %261 = arith.ori %260, %c2048_i32 : i32
    %262 = vector.broadcast %261 : i32 to vector<128x16xi32>
    %263 = arith.cmpi sge, %70, %262 : vector<128x16xi32>
    %264 = arith.extui %263 : vector<128x16xi1> to vector<128x16xi32>
    %265 = vector.shape_cast %264 : vector<128x16xi32> to vector<1x128x16xi32>
    %cst_58 = arith.constant dense<0> : vector<1xi32>
    %266 = vector.multi_reduction <add>, %265, %cst_58 [1, 2] : vector<1x128x16xi32> to vector<1xi32>
    %267 = vector.shape_cast %266 : vector<1xi32> to vector<1x1x1xi32>
    %268 = vector.extract %267[0, 0, 0] : i32 from vector<1x1x1xi32>
    %c56_i32_59 = arith.constant 56 : i32
    %269 = arith.cmpi sge, %268, %c56_i32_59 : i32
    %270 = arith.select %269, %261, %260 : i32
    %c1024_i32 = arith.constant 1024 : i32
    %271 = arith.ori %270, %c1024_i32 : i32
    %272 = vector.broadcast %271 : i32 to vector<128x16xi32>
    %273 = arith.cmpi sge, %70, %272 : vector<128x16xi32>
    %274 = arith.extui %273 : vector<128x16xi1> to vector<128x16xi32>
    %275 = vector.shape_cast %274 : vector<128x16xi32> to vector<1x128x16xi32>
    %cst_60 = arith.constant dense<0> : vector<1xi32>
    %276 = vector.multi_reduction <add>, %275, %cst_60 [1, 2] : vector<1x128x16xi32> to vector<1xi32>
    %277 = vector.shape_cast %276 : vector<1xi32> to vector<1x1x1xi32>
    %278 = vector.extract %277[0, 0, 0] : i32 from vector<1x1x1xi32>
    %c56_i32_61 = arith.constant 56 : i32
    %279 = arith.cmpi sge, %278, %c56_i32_61 : i32
    %280 = arith.select %279, %271, %270 : i32
    %c512_i32 = arith.constant 512 : i32
    %281 = arith.ori %280, %c512_i32 : i32
    %282 = vector.broadcast %281 : i32 to vector<128x16xi32>
    %283 = arith.cmpi sge, %70, %282 : vector<128x16xi32>
    %284 = arith.extui %283 : vector<128x16xi1> to vector<128x16xi32>
    %285 = vector.shape_cast %284 : vector<128x16xi32> to vector<1x128x16xi32>
    %cst_62 = arith.constant dense<0> : vector<1xi32>
    %286 = vector.multi_reduction <add>, %285, %cst_62 [1, 2] : vector<1x128x16xi32> to vector<1xi32>
    %287 = vector.shape_cast %286 : vector<1xi32> to vector<1x1x1xi32>
    %288 = vector.extract %287[0, 0, 0] : i32 from vector<1x1x1xi32>
    %c56_i32_63 = arith.constant 56 : i32
    %289 = arith.cmpi sge, %288, %c56_i32_63 : i32
    %290 = arith.select %289, %281, %280 : i32
    %c256_i32 = arith.constant 256 : i32
    %291 = arith.ori %290, %c256_i32 : i32
    %292 = vector.broadcast %291 : i32 to vector<128x16xi32>
    %293 = arith.cmpi sge, %70, %292 : vector<128x16xi32>
    %294 = arith.extui %293 : vector<128x16xi1> to vector<128x16xi32>
    %295 = vector.shape_cast %294 : vector<128x16xi32> to vector<1x128x16xi32>
    %cst_64 = arith.constant dense<0> : vector<1xi32>
    %296 = vector.multi_reduction <add>, %295, %cst_64 [1, 2] : vector<1x128x16xi32> to vector<1xi32>
    %297 = vector.shape_cast %296 : vector<1xi32> to vector<1x1x1xi32>
    %298 = vector.extract %297[0, 0, 0] : i32 from vector<1x1x1xi32>
    %c56_i32_65 = arith.constant 56 : i32
    %299 = arith.cmpi sge, %298, %c56_i32_65 : i32
    %300 = arith.select %299, %291, %290 : i32
    %c128_i32 = arith.constant 128 : i32
    %301 = arith.ori %300, %c128_i32 : i32
    %302 = vector.broadcast %301 : i32 to vector<128x16xi32>
    %303 = arith.cmpi sge, %70, %302 : vector<128x16xi32>
    %304 = arith.extui %303 : vector<128x16xi1> to vector<128x16xi32>
    %305 = vector.shape_cast %304 : vector<128x16xi32> to vector<1x128x16xi32>
    %cst_66 = arith.constant dense<0> : vector<1xi32>
    %306 = vector.multi_reduction <add>, %305, %cst_66 [1, 2] : vector<1x128x16xi32> to vector<1xi32>
    %307 = vector.shape_cast %306 : vector<1xi32> to vector<1x1x1xi32>
    %308 = vector.extract %307[0, 0, 0] : i32 from vector<1x1x1xi32>
    %c56_i32_67 = arith.constant 56 : i32
    %309 = arith.cmpi sge, %308, %c56_i32_67 : i32
    %310 = arith.select %309, %301, %300 : i32
    %c64_i32 = arith.constant 64 : i32
    %311 = arith.ori %310, %c64_i32 : i32
    %312 = vector.broadcast %311 : i32 to vector<128x16xi32>
    %313 = arith.cmpi sge, %70, %312 : vector<128x16xi32>
    %314 = arith.extui %313 : vector<128x16xi1> to vector<128x16xi32>
    %315 = vector.shape_cast %314 : vector<128x16xi32> to vector<1x128x16xi32>
    %cst_68 = arith.constant dense<0> : vector<1xi32>
    %316 = vector.multi_reduction <add>, %315, %cst_68 [1, 2] : vector<1x128x16xi32> to vector<1xi32>
    %317 = vector.shape_cast %316 : vector<1xi32> to vector<1x1x1xi32>
    %318 = vector.extract %317[0, 0, 0] : i32 from vector<1x1x1xi32>
    %c56_i32_69 = arith.constant 56 : i32
    %319 = arith.cmpi sge, %318, %c56_i32_69 : i32
    %320 = arith.select %319, %311, %310 : i32
    %c32_i32 = arith.constant 32 : i32
    %321 = arith.ori %320, %c32_i32 : i32
    %322 = vector.broadcast %321 : i32 to vector<128x16xi32>
    %323 = arith.cmpi sge, %70, %322 : vector<128x16xi32>
    %324 = arith.extui %323 : vector<128x16xi1> to vector<128x16xi32>
    %325 = vector.shape_cast %324 : vector<128x16xi32> to vector<1x128x16xi32>
    %cst_70 = arith.constant dense<0> : vector<1xi32>
    %326 = vector.multi_reduction <add>, %325, %cst_70 [1, 2] : vector<1x128x16xi32> to vector<1xi32>
    %327 = vector.shape_cast %326 : vector<1xi32> to vector<1x1x1xi32>
    %328 = vector.extract %327[0, 0, 0] : i32 from vector<1x1x1xi32>
    %c56_i32_71 = arith.constant 56 : i32
    %329 = arith.cmpi sge, %328, %c56_i32_71 : i32
    %330 = arith.select %329, %321, %320 : i32
    %c16_i32 = arith.constant 16 : i32
    %331 = arith.ori %330, %c16_i32 : i32
    %332 = vector.broadcast %331 : i32 to vector<128x16xi32>
    %333 = arith.cmpi sge, %70, %332 : vector<128x16xi32>
    %334 = arith.extui %333 : vector<128x16xi1> to vector<128x16xi32>
    %335 = vector.shape_cast %334 : vector<128x16xi32> to vector<1x128x16xi32>
    %cst_72 = arith.constant dense<0> : vector<1xi32>
    %336 = vector.multi_reduction <add>, %335, %cst_72 [1, 2] : vector<1x128x16xi32> to vector<1xi32>
    %337 = vector.shape_cast %336 : vector<1xi32> to vector<1x1x1xi32>
    %338 = vector.extract %337[0, 0, 0] : i32 from vector<1x1x1xi32>
    %c56_i32_73 = arith.constant 56 : i32
    %339 = arith.cmpi sge, %338, %c56_i32_73 : i32
    %340 = arith.select %339, %331, %330 : i32
    %c8_i32 = arith.constant 8 : i32
    %341 = arith.ori %340, %c8_i32 : i32
    %342 = vector.broadcast %341 : i32 to vector<128x16xi32>
    %343 = arith.cmpi sge, %70, %342 : vector<128x16xi32>
    %344 = arith.extui %343 : vector<128x16xi1> to vector<128x16xi32>
    %345 = vector.shape_cast %344 : vector<128x16xi32> to vector<1x128x16xi32>
    %cst_74 = arith.constant dense<0> : vector<1xi32>
    %346 = vector.multi_reduction <add>, %345, %cst_74 [1, 2] : vector<1x128x16xi32> to vector<1xi32>
    %347 = vector.shape_cast %346 : vector<1xi32> to vector<1x1x1xi32>
    %348 = vector.extract %347[0, 0, 0] : i32 from vector<1x1x1xi32>
    %c56_i32_75 = arith.constant 56 : i32
    %349 = arith.cmpi sge, %348, %c56_i32_75 : i32
    %350 = arith.select %349, %341, %340 : i32
    %c4_i32 = arith.constant 4 : i32
    %351 = arith.ori %350, %c4_i32 : i32
    %352 = vector.broadcast %351 : i32 to vector<128x16xi32>
    %353 = arith.cmpi sge, %70, %352 : vector<128x16xi32>
    %354 = arith.extui %353 : vector<128x16xi1> to vector<128x16xi32>
    %355 = vector.shape_cast %354 : vector<128x16xi32> to vector<1x128x16xi32>
    %cst_76 = arith.constant dense<0> : vector<1xi32>
    %356 = vector.multi_reduction <add>, %355, %cst_76 [1, 2] : vector<1x128x16xi32> to vector<1xi32>
    %357 = vector.shape_cast %356 : vector<1xi32> to vector<1x1x1xi32>
    %358 = vector.extract %357[0, 0, 0] : i32 from vector<1x1x1xi32>
    %c56_i32_77 = arith.constant 56 : i32
    %359 = arith.cmpi sge, %358, %c56_i32_77 : i32
    %360 = arith.select %359, %351, %350 : i32
    %c2_i32 = arith.constant 2 : i32
    %361 = arith.ori %360, %c2_i32 : i32
    %362 = vector.broadcast %361 : i32 to vector<128x16xi32>
    %363 = arith.cmpi sge, %70, %362 : vector<128x16xi32>
    %364 = arith.extui %363 : vector<128x16xi1> to vector<128x16xi32>
    %365 = vector.shape_cast %364 : vector<128x16xi32> to vector<1x128x16xi32>
    %cst_78 = arith.constant dense<0> : vector<1xi32>
    %366 = vector.multi_reduction <add>, %365, %cst_78 [1, 2] : vector<1x128x16xi32> to vector<1xi32>
    %367 = vector.shape_cast %366 : vector<1xi32> to vector<1x1x1xi32>
    %368 = vector.extract %367[0, 0, 0] : i32 from vector<1x1x1xi32>
    %c56_i32_79 = arith.constant 56 : i32
    %369 = arith.cmpi sge, %368, %c56_i32_79 : i32
    %370 = arith.select %369, %361, %360 : i32
    %c1_i32_80 = arith.constant 1 : i32
    %371 = arith.ori %370, %c1_i32_80 : i32
    %372 = vector.broadcast %371 : i32 to vector<128x16xi32>
    %373 = arith.cmpi sge, %70, %372 : vector<128x16xi32>
    %374 = arith.extui %373 : vector<128x16xi1> to vector<128x16xi32>
    %375 = vector.shape_cast %374 : vector<128x16xi32> to vector<1x128x16xi32>
    %cst_81 = arith.constant dense<0> : vector<1xi32>
    %376 = vector.multi_reduction <add>, %375, %cst_81 [1, 2] : vector<1x128x16xi32> to vector<1xi32>
    %377 = vector.shape_cast %376 : vector<1xi32> to vector<1x1x1xi32>
    %378 = vector.extract %377[0, 0, 0] : i32 from vector<1x1x1xi32>
    %c56_i32_82 = arith.constant 56 : i32
    %379 = arith.cmpi sge, %378, %c56_i32_82 : i32
    %380 = arith.select %379, %371, %370 : i32
    %381 = vector.broadcast %380 : i32 to vector<128x16xi32>
    %382 = arith.cmpi sgt, %70, %381 : vector<128x16xi32>
    %383 = arith.extui %382 : vector<128x16xi1> to vector<128x16xi32>
    %384 = arith.sitofp %383 : vector<128x16xi32> to vector<128x16xf32>
    %385 = tpu.iota {dimensions = array<i32: 0>} : vector<16x16xi32>
    %386 = tpu.iota {dimensions = array<i32: 1>} : vector<16x16xi32>
    %c1_i32_83 = arith.constant 1 : i32
    %387 = vector.broadcast %c1_i32_83 : i32 to vector<16x16xi32>
    %388 = arith.subi %386, %387 : vector<16x16xi32>
    %389 = arith.cmpi sge, %385, %388 : vector<16x16xi32>
    %c1_i32_84 = arith.constant 1 : i32
    %390 = vector.broadcast %c1_i32_84 : i32 to vector<16x16xi32>
    %391 = arith.addi %386, %390 : vector<16x16xi32>
    %392 = arith.cmpi sle, %385, %391 : vector<16x16xi32>
    %393 = arith.andi %389, %392 : vector<16x16xi1>
    %394 = arith.extui %393 : vector<16x16xi1> to vector<16x16xi32>
    %395 = arith.sitofp %394 : vector<16x16xi32> to vector<16x16xf32>
    %cst_85 = arith.constant dense<0.000000e+00> : vector<128x16xf32>
    %396 = tpu.matmul %384, %395, %cst_85 {dimension_numbers = #tpu.dot_dimension_numbers<[1], [0], [0], [1], [0, 0, 1, 1], [], []>} : vector<128x16xf32>, vector<16x16xf32>, vector<128x16xf32> -> vector<128x16xf32>
    %397 = vector.extract_strided_slice %396 {offsets = [127, 0], sizes = [1, 16], strides = [1, 1]} : vector<128x16xf32> to vector<1x16xf32>
    %398 = vector.extract_strided_slice %396 {offsets = [0, 0], sizes = [127, 16], strides = [1, 1]} : vector<128x16xf32> to vector<127x16xf32>
    %399 = tpu.concatenate %397, %398 in 0 : vector<1x16xf32>, vector<127x16xf32> -> vector<128x16xf32>
    %c-1_i32_86 = arith.constant -1 : i32
    %400 = vector.broadcast %c-1_i32_86 : i32 to vector<128x1xi32>
    %401 = arith.addi %1, %400 : vector<128x1xi32>
    %c0_i32_87 = arith.constant 0 : i32
    %402 = vector.broadcast %c0_i32_87 : i32 to vector<128x1xi32>
    %403 = arith.cmpi sge, %401, %402 : vector<128x1xi32>
    %c-1_i32_88 = arith.constant -1 : i32
    %404 = vector.broadcast %c-1_i32_88 : i32 to vector<128x1xi32>
    %405 = arith.addi %1, %404 : vector<128x1xi32>
    %c15_i32_89 = arith.constant 15 : i32
    %406 = vector.broadcast %c15_i32_89 : i32 to vector<128x1xi32>
    %407 = arith.cmpi sle, %405, %406 : vector<128x1xi32>
    %408 = arith.andi %403, %407 : vector<128x1xi1>
    %cst_90 = arith.constant 0.000000e+00 : f32
    %409 = vector.shape_cast %408 : vector<128x1xi1> to vector<128x1xi1>
    %410 = vector.broadcast %409 : vector<128x1xi1> to vector<128x16xi1>
    %411 = vector.broadcast %cst_90 : f32 to vector<128x16xf32>
    %412 = arith.select %410, %399, %411 : vector<128x16xi1>, vector<128x16xf32>
    %413 = arith.addf %412, %396 : vector<128x16xf32>
    %414 = vector.extract_strided_slice %396 {offsets = [1, 0], sizes = [127, 16], strides = [1, 1]} : vector<128x16xf32> to vector<127x16xf32>
    %415 = vector.extract_strided_slice %396 {offsets = [0, 0], sizes = [1, 16], strides = [1, 1]} : vector<128x16xf32> to vector<1x16xf32>
    %416 = tpu.concatenate %414, %415 in 0 : vector<127x16xf32>, vector<1x16xf32> -> vector<128x16xf32>
    %c1_i32_91 = arith.constant 1 : i32
    %417 = vector.broadcast %c1_i32_91 : i32 to vector<128x1xi32>
    %418 = arith.addi %1, %417 : vector<128x1xi32>
    %c0_i32_92 = arith.constant 0 : i32
    %419 = vector.broadcast %c0_i32_92 : i32 to vector<128x1xi32>
    %420 = arith.cmpi sge, %418, %419 : vector<128x1xi32>
    %c1_i32_93 = arith.constant 1 : i32
    %421 = vector.broadcast %c1_i32_93 : i32 to vector<128x1xi32>
    %422 = arith.addi %1, %421 : vector<128x1xi32>
    %c15_i32_94 = arith.constant 15 : i32
    %423 = vector.broadcast %c15_i32_94 : i32 to vector<128x1xi32>
    %424 = arith.cmpi sle, %422, %423 : vector<128x1xi32>
    %425 = arith.andi %420, %424 : vector<128x1xi1>
    %cst_95 = arith.constant 0.000000e+00 : f32
    %426 = vector.shape_cast %425 : vector<128x1xi1> to vector<128x1xi1>
    %427 = vector.broadcast %426 : vector<128x1xi1> to vector<128x16xi1>
    %428 = vector.broadcast %cst_95 : f32 to vector<128x16xf32>
    %429 = arith.select %427, %416, %428 : vector<128x16xi1>, vector<128x16xf32>
    %430 = arith.addf %413, %429 : vector<128x16xf32>
    %cst_96 = arith.constant 5.000000e-01 : f32
    %431 = vector.broadcast %cst_96 : f32 to vector<128x16xf32>
    %432 = arith.cmpf ogt, %430, %431 : vector<128x16xf32>
    %cst_97 = arith.constant 0.000000e+00 : f32
    %433 = vector.broadcast %cst_97 : f32 to vector<128x16xf32>
    %434 = arith.select %432, %433, %0 : vector<128x16xi1>, vector<128x16xf32>
    %c0_98 = arith.constant 0 : index
    %c0_99 = arith.constant 0 : index
    %435 = vector.load %arg3[%c0_98, %c0_99] : memref<128x16xf32, #tpu.memory_space<vmem>>, vector<128x16xf32>
    tpu.vector_store %arg3[%c0_98, %c0_99], %434 {strides = array<i32>} : memref<128x16xf32, #tpu.memory_space<vmem>>, vector<128x16xf32>,
    return
  }
  func.func @transform_0(%arg0: i32) -> (i32, i32) {
    %c0_i32 = arith.constant 0 : i32
    %c0_i32_0 = arith.constant 0 : i32
    %c0_i32_1 = arith.constant 0 : i32
    return %c0_i32, %c0_i32_0 : i32, i32
  }
  func.func @transform_1(%arg0: i32) -> (i32, i32) {
    %c0_i32 = arith.constant 0 : i32
    %c0_i32_0 = arith.constant 0 : i32
    %c0_i32_1 = arith.constant 0 : i32
    return %c0_i32, %c0_i32_0 : i32, i32
  }
  func.func @transform_2(%arg0: i32) -> (i32, i32) {
    %c0_i32 = arith.constant 0 : i32
    %c0_i32_0 = arith.constant 0 : i32
    %c0_i32_1 = arith.constant 0 : i32
    return %c0_i32, %c0_i32_0 : i32, i32
  }
}

</mosaic_0001>

<llo_original>
// kernel: tpu_custom_call.1
$region0: #{tpu_custom_call.1}
  #allocation0 [shape = 'u32[]', space=smem, size = 0x4, offset = 0x4, fixed_abs, tag = 'smem constant byte address 0x4 - core index']
  #allocation1 [shape = 'u32[144,128]{1,0:T(1,128)}', space=vmem, size = 0x12000, scoped, tag = 'internal scratch']
  %s0 = inlined_call_operand.vmem [shape: s32[128,1], index: 0, kind: input, shape index: {}]
  %s1 = inlined_call_operand.vmem [shape: f32[128,16], index: 1, kind: input, shape index: {}]
  %s2 = inlined_call_operand.vmem [shape: f32[128,16], index: 2, kind: output, shape index: {}]
  %s3 = sld [smem:[#allocation0]]
  $region18: #{tpu_custom_call.1} parent=0
    _
  %s5 = ssub.s32 1, %s3
  %s6 = scalar_select 0, %s5, %s3
  // Predicated region
  $region2: #{tpu_custom_call.1} parent=0 // pred_check
    _
  $region3: #{tpu_custom_call.1} parent=0 // pred_check_branch
    %8 = sbr.rel (0) target = $region5
  $region4: #{tpu_custom_call.1} parent=0 // pred_region
    _
  $region5: #{tpu_custom_call.1} parent=0 // pred_fallthru
    _
  // Predicated region
  $region6: #{tpu_custom_call.1} parent=0 // pred_check
    _
  $region7: #{tpu_custom_call.1} parent=0 // pred_check_branch
    %10 = sbr.rel (0) target = $region9
  $region8: #{tpu_custom_call.1} parent=0 // pred_region
    _
  $region9: #{tpu_custom_call.1} parent=0 // pred_fallthru
    _
  %v11 = vld [vmem:[%s1] sm:$0xff]
  %v12 = vld [vmem:[%s1 + $0x8] sm:$0xff]
  %v13 = vld [vmem:[%s1 + $0x10] sm:$0xff]
  %v14 = vld [vmem:[%s1 + $0x18] sm:$0xff]
  %v15 = vld [vmem:[%s1 + $0x20] sm:$0xff]
  %v16 = vld [vmem:[%s1 + $0x28] sm:$0xff]
  %v17 = vld [vmem:[%s1 + $0x30] sm:$0xff]
  %v18 = vld [vmem:[%s1 + $0x38] sm:$0xff]
  %v19 = vld [vmem:[%s1 + $0x40] sm:$0xff]
  %v20 = vld [vmem:[%s1 + $0x48] sm:$0xff]
  %v21 = vld [vmem:[%s1 + $0x50] sm:$0xff]
  %v22 = vld [vmem:[%s1 + $0x58] sm:$0xff]
  %v23 = vld [vmem:[%s1 + $0x60] sm:$0xff]
  %v24 = vld [vmem:[%s1 + $0x68] sm:$0xff]
  %v25 = vld [vmem:[%s1 + $0x70] sm:$0xff]
  %v26 = vld [vmem:[%s1 + $0x78] sm:$0xff]
  %v27 = vld [vmem:[%s0] sm:$0xff]
  %v28 = vld [vmem:[%s0 + $0x8] sm:$0xff]
  %v29 = vld [vmem:[%s0 + $0x10] sm:$0xff]
  %v30 = vld [vmem:[%s0 + $0x18] sm:$0xff]
  %v31 = vld [vmem:[%s0 + $0x20] sm:$0xff]
  %v32 = vld [vmem:[%s0 + $0x28] sm:$0xff]
  %v33 = vld [vmem:[%s0 + $0x30] sm:$0xff]
  %v34 = vld [vmem:[%s0 + $0x38] sm:$0xff]
  %v35 = vld [vmem:[%s0 + $0x40] sm:$0xff]
  %v36 = vld [vmem:[%s0 + $0x48] sm:$0xff]
  %v37 = vld [vmem:[%s0 + $0x50] sm:$0xff]
  %v38 = vld [vmem:[%s0 + $0x58] sm:$0xff]
  %v39 = vld [vmem:[%s0 + $0x60] sm:$0xff]
  %v40 = vld [vmem:[%s0 + $0x68] sm:$0xff]
  %v41 = vld [vmem:[%s0 + $0x70] sm:$0xff]
  %v42 = vld [vmem:[%s0 + $0x78] sm:$0xff]
  %v43 = vlaneseq
  %v44 = vand.u32 %v43, 127
  %v45 = vand.u32 2147483647, %v11
  %v46 = vand.u32 2147483647, %v12
  %v47 = vand.u32 2147483647, %v13
  %v48 = vand.u32 2147483647, %v14
  %v49 = vand.u32 2147483647, %v15
  %v50 = vand.u32 2147483647, %v16
  %v51 = vand.u32 2147483647, %v17
  %v52 = vand.u32 2147483647, %v18
  %v53 = vand.u32 2147483647, %v19
  %v54 = vand.u32 2147483647, %v20
  %v55 = vand.u32 2147483647, %v21
  %v56 = vand.u32 2147483647, %v22
  %v57 = vand.u32 2147483647, %v23
  %v58 = vand.u32 2147483647, %v24
  %v59 = vand.u32 2147483647, %v25
  %v60 = vand.u32 2147483647, %v26
  %v62 = vrot.slane %v60, 7
  %vm79 = vcmask 1040384
  %v80 = vrot.slane %v45, 7
  %v81 = vrot.slane %v46, 7
  %v82 = vsel %vm79, %v80, %v81
  %v83 = vrot.slane %v47, 7
  %v84 = vsel %vm79, %v81, %v83
  %v85 = vrot.slane %v48, 7
  %v86 = vsel %vm79, %v83, %v85
  %v87 = vrot.slane %v49, 7
  %v88 = vsel %vm79, %v85, %v87
  %v89 = vrot.slane %v50, 7
  %v90 = vsel %vm79, %v87, %v89
  %v91 = vrot.slane %v51, 7
  %v92 = vsel %vm79, %v89, %v91
  %v93 = vrot.slane %v52, 7
  %v94 = vsel %vm79, %v91, %v93
  %v95 = vrot.slane %v53, 7
  %v96 = vsel %vm79, %v93, %v95
  %v97 = vrot.slane %v54, 7
  %v98 = vsel %vm79, %v95, %v97
  %v99 = vrot.slane %v55, 7
  %v100 = vsel %vm79, %v97, %v99
  %v101 = vrot.slane %v56, 7
  %v102 = vsel %vm79, %v99, %v101
  %v103 = vrot.slane %v57, 7
  %v104 = vsel %vm79, %v101, %v103
  %v105 = vrot.slane %v58, 7
  %v106 = vsel %vm79, %v103, %v105
  %v107 = vrot.slane %v59, 7
  %v108 = vsel %vm79, %v105, %v107
  %v109 = vsel %vm79, %v107, %v62
  %v126 = vsel %vm79, %v62, %v80
  %v127 = vadd.s32 %v27, 4294967295
  %v128 = vadd.s32 %v28, 4294967295
  %v129 = vadd.s32 %v29, 4294967295
  %v130 = vadd.s32 %v30, 4294967295
  %v131 = vadd.s32 %v31, 4294967295
  %v132 = vadd.s32 %v32, 4294967295
  %v133 = vadd.s32 %v33, 4294967295
  %v134 = vadd.s32 %v34, 4294967295
  %v135 = vadd.s32 %v35, 4294967295
  %v136 = vadd.s32 %v36, 4294967295
  %v137 = vadd.s32 %v37, 4294967295
  %v138 = vadd.s32 %v38, 4294967295
  %v139 = vadd.s32 %v39, 4294967295
  %v140 = vadd.s32 %v40, 4294967295
  %v141 = vadd.s32 %v41, 4294967295
  %v142 = vadd.s32 %v42, 4294967295
  %vm143 = vcmp.ge.s32.totalorder %v127, 0
  %vm144 = vcmp.ge.s32.totalorder %v128, 0
  %vm145 = vcmp.ge.s32.totalorder %v129, 0
  %vm146 = vcmp.ge.s32.totalorder %v130, 0
  %vm147 = vcmp.ge.s32.totalorder %v131, 0
  %vm148 = vcmp.ge.s32.totalorder %v132, 0
  %vm149 = vcmp.ge.s32.totalorder %v133, 0
  %vm150 = vcmp.ge.s32.totalorder %v134, 0
  %vm151 = vcmp.ge.s32.totalorder %v135, 0
  %vm152 = vcmp.ge.s32.totalorder %v136, 0
  %vm153 = vcmp.ge.s32.totalorder %v137, 0
  %vm154 = vcmp.ge.s32.totalorder %v138, 0
  %vm155 = vcmp.ge.s32.totalorder %v139, 0
  %vm156 = vcmp.ge.s32.totalorder %v140, 0
  %vm157 = vcmp.ge.s32.totalorder %v141, 0
  %vm158 = vcmp.ge.s32.totalorder %v142, 0
  %vm159 = vcmp.le.s32.totalorder %v127, 15
  %vm160 = vcmp.le.s32.totalorder %v128, 15
  %vm161 = vcmp.le.s32.totalorder %v129, 15
  %vm162 = vcmp.le.s32.totalorder %v130, 15
  %vm163 = vcmp.le.s32.totalorder %v131, 15
  %vm164 = vcmp.le.s32.totalorder %v132, 15
  %vm165 = vcmp.le.s32.totalorder %v133, 15
  %vm166 = vcmp.le.s32.totalorder %v134, 15
  %vm167 = vcmp.le.s32.totalorder %v135, 15
  %vm168 = vcmp.le.s32.totalorder %v136, 15
  %vm169 = vcmp.le.s32.totalorder %v137, 15
  %vm170 = vcmp.le.s32.totalorder %v138, 15
  %vm171 = vcmp.le.s32.totalorder %v139, 15
  %vm172 = vcmp.le.s32.totalorder %v140, 15
  %vm173 = vcmp.le.s32.totalorder %v141, 15
  %vm174 = vcmp.le.s32.totalorder %v142, 15
  %vm175 = vmand %vm143, %vm159
  %vm176 = vmand %vm144, %vm160
  %vm177 = vmand %vm145, %vm161
  %vm178 = vmand %vm146, %vm162
  %vm179 = vmand %vm147, %vm163
  %vm180 = vmand %vm148, %vm164
  %vm181 = vmand %vm149, %vm165
  %vm182 = vmand %vm150, %vm166
  %vm183 = vmand %vm151, %vm167
  %vm184 = vmand %vm152, %vm168
  %vm185 = vmand %vm153, %vm169
  %vm186 = vmand %vm154, %vm170
  %vm187 = vmand %vm155, %vm171
  %vm188 = vmand %vm156, %vm172
  %vm189 = vmand %vm157, %vm173
  %vm190 = vmand %vm158, %vm174
  %v191 = vsel %vm175, 1, 0
  %v192 = vsel %vm176, 1, 0
  %v193 = vsel %vm177, 1, 0
  %v194 = vsel %vm178, 1, 0
  %v195 = vsel %vm179, 1, 0
  %v196 = vsel %vm180, 1, 0
  %v197 = vsel %vm181, 1, 0
  %v198 = vsel %vm182, 1, 0
  %v199 = vsel %vm183, 1, 0
  %v200 = vsel %vm184, 1, 0
  %v201 = vsel %vm185, 1, 0
  %v202 = vsel %vm186, 1, 0
  %v203 = vsel %vm187, 1, 0
  %v204 = vsel %vm188, 1, 0
  %v205 = vsel %vm189, 1, 0
  %v206 = vsel %vm190, 1, 0
  %207 = vset.pattern.permute.xlu0 0
  %208 = vperm.xlu0 %207, %v191
  %v209 = vpop.permute.xlu0 %208
  %210 = vset.pattern.permute.xlu0 0
  %211 = vperm.xlu0 %210, %v192
  %v212 = vpop.permute.xlu0 %211
  %213 = vset.pattern.permute.xlu0 0
  %214 = vperm.xlu0 %213, %v193
  %v215 = vpop.permute.xlu0 %214
  %216 = vset.pattern.permute.xlu0 0
  %217 = vperm.xlu0 %216, %v194
  %v218 = vpop.permute.xlu0 %217
  %219 = vset.pattern.permute.xlu0 0
  %220 = vperm.xlu0 %219, %v195
  %v221 = vpop.permute.xlu0 %220
  %222 = vset.pattern.permute.xlu0 0
  %223 = vperm.xlu0 %222, %v196
  %v224 = vpop.permute.xlu0 %223
  %225 = vset.pattern.permute.xlu0 0
  %226 = vperm.xlu0 %225, %v197
  %v227 = vpop.permute.xlu0 %226
  %228 = vset.pattern.permute.xlu0 0
  %229 = vperm.xlu0 %228, %v198
  %v230 = vpop.permute.xlu0 %229
  %231 = vset.pattern.permute.xlu0 0
  %232 = vperm.xlu0 %231, %v199
  %v233 = vpop.permute.xlu0 %232
  %234 = vset.pattern.permute.xlu0 0
  %235 = vperm.xlu0 %234, %v200
  %v236 = vpop.permute.xlu0 %235
  %237 = vset.pattern.permute.xlu0 0
  %238 = vperm.xlu0 %237, %v201
  %v239 = vpop.permute.xlu0 %238
  %240 = vset.pattern.permute.xlu0 0
  %241 = vperm.xlu0 %240, %v202
  %v242 = vpop.permute.xlu0 %241
  %243 = vset.pattern.permute.xlu0 0
  %244 = vperm.xlu0 %243, %v203
  %v245 = vpop.permute.xlu0 %244
  %246 = vset.pattern.permute.xlu0 0
  %247 = vperm.xlu0 %246, %v204
  %v248 = vpop.permute.xlu0 %247
  %249 = vset.pattern.permute.xlu0 0
  %250 = vperm.xlu0 %249, %v205
  %v251 = vpop.permute.xlu0 %250
  %252 = vset.pattern.permute.xlu0 0
  %253 = vperm.xlu0 %252, %v206
  %v254 = vpop.permute.xlu0 %253
  %vm255 = vcmp.eq.s32.totalorder %v209, 1
  %vm256 = vcmp.eq.s32.totalorder %v212, 1
  %vm257 = vcmp.eq.s32.totalorder %v215, 1
  %vm258 = vcmp.eq.s32.totalorder %v218, 1
  %vm259 = vcmp.eq.s32.totalorder %v221, 1
  %vm260 = vcmp.eq.s32.totalorder %v224, 1
  %vm261 = vcmp.eq.s32.totalorder %v227, 1
  %vm262 = vcmp.eq.s32.totalorder %v230, 1
  %vm263 = vcmp.eq.s32.totalorder %v233, 1
  %vm264 = vcmp.eq.s32.totalorder %v236, 1
  %vm265 = vcmp.eq.s32.totalorder %v239, 1
  %vm266 = vcmp.eq.s32.totalorder %v242, 1
  %vm267 = vcmp.eq.s32.totalorder %v245, 1
  %vm268 = vcmp.eq.s32.totalorder %v248, 1
  %vm269 = vcmp.eq.s32.totalorder %v251, 1
  %vm270 = vcmp.eq.s32.totalorder %v254, 1
  %v271 = vsel %vm255, %v126, 0.0
  %v272 = vsel %vm256, %v82, 0.0
  %v273 = vsel %vm257, %v84, 0.0
  %v274 = vsel %vm258, %v86, 0.0
  %v275 = vsel %vm259, %v88, 0.0
  %v276 = vsel %vm260, %v90, 0.0
  %v277 = vsel %vm261, %v92, 0.0
  %v278 = vsel %vm262, %v94, 0.0
  %v279 = vsel %vm263, %v96, 0.0
  %v280 = vsel %vm264, %v98, 0.0
  %v281 = vsel %vm265, %v100, 0.0
  %v282 = vsel %vm266, %v102, 0.0
  %v283 = vsel %vm267, %v104, 0.0
  %v284 = vsel %vm268, %v106, 0.0
  %v285 = vsel %vm269, %v108, 0.0
  %v286 = vsel %vm270, %v109, 0.0
  %v287 = vadd.f32 %v271, %v45
  %v288 = vadd.f32 %v272, %v46
  %v289 = vadd.f32 %v273, %v47
  %v290 = vadd.f32 %v274, %v48
  %v291 = vadd.f32 %v275, %v49
  %v292 = vadd.f32 %v276, %v50
  %v293 = vadd.f32 %v277, %v51
  %v294 = vadd.f32 %v278, %v52
  %v295 = vadd.f32 %v279, %v53
  %v296 = vadd.f32 %v280, %v54
  %v297 = vadd.f32 %v281, %v55
  %v298 = vadd.f32 %v282, %v56
  %v299 = vadd.f32 %v283, %v57
  %v300 = vadd.f32 %v284, %v58
  %v301 = vadd.f32 %v285, %v59
  %v302 = vadd.f32 %v286, %v60
  %vm303 = vcmask 1046528
  %v304 = vrot.slane %v45, 1
  %v305 = vrot.slane %v46, 1
  %v306 = vsel %vm303, %v304, %v305
  %v307 = vrot.slane %v47, 1
  %v308 = vsel %vm303, %v305, %v307
  %v309 = vrot.slane %v48, 1
  %v310 = vsel %vm303, %v307, %v309
  %v311 = vrot.slane %v49, 1
  %v312 = vsel %vm303, %v309, %v311
  %v313 = vrot.slane %v50, 1
  %v314 = vsel %vm303, %v311, %v313
  %v315 = vrot.slane %v51, 1
  %v316 = vsel %vm303, %v313, %v315
  %v317 = vrot.slane %v52, 1
  %v318 = vsel %vm303, %v315, %v317
  %v319 = vrot.slane %v53, 1
  %v320 = vsel %vm303, %v317, %v319
  %v321 = vrot.slane %v54, 1
  %v322 = vsel %vm303, %v319, %v321
  %v323 = vrot.slane %v55, 1
  %v324 = vsel %vm303, %v321, %v323
  %v325 = vrot.slane %v56, 1
  %v326 = vsel %vm303, %v323, %v325
  %v327 = vrot.slane %v57, 1
  %v328 = vsel %vm303, %v325, %v327
  %v329 = vrot.slane %v58, 1
  %v330 = vsel %vm303, %v327, %v329
  %v331 = vrot.slane %v59, 1
  %v332 = vsel %vm303, %v329, %v331
  %v333 = vrot.slane %v60, 1
  %v334 = vsel %vm303, %v331, %v333
  %v352 = vsel %vm303, %v333, %v304
  %v353 = vadd.s32 %v27, 1
  %v354 = vadd.s32 %v28, 1
  %v355 = vadd.s32 %v29, 1
  %v356 = vadd.s32 %v30, 1
  %v357 = vadd.s32 %v31, 1
  %v358 = vadd.s32 %v32, 1
  %v359 = vadd.s32 %v33, 1
  %v360 = vadd.s32 %v34, 1
  %v361 = vadd.s32 %v35, 1
  %v362 = vadd.s32 %v36, 1
  %v363 = vadd.s32 %v37, 1
  %v364 = vadd.s32 %v38, 1
  %v365 = vadd.s32 %v39, 1
  %v366 = vadd.s32 %v40, 1
  %v367 = vadd.s32 %v41, 1
  %v368 = vadd.s32 %v42, 1
  %vm369 = vcmp.ge.s32.totalorder %v353, 0
  %vm370 = vcmp.ge.s32.totalorder %v354, 0
  %vm371 = vcmp.ge.s32.totalorder %v355, 0
  %vm372 = vcmp.ge.s32.totalorder %v356, 0
  %vm373 = vcmp.ge.s32.totalorder %v357, 0
  %vm374 = vcmp.ge.s32.totalorder %v358, 0
  %vm375 = vcmp.ge.s32.totalorder %v359, 0
  %vm376 = vcmp.ge.s32.totalorder %v360, 0
  %vm377 = vcmp.ge.s32.totalorder %v361, 0
  %vm378 = vcmp.ge.s32.totalorder %v362, 0
  %vm379 = vcmp.ge.s32.totalorder %v363, 0
  %vm380 = vcmp.ge.s32.totalorder %v364, 0
  %vm381 = vcmp.ge.s32.totalorder %v365, 0
  %vm382 = vcmp.ge.s32.totalorder %v366, 0
  %vm383 = vcmp.ge.s32.totalorder %v367, 0
  %vm384 = vcmp.ge.s32.totalorder %v368, 0
  %vm385 = vcmp.le.s32.totalorder %v353, 15
  %vm386 = vcmp.le.s32.totalorder %v354, 15
  %vm387 = vcmp.le.s32.totalorder %v355, 15
  %vm388 = vcmp.le.s32.totalorder %v356, 15
  %vm389 = vcmp.le.s32.totalorder %v357, 15
  %vm390 = vcmp.le.s32.totalorder %v358, 15
  %vm391 = vcmp.le.s32.totalorder %v359, 15
  %vm392 = vcmp.le.s32.totalorder %v360, 15
  %vm393 = vcmp.le.s32.totalorder %v361, 15
  %vm394 = vcmp.le.s32.totalorder %v362, 15
  %vm395 = vcmp.le.s32.totalorder %v363, 15
  %vm396 = vcmp.le.s32.totalorder %v364, 15
  %vm397 = vcmp.le.s32.totalorder %v365, 15
  %vm398 = vcmp.le.s32.totalorder %v366, 15
  %vm399 = vcmp.le.s32.totalorder %v367, 15
  %vm400 = vcmp.le.s32.totalorder %v368, 15
  %vm401 = vmand %vm369, %vm385
  %vm402 = vmand %vm370, %vm386
  %vm403 = vmand %vm371, %vm387
  %vm404 = vmand %vm372, %vm388
  %vm405 = vmand %vm373, %vm389
  %vm406 = vmand %vm374, %vm390
  %vm407 = vmand %vm375, %vm391
  %vm408 = vmand %vm376, %vm392
  %vm409 = vmand %vm377, %vm393
  %vm410 = vmand %vm378, %vm394
  %vm411 = vmand %vm379, %vm395
  %vm412 = vmand %vm380, %vm396
  %vm413 = vmand %vm381, %vm397
  %vm414 = vmand %vm382, %vm398
  %vm415 = vmand %vm383, %vm399
  %vm416 = vmand %vm384, %vm400
  %v417 = vsel %vm401, 1, 0
  %v418 = vsel %vm402, 1, 0
  %v419 = vsel %vm403, 1, 0
  %v420 = vsel %vm404, 1, 0
  %v421 = vsel %vm405, 1, 0
  %v422 = vsel %vm406, 1, 0
  %v423 = vsel %vm407, 1, 0
  %v424 = vsel %vm408, 1, 0
  %v425 = vsel %vm409, 1, 0
  %v426 = vsel %vm410, 1, 0
  %v427 = vsel %vm411, 1, 0
  %v428 = vsel %vm412, 1, 0
  %v429 = vsel %vm413, 1, 0
  %v430 = vsel %vm414, 1, 0
  %v431 = vsel %vm415, 1, 0
  %v432 = vsel %vm416, 1, 0
  %433 = vset.pattern.permute.xlu0 0
  %434 = vperm.xlu0 %433, %v417
  %v435 = vpop.permute.xlu0 %434
  %436 = vset.pattern.permute.xlu0 0
  %437 = vperm.xlu0 %436, %v418
  %v438 = vpop.permute.xlu0 %437
  %439 = vset.pattern.permute.xlu0 0
  %440 = vperm.xlu0 %439, %v419
  %v441 = vpop.permute.xlu0 %440
  %442 = vset.pattern.permute.xlu0 0
  %443 = vperm.xlu0 %442, %v420
  %v444 = vpop.permute.xlu0 %443
  %445 = vset.pattern.permute.xlu0 0
  %446 = vperm.xlu0 %445, %v421
  %v447 = vpop.permute.xlu0 %446
  %448 = vset.pattern.permute.xlu0 0
  %449 = vperm.xlu0 %448, %v422
  %v450 = vpop.permute.xlu0 %449
  %451 = vset.pattern.permute.xlu0 0
  %452 = vperm.xlu0 %451, %v423
  %v453 = vpop.permute.xlu0 %452
  %454 = vset.pattern.permute.xlu0 0
  %455 = vperm.xlu0 %454, %v424
  %v456 = vpop.permute.xlu0 %455
  %457 = vset.pattern.permute.xlu0 0
  %458 = vperm.xlu0 %457, %v425
  %v459 = vpop.permute.xlu0 %458
  %460 = vset.pattern.permute.xlu0 0
  %461 = vperm.xlu0 %460, %v426
  %v462 = vpop.permute.xlu0 %461
  %463 = vset.pattern.permute.xlu0 0
  %464 = vperm.xlu0 %463, %v427
  %v465 = vpop.permute.xlu0 %464
  %466 = vset.pattern.permute.xlu0 0
  %467 = vperm.xlu0 %466, %v428
  %v468 = vpop.permute.xlu0 %467
  %469 = vset.pattern.permute.xlu0 0
  %470 = vperm.xlu0 %469, %v429
  %v471 = vpop.permute.xlu0 %470
  %472 = vset.pattern.permute.xlu0 0
  %473 = vperm.xlu0 %472, %v430
  %v474 = vpop.permute.xlu0 %473
  %475 = vset.pattern.permute.xlu0 0
  %476 = vperm.xlu0 %475, %v431
  %v477 = vpop.permute.xlu0 %476
  %478 = vset.pattern.permute.xlu0 0
  %479 = vperm.xlu0 %478, %v432
  %v480 = vpop.permute.xlu0 %479
  %vm481 = vcmp.eq.s32.totalorder %v435, 1
  %vm482 = vcmp.eq.s32.totalorder %v438, 1
  %vm483 = vcmp.eq.s32.totalorder %v441, 1
  %vm484 = vcmp.eq.s32.totalorder %v444, 1
  %vm485 = vcmp.eq.s32.totalorder %v447, 1
  %vm486 = vcmp.eq.s32.totalorder %v450, 1
  %vm487 = vcmp.eq.s32.totalorder %v453, 1
  %vm488 = vcmp.eq.s32.totalorder %v456, 1
  %vm489 = vcmp.eq.s32.totalorder %v459, 1
  %vm490 = vcmp.eq.s32.totalorder %v462, 1
  %vm491 = vcmp.eq.s32.totalorder %v465, 1
  %vm492 = vcmp.eq.s32.totalorder %v468, 1
  %vm493 = vcmp.eq.s32.totalorder %v471, 1
  %vm494 = vcmp.eq.s32.totalorder %v474, 1
  %vm495 = vcmp.eq.s32.totalorder %v477, 1
  %vm496 = vcmp.eq.s32.totalorder %v480, 1
  %v497 = vsel %vm481, %v306, 0.0
  %v498 = vsel %vm482, %v308, 0.0
  %v499 = vsel %vm483, %v310, 0.0
  %v500 = vsel %vm484, %v312, 0.0
  %v501 = vsel %vm485, %v314, 0.0
  %v502 = vsel %vm486, %v316, 0.0
  %v503 = vsel %vm487, %v318, 0.0
  %v504 = vsel %vm488, %v320, 0.0
  %v505 = vsel %vm489, %v322, 0.0
  %v506 = vsel %vm490, %v324, 0.0
  %v507 = vsel %vm491, %v326, 0.0
  %v508 = vsel %vm492, %v328, 0.0
  %v509 = vsel %vm493, %v330, 0.0
  %v510 = vsel %vm494, %v332, 0.0
  %v511 = vsel %vm495, %v334, 0.0
  %v512 = vsel %vm496, %v352, 0.0
  %v513 = vadd.f32 %v287, %v497
  %v514 = vadd.f32 %v288, %v498
  %v515 = vadd.f32 %v289, %v499
  %v516 = vadd.f32 %v290, %v500
  %v517 = vadd.f32 %v291, %v501
  %v518 = vadd.f32 %v292, %v502
  %v519 = vadd.f32 %v293, %v503
  %v520 = vadd.f32 %v294, %v504
  %v521 = vadd.f32 %v295, %v505
  %v522 = vadd.f32 %v296, %v506
  %v523 = vadd.f32 %v297, %v507
  %v524 = vadd.f32 %v298, %v508
  %v525 = vadd.f32 %v299, %v509
  %v526 = vadd.f32 %v300, %v510
  %v527 = vadd.f32 %v301, %v511
  %v528 = vadd.f32 %v302, %v512
  %545 = vrot.lane.b32.xlu0 %v513, 113
  %v546 = vpop.permute.xlu0 %545
  %547 = vrot.lane.b32.xlu0 %v514, 113
  %v548 = vpop.permute.xlu0 %547
  %549 = vrot.lane.b32.xlu0 %v515, 113
  %v550 = vpop.permute.xlu0 %549
  %551 = vrot.lane.b32.xlu0 %v516, 113
  %v552 = vpop.permute.xlu0 %551
  %553 = vrot.lane.b32.xlu0 %v517, 113
  %v554 = vpop.permute.xlu0 %553
  %555 = vrot.lane.b32.xlu0 %v518, 113
  %v556 = vpop.permute.xlu0 %555
  %557 = vrot.lane.b32.xlu0 %v519, 113
  %v558 = vpop.permute.xlu0 %557
  %559 = vrot.lane.b32.xlu0 %v520, 113
  %v560 = vpop.permute.xlu0 %559
  %561 = vrot.lane.b32.xlu0 %v521, 113
  %v562 = vpop.permute.xlu0 %561
  %563 = vrot.lane.b32.xlu0 %v522, 113
  %v564 = vpop.permute.xlu0 %563
  %565 = vrot.lane.b32.xlu0 %v523, 113
  %v566 = vpop.permute.xlu0 %565
  %567 = vrot.lane.b32.xlu0 %v524, 113
  %v568 = vpop.permute.xlu0 %567
  %569 = vrot.lane.b32.xlu0 %v525, 113
  %v570 = vpop.permute.xlu0 %569
  %571 = vrot.lane.b32.xlu0 %v526, 113
  %v572 = vpop.permute.xlu0 %571
  %573 = vrot.lane.b32.xlu0 %v527, 113
  %v574 = vpop.permute.xlu0 %573
  %575 = vrot.lane.b32.xlu0 %v528, 113
  %v576 = vpop.permute.xlu0 %575
  %593 = vrot.lane.b32.xlu0 %v513, 1
  %v594 = vpop.permute.xlu0 %593
  %595 = vrot.lane.b32.xlu0 %v514, 1
  %v596 = vpop.permute.xlu0 %595
  %597 = vrot.lane.b32.xlu0 %v515, 1
  %v598 = vpop.permute.xlu0 %597
  %599 = vrot.lane.b32.xlu0 %v516, 1
  %v600 = vpop.permute.xlu0 %599
  %601 = vrot.lane.b32.xlu0 %v517, 1
  %v602 = vpop.permute.xlu0 %601
  %603 = vrot.lane.b32.xlu0 %v518, 1
  %v604 = vpop.permute.xlu0 %603
  %605 = vrot.lane.b32.xlu0 %v519, 1
  %v606 = vpop.permute.xlu0 %605
  %607 = vrot.lane.b32.xlu0 %v520, 1
  %v608 = vpop.permute.xlu0 %607
  %609 = vrot.lane.b32.xlu0 %v521, 1
  %v610 = vpop.permute.xlu0 %609
  %611 = vrot.lane.b32.xlu0 %v522, 1
  %v612 = vpop.permute.xlu0 %611
  %613 = vrot.lane.b32.xlu0 %v523, 1
  %v614 = vpop.permute.xlu0 %613
  %615 = vrot.lane.b32.xlu0 %v524, 1
  %v616 = vpop.permute.xlu0 %615
  %617 = vrot.lane.b32.xlu0 %v525, 1
  %v618 = vpop.permute.xlu0 %617
  %619 = vrot.lane.b32.xlu0 %v526, 1
  %v620 = vpop.permute.xlu0 %619
  %621 = vrot.lane.b32.xlu0 %v527, 1
  %v622 = vpop.permute.xlu0 %621
  %623 = vrot.lane.b32.xlu0 %v528, 1
  %v624 = vpop.permute.xlu0 %623
  %vm641 = vcmask 7168
  %v642 = vsel %vm641, %v546, %v594
  %v643 = vsel %vm641, %v548, %v596
  %v644 = vsel %vm641, %v550, %v598
  %v645 = vsel %vm641, %v552, %v600
  %v646 = vsel %vm641, %v554, %v602
  %v647 = vsel %vm641, %v556, %v604
  %v648 = vsel %vm641, %v558, %v606
  %v649 = vsel %vm641, %v560, %v608
  %v650 = vsel %vm641, %v562, %v610
  %v651 = vsel %vm641, %v564, %v612
  %v652 = vsel %vm641, %v566, %v614
  %v653 = vsel %vm641, %v568, %v616
  %v654 = vsel %vm641, %v570, %v618
  %v655 = vsel %vm641, %v572, %v620
  %v656 = vsel %vm641, %v574, %v622
  %v657 = vsel %vm641, %v576, %v624
  %v658 = vadd.s32 %v44, 4294967295
  %vm659 = vcmp.ge.s32.totalorder %v658, 0
  %vm660 = vcmp.le.s32.totalorder %v658, 15
  %vm661 = vmand %vm659, %vm660
  %v662 = vsel %vm661, %v642, 0.0
  %v663 = vsel %vm661, %v643, 0.0
  %v664 = vsel %vm661, %v644, 0.0
  %v665 = vsel %vm661, %v645, 0.0
  %v666 = vsel %vm661, %v646, 0.0
  %v667 = vsel %vm661, %v647, 0.0
  %v668 = vsel %vm661, %v648, 0.0
  %v669 = vsel %vm661, %v649, 0.0
  %v670 = vsel %vm661, %v650, 0.0
  %v671 = vsel %vm661, %v651, 0.0
  %v672 = vsel %vm661, %v652, 0.0
  %v673 = vsel %vm661, %v653, 0.0
  %v674 = vsel %vm661, %v654, 0.0
  %v675 = vsel %vm661, %v655, 0.0
  %v676 = vsel %vm661, %v656, 0.0
  %v677 = vsel %vm661, %v657, 0.0
  %v678 = vadd.f32 %v662, %v513
  %v679 = vadd.f32 %v663, %v514
  %v680 = vadd.f32 %v664, %v515
  %v681 = vadd.f32 %v665, %v516
  %v682 = vadd.f32 %v666, %v517
  %v683 = vadd.f32 %v667, %v518
  %v684 = vadd.f32 %v668, %v519
  %v685 = vadd.f32 %v669, %v520
  %v686 = vadd.f32 %v670, %v521
  %v687 = vadd.f32 %v671, %v522
  %v688 = vadd.f32 %v672, %v523
  %v689 = vadd.f32 %v673, %v524
  %v690 = vadd.f32 %v674, %v525
  %v691 = vadd.f32 %v675, %v526
  %v692 = vadd.f32 %v676, %v527
  %v693 = vadd.f32 %v677, %v528
  %694 = vrot.lane.b32.xlu0 %v513, 127
  %v695 = vpop.permute.xlu0 %694
  %696 = vrot.lane.b32.xlu0 %v514, 127
  %v697 = vpop.permute.xlu0 %696
  %698 = vrot.lane.b32.xlu0 %v515, 127
  %v699 = vpop.permute.xlu0 %698
  %700 = vrot.lane.b32.xlu0 %v516, 127
  %v701 = vpop.permute.xlu0 %700
  %702 = vrot.lane.b32.xlu0 %v517, 127
  %v703 = vpop.permute.xlu0 %702
  %704 = vrot.lane.b32.xlu0 %v518, 127
  %v705 = vpop.permute.xlu0 %704
  %706 = vrot.lane.b32.xlu0 %v519, 127
  %v707 = vpop.permute.xlu0 %706
  %708 = vrot.lane.b32.xlu0 %v520, 127
  %v709 = vpop.permute.xlu0 %708
  %710 = vrot.lane.b32.xlu0 %v521, 127
  %v711 = vpop.permute.xlu0 %710
  %712 = vrot.lane.b32.xlu0 %v522, 127
  %v713 = vpop.permute.xlu0 %712
  %714 = vrot.lane.b32.xlu0 %v523, 127
  %v715 = vpop.permute.xlu0 %714
  %716 = vrot.lane.b32.xlu0 %v524, 127
  %v717 = vpop.permute.xlu0 %716
  %718 = vrot.lane.b32.xlu0 %v525, 127
  %v719 = vpop.permute.xlu0 %718
  %720 = vrot.lane.b32.xlu0 %v526, 127
  %v721 = vpop.permute.xlu0 %720
  %722 = vrot.lane.b32.xlu0 %v527, 127
  %v723 = vpop.permute.xlu0 %722
  %724 = vrot.lane.b32.xlu0 %v528, 127
  %v725 = vpop.permute.xlu0 %724
  %742 = vrot.lane.b32.xlu0 %v513, 15
  %v743 = vpop.permute.xlu0 %742
  %744 = vrot.lane.b32.xlu0 %v514, 15
  %v745 = vpop.permute.xlu0 %744
  %746 = vrot.lane.b32.xlu0 %v515, 15
  %v747 = vpop.permute.xlu0 %746
  %748 = vrot.lane.b32.xlu0 %v516, 15
  %v749 = vpop.permute.xlu0 %748
  %750 = vrot.lane.b32.xlu0 %v517, 15
  %v751 = vpop.permute.xlu0 %750
  %752 = vrot.lane.b32.xlu0 %v518, 15
  %v753 = vpop.permute.xlu0 %752
  %754 = vrot.lane.b32.xlu0 %v519, 15
  %v755 = vpop.permute.xlu0 %754
  %756 = vrot.lane.b32.xlu0 %v520, 15
  %v757 = vpop.permute.xlu0 %756
  %758 = vrot.lane.b32.xlu0 %v521, 15
  %v759 = vpop.permute.xlu0 %758
  %760 = vrot.lane.b32.xlu0 %v522, 15
  %v761 = vpop.permute.xlu0 %760
  %762 = vrot.lane.b32.xlu0 %v523, 15
  %v763 = vpop.permute.xlu0 %762
  %764 = vrot.lane.b32.xlu0 %v524, 15
  %v765 = vpop.permute.xlu0 %764
  %766 = vrot.lane.b32.xlu0 %v525, 15
  %v767 = vpop.permute.xlu0 %766
  %768 = vrot.lane.b32.xlu0 %v526, 15
  %v769 = vpop.permute.xlu0 %768
  %770 = vrot.lane.b32.xlu0 %v527, 15
  %v771 = vpop.permute.xlu0 %770
  %772 = vrot.lane.b32.xlu0 %v528, 15
  %v773 = vpop.permute.xlu0 %772
  %vm790 = vcmask 121856
  %v791 = vsel %vm790, %v695, %v743
  %v792 = vsel %vm790, %v697, %v745
  %v793 = vsel %vm790, %v699, %v747
  %v794 = vsel %vm790, %v701, %v749
  %v795 = vsel %vm790, %v703, %v751
  %v796 = vsel %vm790, %v705, %v753
  %v797 = vsel %vm790, %v707, %v755
  %v798 = vsel %vm790, %v709, %v757
  %v799 = vsel %vm790, %v711, %v759
  %v800 = vsel %vm790, %v713, %v761
  %v801 = vsel %vm790, %v715, %v763
  %v802 = vsel %vm790, %v717, %v765
  %v803 = vsel %vm790, %v719, %v767
  %v804 = vsel %vm790, %v721, %v769
  %v805 = vsel %vm790, %v723, %v771
  %v806 = vsel %vm790, %v725, %v773
  %v807 = vadd.s32 %v44, 1
  %vm808 = vcmp.ge.s32.totalorder %v807, 0
  %vm809 = vcmp.le.s32.totalorder %v807, 15
  %vm810 = vmand %vm808, %vm809
  %v811 = vsel %vm810, %v791, 0.0
  %v812 = vsel %vm810, %v792, 0.0
  %v813 = vsel %vm810, %v793, 0.0
  %v814 = vsel %vm810, %v794, 0.0
  %v815 = vsel %vm810, %v795, 0.0
  %v816 = vsel %vm810, %v796, 0.0
  %v817 = vsel %vm810, %v797, 0.0
  %v818 = vsel %vm810, %v798, 0.0
  %v819 = vsel %vm810, %v799, 0.0
  %v820 = vsel %vm810, %v800, 0.0
  %v821 = vsel %vm810, %v801, 0.0
  %v822 = vsel %vm810, %v802, 0.0
  %v823 = vsel %vm810, %v803, 0.0
  %v824 = vsel %vm810, %v804, 0.0
  %v825 = vsel %vm810, %v805, 0.0
  %v826 = vsel %vm810, %v806, 0.0
  %v827 = vadd.f32 %v678, %v811
  %v828 = vadd.f32 %v679, %v812
  %v829 = vadd.f32 %v680, %v813
  %v830 = vadd.f32 %v681, %v814
  %v831 = vadd.f32 %v682, %v815
  %v832 = vadd.f32 %v683, %v816
  %v833 = vadd.f32 %v684, %v817
  %v834 = vadd.f32 %v685, %v818
  %v835 = vadd.f32 %v686, %v819
  %v836 = vadd.f32 %v687, %v820
  %v837 = vadd.f32 %v688, %v821
  %v838 = vadd.f32 %v689, %v822
  %v839 = vadd.f32 %v690, %v823
  %v840 = vadd.f32 %v691, %v824
  %v841 = vadd.f32 %v692, %v825
  %v842 = vadd.f32 %v693, %v826
  %v843 = vmul.f32 %v827, 0.11111111
  %v844 = vmul.f32 %v828, 0.11111111
  %v845 = vmul.f32 %v829, 0.11111111
  %v846 = vmul.f32 %v830, 0.11111111
  %v847 = vmul.f32 %v831, 0.11111111
  %v848 = vmul.f32 %v832, 0.11111111
  %v849 = vmul.f32 %v833, 0.11111111
  %v850 = vmul.f32 %v834, 0.11111111
  %v851 = vmul.f32 %v835, 0.11111111
  %v852 = vmul.f32 %v836, 0.11111111
  %v853 = vmul.f32 %v837, 0.11111111
  %v854 = vmul.f32 %v838, 0.11111111
  %v855 = vmul.f32 %v839, 0.11111111
  %v856 = vmul.f32 %v840, 0.11111111
  %v857 = vmul.f32 %v841, 0.11111111
  %v858 = vmul.f32 %v842, 0.11111111
  %vm875 = vcmp.ge.s32.totalorder %v843, 1073741824
  %vm876 = vcmp.ge.s32.totalorder %v844, 1073741824
  %vm877 = vcmp.ge.s32.totalorder %v845, 1073741824
  %vm878 = vcmp.ge.s32.totalorder %v846, 1073741824
  %vm879 = vcmp.ge.s32.totalorder %v847, 1073741824
  %vm880 = vcmp.ge.s32.totalorder %v848, 1073741824
  %vm881 = vcmp.ge.s32.totalorder %v849, 1073741824
  %vm882 = vcmp.ge.s32.totalorder %v850, 1073741824
  %vm883 = vcmp.ge.s32.totalorder %v851, 1073741824
  %vm884 = vcmp.ge.s32.totalorder %v852, 1073741824
  %vm885 = vcmp.ge.s32.totalorder %v853, 1073741824
  %vm886 = vcmp.ge.s32.totalorder %v854, 1073741824
  %vm887 = vcmp.ge.s32.totalorder %v855, 1073741824
  %vm888 = vcmp.ge.s32.totalorder %v856, 1073741824
  %vm889 = vcmp.ge.s32.totalorder %v857, 1073741824
  %vm890 = vcmp.ge.s32.totalorder %v858, 1073741824
  %v891 = vsel %vm875, 1, 0
  %v892 = vsel %vm876, 1, 0
  %v893 = vsel %vm877, 1, 0
  %v894 = vsel %vm878, 1, 0
  %v895 = vsel %vm879, 1, 0
  %v896 = vsel %vm880, 1, 0
  %v897 = vsel %vm881, 1, 0
  %v898 = vsel %vm882, 1, 0
  %v899 = vsel %vm883, 1, 0
  %v900 = vsel %vm884, 1, 0
  %v901 = vsel %vm885, 1, 0
  %v902 = vsel %vm886, 1, 0
  %v903 = vsel %vm887, 1, 0
  %v904 = vsel %vm888, 1, 0
  %v905 = vsel %vm889, 1, 0
  %v906 = vsel %vm890, 1, 0
  %vm907 = vcmask 130048
  %v908 = vsel %vm907, %v891, 0
  %v909 = vsel %vm907, %v892, 0
  %v910 = vsel %vm907, %v893, 0
  %v911 = vsel %vm907, %v894, 0
  %v912 = vsel %vm907, %v895, 0
  %v913 = vadd.s32 %v908, %v912
  %v914 = vsel %vm907, %v896, 0
  %v915 = vadd.s32 %v909, %v914
  %v916 = vsel %vm907, %v897, 0
  %v917 = vadd.s32 %v910, %v916
  %v918 = vsel %vm907, %v898, 0
  %v919 = vadd.s32 %v911, %v918
  %v920 = vsel %vm907, %v899, 0
  %v921 = vadd.s32 %v913, %v920
  %v922 = vsel %vm907, %v900, 0
  %v923 = vadd.s32 %v915, %v922
  %v924 = vsel %vm907, %v901, 0
  %v925 = vadd.s32 %v917, %v924
  %v926 = vsel %vm907, %v902, 0
  %v927 = vadd.s32 %v919, %v926
  %v928 = vsel %vm907, %v903, 0
  %v929 = vadd.s32 %v921, %v928
  %v930 = vsel %vm907, %v904, 0
  %v931 = vadd.s32 %v923, %v930
  %v932 = vsel %vm907, %v905, 0
  %v933 = vadd.s32 %v925, %v932
  %v934 = vsel %vm907, %v906, 0
  %v935 = vadd.s32 %v927, %v934
  %v936 = vadd.s32 %v929, %v931
  %v937 = vadd.s32 %v933, %v935
  %v938 = vadd.s32 %v936, %v937
  %v939 = vand.u32 %v938, 65535
  %v940 = vshrl.u32 %v938, 16
  %v941 = vcvt.s32.f32 %v939
  %v942 = vcvt.s32.f32 %v940
  %943 = vadd.xlane.f32.xlu0 %v941
  %v944 = vpop.xlane.xlu0 %943
  %945 = vadd.xlane.f32.xlu0 %v942
  %v946 = vpop.xlane.xlu0 %945
  %v947 = vcvt.f32.s32 %v944
  %v948 = vcvt.f32.s32 %v946
  %v949 = vshll.u32 %v948, 16
  %v950 = vadd.s32 %v949, %v947
  %v951 = vrot.slane %v950, 4
  %v952 = vadd.s32 %v950, %v951
  %v953 = vrot.slane %v952, 2
  %v954 = vadd.s32 %v952, %v953
  %v955 = vrot.slane %v954, 1
  %v956 = vadd.s32 %v954, %v955
  %s957 = vtos %v956
  %p958 = scmp.ge.s32.totalorder %s957, 56
  %s959 = scalar_select %p958, 1073741824, 0
  %s960 = sor.u32 %s959, 536870912
  %v961 = vstv %s960
  %vm962 = vcmp.ge.s32.totalorder %v843, %v961
  %vm963 = vcmp.ge.s32.totalorder %v844, %v961
  %vm964 = vcmp.ge.s32.totalorder %v845, %v961
  %vm965 = vcmp.ge.s32.totalorder %v846, %v961
  %vm966 = vcmp.ge.s32.totalorder %v847, %v961
  %vm967 = vcmp.ge.s32.totalorder %v848, %v961
  %vm968 = vcmp.ge.s32.totalorder %v849, %v961
  %vm969 = vcmp.ge.s32.totalorder %v850, %v961
  %vm970 = vcmp.ge.s32.totalorder %v851, %v961
  %vm971 = vcmp.ge.s32.totalorder %v852, %v961
  %vm972 = vcmp.ge.s32.totalorder %v853, %v961
  %vm973 = vcmp.ge.s32.totalorder %v854, %v961
  %vm974 = vcmp.ge.s32.totalorder %v855, %v961
  %vm975 = vcmp.ge.s32.totalorder %v856, %v961
  %vm976 = vcmp.ge.s32.totalorder %v857, %v961
  %vm977 = vcmp.ge.s32.totalorder %v858, %v961
  %v978 = vsel %vm962, 1, 0
  %v979 = vsel %vm963, 1, 0
  %v980 = vsel %vm964, 1, 0
  %v981 = vsel %vm965, 1, 0
  %v982 = vsel %vm966, 1, 0
  %v983 = vsel %vm967, 1, 0
  %v984 = vsel %vm968, 1, 0
  %v985 = vsel %vm969, 1, 0
  %v986 = vsel %vm970, 1, 0
  %v987 = vsel %vm971, 1, 0
  %v988 = vsel %vm972, 1, 0
  %v989 = vsel %vm973, 1, 0
  %v990 = vsel %vm974, 1, 0
  %v991 = vsel %vm975, 1, 0
  %v992 = vsel %vm976, 1, 0
  %v993 = vsel %vm977, 1, 0
  %v994 = vsel %vm907, %v978, 0
  %v995 = vsel %vm907, %v979, 0
  %v996 = vsel %vm907, %v980, 0
  %v997 = vsel %vm907, %v981, 0
  %v998 = vsel %vm907, %v982, 0
  %v999 = vadd.s32 %v994, %v998
  %v1000 = vsel %vm907, %v983, 0
  %v1001 = vadd.s32 %v995, %v1000
  %v1002 = vsel %vm907, %v984, 0
  %v1003 = vadd.s32 %v996, %v1002
  %v1004 = vsel %vm907, %v985, 0
  %v1005 = vadd.s32 %v997, %v1004
  %v1006 = vsel %vm907, %v986, 0
  %v1007 = vadd.s32 %v999, %v1006
  %v1008 = vsel %vm907, %v987, 0
  %v1009 = vadd.s32 %v1001, %v1008
  %v1010 = vsel %vm907, %v988, 0
  %v1011 = vadd.s32 %v1003, %v1010
  %v1012 = vsel %vm907, %v989, 0
  %v1013 = vadd.s32 %v1005, %v1012
  %v1014 = vsel %vm907, %v990, 0
  %v1015 = vadd.s32 %v1007, %v1014
  %v1016 = vsel %vm907, %v991, 0
  %v1017 = vadd.s32 %v1009, %v1016
  %v1018 = vsel %vm907, %v992, 0
  %v1019 = vadd.s32 %v1011, %v1018
  %v1020 = vsel %vm907, %v993, 0
  %v1021 = vadd.s32 %v1013, %v1020
  %v1022 = vadd.s32 %v1015, %v1017
  %v1023 = vadd.s32 %v1019, %v1021
  %v1024 = vadd.s32 %v1022, %v1023
  %v1025 = vand.u32 %v1024, 65535
  %v1026 = vshrl.u32 %v1024, 16
  %v1027 = vcvt.s32.f32 %v1025
  %v1028 = vcvt.s32.f32 %v1026
  %1029 = vadd.xlane.f32.xlu0 %v1027
  %v1030 = vpop.xlane.xlu0 %1029
  %1031 = vadd.xlane.f32.xlu0 %v1028
  %v1032 = vpop.xlane.xlu0 %1031
  %v1033 = vcvt.f32.s32 %v1030
  %v1034 = vcvt.f32.s32 %v1032
  %v1035 = vshll.u32 %v1034, 16
  %v1036 = vadd.s32 %v1035, %v1033
  %v1037 = vrot.slane %v1036, 4
  %v1038 = vadd.s32 %v1036, %v1037
  %v1039 = vrot.slane %v1038, 2
  %v1040 = vadd.s32 %v1038, %v1039
  %v1041 = vrot.slane %v1040, 1
  %v1042 = vadd.s32 %v1040, %v1041
  %s1043 = vtos %v1042
  %p1044 = scmp.ge.s32.totalorder %s1043, 56
  %s1045 = scalar_select %p1044, %s960, %s959
  %s1046 = sor.u32 %s1045, 268435456
  %v1047 = vstv %s1046
  %vm1048 = vcmp.ge.s32.totalorder %v843, %v1047
  %vm1049 = vcmp.ge.s32.totalorder %v844, %v1047
  %vm1050 = vcmp.ge.s32.totalorder %v845, %v1047
  %vm1051 = vcmp.ge.s32.totalorder %v846, %v1047
  %vm1052 = vcmp.ge.s32.totalorder %v847, %v1047
  %vm1053 = vcmp.ge.s32.totalorder %v848, %v1047
  %vm1054 = vcmp.ge.s32.totalorder %v849, %v1047
  %vm1055 = vcmp.ge.s32.totalorder %v850, %v1047
  %vm1056 = vcmp.ge.s32.totalorder %v851, %v1047
  %vm1057 = vcmp.ge.s32.totalorder %v852, %v1047
  %vm1058 = vcmp.ge.s32.totalorder %v853, %v1047
  %vm1059 = vcmp.ge.s32.totalorder %v854, %v1047
  %vm1060 = vcmp.ge.s32.totalorder %v855, %v1047
  %vm1061 = vcmp.ge.s32.totalorder %v856, %v1047
  %vm1062 = vcmp.ge.s32.totalorder %v857, %v1047
  %vm1063 = vcmp.ge.s32.totalorder %v858, %v1047
  %v1064 = vsel %vm1048, 1, 0
  %v1065 = vsel %vm1049, 1, 0
  %v1066 = vsel %vm1050, 1, 0
  %v1067 = vsel %vm1051, 1, 0
  %v1068 = vsel %vm1052, 1, 0
  %v1069 = vsel %vm1053, 1, 0
  %v1070 = vsel %vm1054, 1, 0
  %v1071 = vsel %vm1055, 1, 0
  %v1072 = vsel %vm1056, 1, 0
  %v1073 = vsel %vm1057, 1, 0
  %v1074 = vsel %vm1058, 1, 0
  %v1075 = vsel %vm1059, 1, 0
  %v1076 = vsel %vm1060, 1, 0
  %v1077 = vsel %vm1061, 1, 0
  %v1078 = vsel %vm1062, 1, 0
  %v1079 = vsel %vm1063, 1, 0
  %v1080 = vsel %vm907, %v1064, 0
  %v1081 = vsel %vm907, %v1065, 0
  %v1082 = vsel %vm907, %v1066, 0
  %v1083 = vsel %vm907, %v1067, 0
  %v1084 = vsel %vm907, %v1068, 0
  %v1085 = vadd.s32 %v1080, %v1084
  %v1086 = vsel %vm907, %v1069, 0
  %v1087 = vadd.s32 %v1081, %v1086
  %v1088 = vsel %vm907, %v1070, 0
  %v1089 = vadd.s32 %v1082, %v1088
  %v1090 = vsel %vm907, %v1071, 0
  %v1091 = vadd.s32 %v1083, %v1090
  %v1092 = vsel %vm907, %v1072, 0
  %v1093 = vadd.s32 %v1085, %v1092
  %v1094 = vsel %vm907, %v1073, 0
  %v1095 = vadd.s32 %v1087, %v1094
  %v1096 = vsel %vm907, %v1074, 0
  %v1097 = vadd.s32 %v1089, %v1096
  %v1098 = vsel %vm907, %v1075, 0
  %v1099 = vadd.s32 %v1091, %v1098
  %v1100 = vsel %vm907, %v1076, 0
  %v1101 = vadd.s32 %v1093, %v1100
  %v1102 = vsel %vm907, %v1077, 0
  %v1103 = vadd.s32 %v1095, %v1102
  %v1104 = vsel %vm907, %v1078, 0
  %v1105 = vadd.s32 %v1097, %v1104
  %v1106 = vsel %vm907, %v1079, 0
  %v1107 = vadd.s32 %v1099, %v1106
  %v1108 = vadd.s32 %v1101, %v1103
  %v1109 = vadd.s32 %v1105, %v1107
  %v1110 = vadd.s32 %v1108, %v1109
  %v1111 = vand.u32 %v1110, 65535
  %v1112 = vshrl.u32 %v1110, 16
  %v1113 = vcvt.s32.f32 %v1111
  %v1114 = vcvt.s32.f32 %v1112
  %1115 = vadd.xlane.f32.xlu0 %v1113
  %v1116 = vpop.xlane.xlu0 %1115
  %1117 = vadd.xlane.f32.xlu0 %v1114
  %v1118 = vpop.xlane.xlu0 %1117
  %v1119 = vcvt.f32.s32 %v1116
  %v1120 = vcvt.f32.s32 %v1118
  %v1121 = vshll.u32 %v1120, 16
  %v1122 = vadd.s32 %v1121, %v1119
  %v1123 = vrot.slane %v1122, 4
  %v1124 = vadd.s32 %v1122, %v1123
  %v1125 = vrot.slane %v1124, 2
  %v1126 = vadd.s32 %v1124, %v1125
  %v1127 = vrot.slane %v1126, 1
  %v1128 = vadd.s32 %v1126, %v1127
  %s1129 = vtos %v1128
  %p1130 = scmp.ge.s32.totalorder %s1129, 56
  %s1131 = scalar_select %p1130, %s1046, %s1045
  %s1132 = sor.u32 %s1131, 134217728
  %v1133 = vstv %s1132
  %vm1134 = vcmp.ge.s32.totalorder %v843, %v1133
  %vm1135 = vcmp.ge.s32.totalorder %v844, %v1133
  %vm1136 = vcmp.ge.s32.totalorder %v845, %v1133
  %vm1137 = vcmp.ge.s32.totalorder %v846, %v1133
  %vm1138 = vcmp.ge.s32.totalorder %v847, %v1133
  %vm1139 = vcmp.ge.s32.totalorder %v848, %v1133
  %vm1140 = vcmp.ge.s32.totalorder %v849, %v1133
  %vm1141 = vcmp.ge.s32.totalorder %v850, %v1133
  %vm1142 = vcmp.ge.s32.totalorder %v851, %v1133
  %vm1143 = vcmp.ge.s32.totalorder %v852, %v1133
  %vm1144 = vcmp.ge.s32.totalorder %v853, %v1133
  %vm1145 = vcmp.ge.s32.totalorder %v854, %v1133
  %vm1146 = vcmp.ge.s32.totalorder %v855, %v1133
  %vm1147 = vcmp.ge.s32.totalorder %v856, %v1133
  %vm1148 = vcmp.ge.s32.totalorder %v857, %v1133
  %vm1149 = vcmp.ge.s32.totalorder %v858, %v1133
  %v1150 = vsel %vm1134, 1, 0
  %v1151 = vsel %vm1135, 1, 0
  %v1152 = vsel %vm1136, 1, 0
  %v1153 = vsel %vm1137, 1, 0
  %v1154 = vsel %vm1138, 1, 0
  %v1155 = vsel %vm1139, 1, 0
  %v1156 = vsel %vm1140, 1, 0
  %v1157 = vsel %vm1141, 1, 0
  %v1158 = vsel %vm1142, 1, 0
  %v1159 = vsel %vm1143, 1, 0
  %v1160 = vsel %vm1144, 1, 0
  %v1161 = vsel %vm1145, 1, 0
  %v1162 = vsel %vm1146, 1, 0
  %v1163 = vsel %vm1147, 1, 0
  %v1164 = vsel %vm1148, 1, 0
  %v1165 = vsel %vm1149, 1, 0
  %v1166 = vsel %vm907, %v1150, 0
  %v1167 = vsel %vm907, %v1151, 0
  %v1168 = vsel %vm907, %v1152, 0
  %v1169 = vsel %vm907, %v1153, 0
  %v1170 = vsel %vm907, %v1154, 0
  %v1171 = vadd.s32 %v1166, %v1170
  %v1172 = vsel %vm907, %v1155, 0
  %v1173 = vadd.s32 %v1167, %v1172
  %v1174 = vsel %vm907, %v1156, 0
  %v1175 = vadd.s32 %v1168, %v1174
  %v1176 = vsel %vm907, %v1157, 0
  %v1177 = vadd.s32 %v1169, %v1176
  %v1178 = vsel %vm907, %v1158, 0
  %v1179 = vadd.s32 %v1171, %v1178
  %v1180 = vsel %vm907, %v1159, 0
  %v1181 = vadd.s32 %v1173, %v1180
  %v1182 = vsel %vm907, %v1160, 0
  %v1183 = vadd.s32 %v1175, %v1182
  %v1184 = vsel %vm907, %v1161, 0
  %v1185 = vadd.s32 %v1177, %v1184
  %v1186 = vsel %vm907, %v1162, 0
  %v1187 = vadd.s32 %v1179, %v1186
  %v1188 = vsel %vm907, %v1163, 0
  %v1189 = vadd.s32 %v1181, %v1188
  %v1190 = vsel %vm907, %v1164, 0
  %v1191 = vadd.s32 %v1183, %v1190
  %v1192 = vsel %vm907, %v1165, 0
  %v1193 = vadd.s32 %v1185, %v1192
  %v1194 = vadd.s32 %v1187, %v1189
  %v1195 = vadd.s32 %v1191, %v1193
  %v1196 = vadd.s32 %v1194, %v1195
  %v1197 = vand.u32 %v1196, 65535
  %v1198 = vshrl.u32 %v1196, 16
  %v1199 = vcvt.s32.f32 %v1197
  %v1200 = vcvt.s32.f32 %v1198
  %1201 = vadd.xlane.f32.xlu0 %v1199
  %v1202 = vpop.xlane.xlu0 %1201
  %1203 = vadd.xlane.f32.xlu0 %v1200
  %v1204 = vpop.xlane.xlu0 %1203
  %v1205 = vcvt.f32.s32 %v1202
  %v1206 = vcvt.f32.s32 %v1204
  %v1207 = vshll.u32 %v1206, 16
  %v1208 = vadd.s32 %v1207, %v1205
  %v1209 = vrot.slane %v1208, 4
  %v1210 = vadd.s32 %v1208, %v1209
  %v1211 = vrot.slane %v1210, 2
  %v1212 = vadd.s32 %v1210, %v1211
  %v1213 = vrot.slane %v1212, 1
  %v1214 = vadd.s32 %v1212, %v1213
  %s1215 = vtos %v1214
  %p1216 = scmp.ge.s32.totalorder %s1215, 56
  %s1217 = scalar_select %p1216, %s1132, %s1131
  %s1218 = sor.u32 %s1217, 67108864
  %v1219 = vstv %s1218
  %vm1220 = vcmp.ge.s32.totalorder %v843, %v1219
  %vm1221 = vcmp.ge.s32.totalorder %v844, %v1219
  %vm1222 = vcmp.ge.s32.totalorder %v845, %v1219
  %vm1223 = vcmp.ge.s32.totalorder %v846, %v1219
  %vm1224 = vcmp.ge.s32.totalorder %v847, %v1219
  %vm1225 = vcmp.ge.s32.totalorder %v848, %v1219
  %vm1226 = vcmp.ge.s32.totalorder %v849, %v1219
  %vm1227 = vcmp.ge.s32.totalorder %v850, %v1219
  %vm1228 = vcmp.ge.s32.totalorder %v851, %v1219
  %vm1229 = vcmp.ge.s32.totalorder %v852, %v1219
  %vm1230 = vcmp.ge.s32.totalorder %v853, %v1219
  %vm1231 = vcmp.ge.s32.totalorder %v854, %v1219
  %vm1232 = vcmp.ge.s32.totalorder %v855, %v1219
  %vm1233 = vcmp.ge.s32.totalorder %v856, %v1219
  %vm1234 = vcmp.ge.s32.totalorder %v857, %v1219
  %vm1235 = vcmp.ge.s32.totalorder %v858, %v1219
  %v1236 = vsel %vm1220, 1, 0
  %v1237 = vsel %vm1221, 1, 0
  %v1238 = vsel %vm1222, 1, 0
  %v1239 = vsel %vm1223, 1, 0
  %v1240 = vsel %vm1224, 1, 0
  %v1241 = vsel %vm1225, 1, 0
  %v1242 = vsel %vm1226, 1, 0
  %v1243 = vsel %vm1227, 1, 0
  %v1244 = vsel %vm1228, 1, 0
  %v1245 = vsel %vm1229, 1, 0
  %v1246 = vsel %vm1230, 1, 0
  %v1247 = vsel %vm1231, 1, 0
  %v1248 = vsel %vm1232, 1, 0
  %v1249 = vsel %vm1233, 1, 0
  %v1250 = vsel %vm1234, 1, 0
  %v1251 = vsel %vm1235, 1, 0
  %v1252 = vsel %vm907, %v1236, 0
  %v1253 = vsel %vm907, %v1237, 0
  %v1254 = vsel %vm907, %v1238, 0
  %v1255 = vsel %vm907, %v1239, 0
  %v1256 = vsel %vm907, %v1240, 0
  %v1257 = vadd.s32 %v1252, %v1256
  %v1258 = vsel %vm907, %v1241, 0
  %v1259 = vadd.s32 %v1253, %v1258
  %v1260 = vsel %vm907, %v1242, 0
  %v1261 = vadd.s32 %v1254, %v1260
  %v1262 = vsel %vm907, %v1243, 0
  %v1263 = vadd.s32 %v1255, %v1262
  %v1264 = vsel %vm907, %v1244, 0
  %v1265 = vadd.s32 %v1257, %v1264
  %v1266 = vsel %vm907, %v1245, 0
  %v1267 = vadd.s32 %v1259, %v1266
  %v1268 = vsel %vm907, %v1246, 0
  %v1269 = vadd.s32 %v1261, %v1268
  %v1270 = vsel %vm907, %v1247, 0
  %v1271 = vadd.s32 %v1263, %v1270
  %v1272 = vsel %vm907, %v1248, 0
  %v1273 = vadd.s32 %v1265, %v1272
  %v1274 = vsel %vm907, %v1249, 0
  %v1275 = vadd.s32 %v1267, %v1274
  %v1276 = vsel %vm907, %v1250, 0
  %v1277 = vadd.s32 %v1269, %v1276
  %v1278 = vsel %vm907, %v1251, 0
  %v1279 = vadd.s32 %v1271, %v1278
  %v1280 = vadd.s32 %v1273, %v1275
  %v1281 = vadd.s32 %v1277, %v1279
  %v1282 = vadd.s32 %v1280, %v1281
  %v1283 = vand.u32 %v1282, 65535
  %v1284 = vshrl.u32 %v1282, 16
  %v1285 = vcvt.s32.f32 %v1283
  %v1286 = vcvt.s32.f32 %v1284
  %1287 = vadd.xlane.f32.xlu0 %v1285
  %v1288 = vpop.xlane.xlu0 %1287
  %1289 = vadd.xlane.f32.xlu0 %v1286
  %v1290 = vpop.xlane.xlu0 %1289
  %v1291 = vcvt.f32.s32 %v1288
  %v1292 = vcvt.f32.s32 %v1290
  %v1293 = vshll.u32 %v1292, 16
  %v1294 = vadd.s32 %v1293, %v1291
  %v1295 = vrot.slane %v1294, 4
  %v1296 = vadd.s32 %v1294, %v1295
  %v1297 = vrot.slane %v1296, 2
  %v1298 = vadd.s32 %v1296, %v1297
  %v1299 = vrot.slane %v1298, 1
  %v1300 = vadd.s32 %v1298, %v1299
  %s1301 = vtos %v1300
  %p1302 = scmp.ge.s32.totalorder %s1301, 56
  %s1303 = scalar_select %p1302, %s1218, %s1217
  %s1304 = sor.u32 %s1303, 33554432
  %v1305 = vstv %s1304
  %vm1306 = vcmp.ge.s32.totalorder %v843, %v1305
  %vm1307 = vcmp.ge.s32.totalorder %v844, %v1305
  %vm1308 = vcmp.ge.s32.totalorder %v845, %v1305
  %vm1309 = vcmp.ge.s32.totalorder %v846, %v1305
  %vm1310 = vcmp.ge.s32.totalorder %v847, %v1305
  %vm1311 = vcmp.ge.s32.totalorder %v848, %v1305
  %vm1312 = vcmp.ge.s32.totalorder %v849, %v1305
  %vm1313 = vcmp.ge.s32.totalorder %v850, %v1305
  %vm1314 = vcmp.ge.s32.totalorder %v851, %v1305
  %vm1315 = vcmp.ge.s32.totalorder %v852, %v1305
  %vm1316 = vcmp.ge.s32.totalorder %v853, %v1305
  %vm1317 = vcmp.ge.s32.totalorder %v854, %v1305
  %vm1318 = vcmp.ge.s32.totalorder %v855, %v1305
  %vm1319 = vcmp.ge.s32.totalorder %v856, %v1305
  %vm1320 = vcmp.ge.s32.totalorder %v857, %v1305
  %vm1321 = vcmp.ge.s32.totalorder %v858, %v1305
  %v1322 = vsel %vm1306, 1, 0
  %v1323 = vsel %vm1307, 1, 0
  %v1324 = vsel %vm1308, 1, 0
  %v1325 = vsel %vm1309, 1, 0
  %v1326 = vsel %vm1310, 1, 0
  %v1327 = vsel %vm1311, 1, 0
  %v1328 = vsel %vm1312, 1, 0
  %v1329 = vsel %vm1313, 1, 0
  %v1330 = vsel %vm1314, 1, 0
  %v1331 = vsel %vm1315, 1, 0
  %v1332 = vsel %vm1316, 1, 0
  %v1333 = vsel %vm1317, 1, 0
  %v1334 = vsel %vm1318, 1, 0
  %v1335 = vsel %vm1319, 1, 0
  %v1336 = vsel %vm1320, 1, 0
  %v1337 = vsel %vm1321, 1, 0
  %v1338 = vsel %vm907, %v1322, 0
  %v1339 = vsel %vm907, %v1323, 0
  %v1340 = vsel %vm907, %v1324, 0
  %v1341 = vsel %vm907, %v1325, 0
  %v1342 = vsel %vm907, %v1326, 0
  %v1343 = vadd.s32 %v1338, %v1342
  %v1344 = vsel %vm907, %v1327, 0
  %v1345 = vadd.s32 %v1339, %v1344
  %v1346 = vsel %vm907, %v1328, 0
  %v1347 = vadd.s32 %v1340, %v1346
  %v1348 = vsel %vm907, %v1329, 0
  %v1349 = vadd.s32 %v1341, %v1348
  %v1350 = vsel %vm907, %v1330, 0
  %v1351 = vadd.s32 %v1343, %v1350
  %v1352 = vsel %vm907, %v1331, 0
  %v1353 = vadd.s32 %v1345, %v1352
  %v1354 = vsel %vm907, %v1332, 0
  %v1355 = vadd.s32 %v1347, %v1354
  %v1356 = vsel %vm907, %v1333, 0
  %v1357 = vadd.s32 %v1349, %v1356
  %v1358 = vsel %vm907, %v1334, 0
  %v1359 = vadd.s32 %v1351, %v1358
  %v1360 = vsel %vm907, %v1335, 0
  %v1361 = vadd.s32 %v1353, %v1360
  %v1362 = vsel %vm907, %v1336, 0
  %v1363 = vadd.s32 %v1355, %v1362
  %v1364 = vsel %vm907, %v1337, 0
  %v1365 = vadd.s32 %v1357, %v1364
  %v1366 = vadd.s32 %v1359, %v1361
  %v1367 = vadd.s32 %v1363, %v1365
  %v1368 = vadd.s32 %v1366, %v1367
  %v1369 = vand.u32 %v1368, 65535
  %v1370 = vshrl.u32 %v1368, 16
  %v1371 = vcvt.s32.f32 %v1369
  %v1372 = vcvt.s32.f32 %v1370
  %1373 = vadd.xlane.f32.xlu0 %v1371
  %v1374 = vpop.xlane.xlu0 %1373
  %1375 = vadd.xlane.f32.xlu0 %v1372
  %v1376 = vpop.xlane.xlu0 %1375
  %v1377 = vcvt.f32.s32 %v1374
  %v1378 = vcvt.f32.s32 %v1376
  %v1379 = vshll.u32 %v1378, 16
  %v1380 = vadd.s32 %v1379, %v1377
  %v1381 = vrot.slane %v1380, 4
  %v1382 = vadd.s32 %v1380, %v1381
  %v1383 = vrot.slane %v1382, 2
  %v1384 = vadd.s32 %v1382, %v1383
  %v1385 = vrot.slane %v1384, 1
  %v1386 = vadd.s32 %v1384, %v1385
  %s1387 = vtos %v1386
  %p1388 = scmp.ge.s32.totalorder %s1387, 56
  %s1389 = scalar_select %p1388, %s1304, %s1303
  %s1390 = sor.u32 %s1389, 16777216
  %v1391 = vstv %s1390
  %vm1392 = vcmp.ge.s32.totalorder %v843, %v1391
  %vm1393 = vcmp.ge.s32.totalorder %v844, %v1391
  %vm1394 = vcmp.ge.s32.totalorder %v845, %v1391
  %vm1395 = vcmp.ge.s32.totalorder %v846, %v1391
  %vm1396 = vcmp.ge.s32.totalorder %v847, %v1391
  %vm1397 = vcmp.ge.s32.totalorder %v848, %v1391
  %vm1398 = vcmp.ge.s32.totalorder %v849, %v1391
  %vm1399 = vcmp.ge.s32.totalorder %v850, %v1391
  %vm1400 = vcmp.ge.s32.totalorder %v851, %v1391
  %vm1401 = vcmp.ge.s32.totalorder %v852, %v1391
  %vm1402 = vcmp.ge.s32.totalorder %v853, %v1391
  %vm1403 = vcmp.ge.s32.totalorder %v854, %v1391
  %vm1404 = vcmp.ge.s32.totalorder %v855, %v1391
  %vm1405 = vcmp.ge.s32.totalorder %v856, %v1391
  %vm1406 = vcmp.ge.s32.totalorder %v857, %v1391
  %vm1407 = vcmp.ge.s32.totalorder %v858, %v1391
  %v1408 = vsel %vm1392, 1, 0
  %v1409 = vsel %vm1393, 1, 0
  %v1410 = vsel %vm1394, 1, 0
  %v1411 = vsel %vm1395, 1, 0
  %v1412 = vsel %vm1396, 1, 0
  %v1413 = vsel %vm1397, 1, 0
  %v1414 = vsel %vm1398, 1, 0
  %v1415 = vsel %vm1399, 1, 0
  %v1416 = vsel %vm1400, 1, 0
  %v1417 = vsel %vm1401, 1, 0
  %v1418 = vsel %vm1402, 1, 0
  %v1419 = vsel %vm1403, 1, 0
  %v1420 = vsel %vm1404, 1, 0
  %v1421 = vsel %vm1405, 1, 0
  %v1422 = vsel %vm1406, 1, 0
  %v1423 = vsel %vm1407, 1, 0
  %v1424 = vsel %vm907, %v1408, 0
  %v1425 = vsel %vm907, %v1409, 0
  %v1426 = vsel %vm907, %v1410, 0
  %v1427 = vsel %vm907, %v1411, 0
  %v1428 = vsel %vm907, %v1412, 0
  %v1429 = vadd.s32 %v1424, %v1428
  %v1430 = vsel %vm907, %v1413, 0
  %v1431 = vadd.s32 %v1425, %v1430
  %v1432 = vsel %vm907, %v1414, 0
  %v1433 = vadd.s32 %v1426, %v1432
  %v1434 = vsel %vm907, %v1415, 0
  %v1435 = vadd.s32 %v1427, %v1434
  %v1436 = vsel %vm907, %v1416, 0
  %v1437 = vadd.s32 %v1429, %v1436
  %v1438 = vsel %vm907, %v1417, 0
  %v1439 = vadd.s32 %v1431, %v1438
  %v1440 = vsel %vm907, %v1418, 0
  %v1441 = vadd.s32 %v1433, %v1440
  %v1442 = vsel %vm907, %v1419, 0
  %v1443 = vadd.s32 %v1435, %v1442
  %v1444 = vsel %vm907, %v1420, 0
  %v1445 = vadd.s32 %v1437, %v1444
  %v1446 = vsel %vm907, %v1421, 0
  %v1447 = vadd.s32 %v1439, %v1446
  %v1448 = vsel %vm907, %v1422, 0
  %v1449 = vadd.s32 %v1441, %v1448
  %v1450 = vsel %vm907, %v1423, 0
  %v1451 = vadd.s32 %v1443, %v1450
  %v1452 = vadd.s32 %v1445, %v1447
  %v1453 = vadd.s32 %v1449, %v1451
  %v1454 = vadd.s32 %v1452, %v1453
  %v1455 = vand.u32 %v1454, 65535
  %v1456 = vshrl.u32 %v1454, 16
  %v1457 = vcvt.s32.f32 %v1455
  %v1458 = vcvt.s32.f32 %v1456
  %1459 = vadd.xlane.f32.xlu0 %v1457
  %v1460 = vpop.xlane.xlu0 %1459
  %1461 = vadd.xlane.f32.xlu0 %v1458
  %v1462 = vpop.xlane.xlu0 %1461
  %v1463 = vcvt.f32.s32 %v1460
  %v1464 = vcvt.f32.s32 %v1462
  %v1465 = vshll.u32 %v1464, 16
  %v1466 = vadd.s32 %v1465, %v1463
  %v1467 = vrot.slane %v1466, 4
  %v1468 = vadd.s32 %v1466, %v1467
  %v1469 = vrot.slane %v1468, 2
  %v1470 = vadd.s32 %v1468, %v1469
  %v1471 = vrot.slane %v1470, 1
  %v1472 = vadd.s32 %v1470, %v1471
  %s1473 = vtos %v1472
  %p1474 = scmp.ge.s32.totalorder %s1473, 56
  %s1475 = scalar_select %p1474, %s1390, %s1389
  %s1476 = sor.u32 %s1475, 8388608
  %v1477 = vstv %s1476
  %vm1478 = vcmp.ge.s32.totalorder %v843, %v1477
  %vm1479 = vcmp.ge.s32.totalorder %v844, %v1477
  %vm1480 = vcmp.ge.s32.totalorder %v845, %v1477
  %vm1481 = vcmp.ge.s32.totalorder %v846, %v1477
  %vm1482 = vcmp.ge.s32.totalorder %v847, %v1477
  %vm1483 = vcmp.ge.s32.totalorder %v848, %v1477
  %vm1484 = vcmp.ge.s32.totalorder %v849, %v1477
  %vm1485 = vcmp.ge.s32.totalorder %v850, %v1477
  %vm1486 = vcmp.ge.s32.totalorder %v851, %v1477
  %vm1487 = vcmp.ge.s32.totalorder %v852, %v1477
  %vm1488 = vcmp.ge.s32.totalorder %v853, %v1477
  %vm1489 = vcmp.ge.s32.totalorder %v854, %v1477
  %vm1490 = vcmp.ge.s32.totalorder %v855, %v1477
  %vm1491 = vcmp.ge.s32.totalorder %v856, %v1477
  %vm1492 = vcmp.ge.s32.totalorder %v857, %v1477
  %vm1493 = vcmp.ge.s32.totalorder %v858, %v1477
  %v1494 = vsel %vm1478, 1, 0
  %v1495 = vsel %vm1479, 1, 0
  %v1496 = vsel %vm1480, 1, 0
  %v1497 = vsel %vm1481, 1, 0
  %v1498 = vsel %vm1482, 1, 0
  %v1499 = vsel %vm1483, 1, 0
  %v1500 = vsel %vm1484, 1, 0
  %v1501 = vsel %vm1485, 1, 0
  %v1502 = vsel %vm1486, 1, 0
  %v1503 = vsel %vm1487, 1, 0
  %v1504 = vsel %vm1488, 1, 0
  %v1505 = vsel %vm1489, 1, 0
  %v1506 = vsel %vm1490, 1, 0
  %v1507 = vsel %vm1491, 1, 0
  %v1508 = vsel %vm1492, 1, 0
  %v1509 = vsel %vm1493, 1, 0
  %v1510 = vsel %vm907, %v1494, 0
  %v1511 = vsel %vm907, %v1495, 0
  %v1512 = vsel %vm907, %v1496, 0
  %v1513 = vsel %vm907, %v1497, 0
  %v1514 = vsel %vm907, %v1498, 0
  %v1515 = vadd.s32 %v1510, %v1514
  %v1516 = vsel %vm907, %v1499, 0
  %v1517 = vadd.s32 %v1511, %v1516
  %v1518 = vsel %vm907, %v1500, 0
  %v1519 = vadd.s32 %v1512, %v1518
  %v1520 = vsel %vm907, %v1501, 0
  %v1521 = vadd.s32 %v1513, %v1520
  %v1522 = vsel %vm907, %v1502, 0
  %v1523 = vadd.s32 %v1515, %v1522
  %v1524 = vsel %vm907, %v1503, 0
  %v1525 = vadd.s32 %v1517, %v1524
  %v1526 = vsel %vm907, %v1504, 0
  %v1527 = vadd.s32 %v1519, %v1526
  %v1528 = vsel %vm907, %v1505, 0
  %v1529 = vadd.s32 %v1521, %v1528
  %v1530 = vsel %vm907, %v1506, 0
  %v1531 = vadd.s32 %v1523, %v1530
  %v1532 = vsel %vm907, %v1507, 0
  %v1533 = vadd.s32 %v1525, %v1532
  %v1534 = vsel %vm907, %v1508, 0
  %v1535 = vadd.s32 %v1527, %v1534
  %v1536 = vsel %vm907, %v1509, 0
  %v1537 = vadd.s32 %v1529, %v1536
  %v1538 = vadd.s32 %v1531, %v1533
  %v1539 = vadd.s32 %v1535, %v1537
  %v1540 = vadd.s32 %v1538, %v1539
  %v1541 = vand.u32 %v1540, 65535
  %v1542 = vshrl.u32 %v1540, 16
  %v1543 = vcvt.s32.f32 %v1541
  %v1544 = vcvt.s32.f32 %v1542
  %1545 = vadd.xlane.f32.xlu0 %v1543
  %v1546 = vpop.xlane.xlu0 %1545
  %1547 = vadd.xlane.f32.xlu0 %v1544
  %v1548 = vpop.xlane.xlu0 %1547
  %v1549 = vcvt.f32.s32 %v1546
  %v1550 = vcvt.f32.s32 %v1548
  %v1551 = vshll.u32 %v1550, 16
  %v1552 = vadd.s32 %v1551, %v1549
  %v1553 = vrot.slane %v1552, 4
  %v1554 = vadd.s32 %v1552, %v1553
  %v1555 = vrot.slane %v1554, 2
  %v1556 = vadd.s32 %v1554, %v1555
  %v1557 = vrot.slane %v1556, 1
  %v1558 = vadd.s32 %v1556, %v1557
  %s1559 = vtos %v1558
  %p1560 = scmp.ge.s32.totalorder %s1559, 56
  %s1561 = scalar_select %p1560, %s1476, %s1475
  %s1562 = sor.u32 %s1561, 4194304
  %v1563 = vstv %s1562
  %vm1564 = vcmp.ge.s32.totalorder %v843, %v1563
  %vm1565 = vcmp.ge.s32.totalorder %v844, %v1563
  %vm1566 = vcmp.ge.s32.totalorder %v845, %v1563
  %vm1567 = vcmp.ge.s32.totalorder %v846, %v1563
  %vm1568 = vcmp.ge.s32.totalorder %v847, %v1563
  %vm1569 = vcmp.ge.s32.totalorder %v848, %v1563
  %vm1570 = vcmp.ge.s32.totalorder %v849, %v1563
  %vm1571 = vcmp.ge.s32.totalorder %v850, %v1563
  %vm1572 = vcmp.ge.s32.totalorder %v851, %v1563
  %vm1573 = vcmp.ge.s32.totalorder %v852, %v1563
  %vm1574 = vcmp.ge.s32.totalorder %v853, %v1563
  %vm1575 = vcmp.ge.s32.totalorder %v854, %v1563
  %vm1576 = vcmp.ge.s32.totalorder %v855, %v1563
  %vm1577 = vcmp.ge.s32.totalorder %v856, %v1563
  %vm1578 = vcmp.ge.s32.totalorder %v857, %v1563
  %vm1579 = vcmp.ge.s32.totalorder %v858, %v1563
  %v1580 = vsel %vm1564, 1, 0
  %v1581 = vsel %vm1565, 1, 0
  %v1582 = vsel %vm1566, 1, 0
  %v1583 = vsel %vm1567, 1, 0
  %v1584 = vsel %vm1568, 1, 0
  %v1585 = vsel %vm1569, 1, 0
  %v1586 = vsel %vm1570, 1, 0
  %v1587 = vsel %vm1571, 1, 0
  %v1588 = vsel %vm1572, 1, 0
  %v1589 = vsel %vm1573, 1, 0
  %v1590 = vsel %vm1574, 1, 0
  %v1591 = vsel %vm1575, 1, 0
  %v1592 = vsel %vm1576, 1, 0
  %v1593 = vsel %vm1577, 1, 0
  %v1594 = vsel %vm1578, 1, 0
  %v1595 = vsel %vm1579, 1, 0
  %v1596 = vsel %vm907, %v1580, 0
  %v1597 = vsel %vm907, %v1581, 0
  %v1598 = vsel %vm907, %v1582, 0
  %v1599 = vsel %vm907, %v1583, 0
  %v1600 = vsel %vm907, %v1584, 0
  %v1601 = vadd.s32 %v1596, %v1600
  %v1602 = vsel %vm907, %v1585, 0
  %v1603 = vadd.s32 %v1597, %v1602
  %v1604 = vsel %vm907, %v1586, 0
  %v1605 = vadd.s32 %v1598, %v1604
  %v1606 = vsel %vm907, %v1587, 0
  %v1607 = vadd.s32 %v1599, %v1606
  %v1608 = vsel %vm907, %v1588, 0
  %v1609 = vadd.s32 %v1601, %v1608
  %v1610 = vsel %vm907, %v1589, 0
  %v1611 = vadd.s32 %v1603, %v1610
  %v1612 = vsel %vm907, %v1590, 0
  %v1613 = vadd.s32 %v1605, %v1612
  %v1614 = vsel %vm907, %v1591, 0
  %v1615 = vadd.s32 %v1607, %v1614
  %v1616 = vsel %vm907, %v1592, 0
  %v1617 = vadd.s32 %v1609, %v1616
  %v1618 = vsel %vm907, %v1593, 0
  %v1619 = vadd.s32 %v1611, %v1618
  %v1620 = vsel %vm907, %v1594, 0
  %v1621 = vadd.s32 %v1613, %v1620
  %v1622 = vsel %vm907, %v1595, 0
  %v1623 = vadd.s32 %v1615, %v1622
  %v1624 = vadd.s32 %v1617, %v1619
  %v1625 = vadd.s32 %v1621, %v1623
  %v1626 = vadd.s32 %v1624, %v1625
  %v1627 = vand.u32 %v1626, 65535
  %v1628 = vshrl.u32 %v1626, 16
  %v1629 = vcvt.s32.f32 %v1627
  %v1630 = vcvt.s32.f32 %v1628
  %1631 = vadd.xlane.f32.xlu0 %v1629
  %v1632 = vpop.xlane.xlu0 %1631
  %1633 = vadd.xlane.f32.xlu0 %v1630
  %v1634 = vpop.xlane.xlu0 %1633
  %v1635 = vcvt.f32.s32 %v1632
  %v1636 = vcvt.f32.s32 %v1634
  %v1637 = vshll.u32 %v1636, 16
  %v1638 = vadd.s32 %v1637, %v1635
  %v1639 = vrot.slane %v1638, 4
  %v1640 = vadd.s32 %v1638, %v1639
  %v1641 = vrot.slane %v1640, 2
  %v1642 = vadd.s32 %v1640, %v1641
  %v1643 = vrot.slane %v1642, 1
  %v1644 = vadd.s32 %v1642, %v1643
  %s1645 = vtos %v1644
  %p1646 = scmp.ge.s32.totalorder %s1645, 56
  %s1647 = scalar_select %p1646, %s1562, %s1561
  %s1648 = sor.u32 %s1647, 2097152
  %v1649 = vstv %s1648
  %vm1650 = vcmp.ge.s32.totalorder %v843, %v1649
  %vm1651 = vcmp.ge.s32.totalorder %v844, %v1649
  %vm1652 = vcmp.ge.s32.totalorder %v845, %v1649
  %vm1653 = vcmp.ge.s32.totalorder %v846, %v1649
  %vm1654 = vcmp.ge.s32.totalorder %v847, %v1649
  %vm1655 = vcmp.ge.s32.totalorder %v848, %v1649
  %vm1656 = vcmp.ge.s32.totalorder %v849, %v1649
  %vm1657 = vcmp.ge.s32.totalorder %v850, %v1649
  %vm1658 = vcmp.ge.s32.totalorder %v851, %v1649
  %vm1659 = vcmp.ge.s32.totalorder %v852, %v1649
  %vm1660 = vcmp.ge.s32.totalorder %v853, %v1649
  %vm1661 = vcmp.ge.s32.totalorder %v854, %v1649
  %vm1662 = vcmp.ge.s32.totalorder %v855, %v1649
  %vm1663 = vcmp.ge.s32.totalorder %v856, %v1649
  %vm1664 = vcmp.ge.s32.totalorder %v857, %v1649
  %vm1665 = vcmp.ge.s32.totalorder %v858, %v1649
  %v1666 = vsel %vm1650, 1, 0
  %v1667 = vsel %vm1651, 1, 0
  %v1668 = vsel %vm1652, 1, 0
  %v1669 = vsel %vm1653, 1, 0
  %v1670 = vsel %vm1654, 1, 0
  %v1671 = vsel %vm1655, 1, 0
  %v1672 = vsel %vm1656, 1, 0
  %v1673 = vsel %vm1657, 1, 0
  %v1674 = vsel %vm1658, 1, 0
  %v1675 = vsel %vm1659, 1, 0
  %v1676 = vsel %vm1660, 1, 0
  %v1677 = vsel %vm1661, 1, 0
  %v1678 = vsel %vm1662, 1, 0
  %v1679 = vsel %vm1663, 1, 0
  %v1680 = vsel %vm1664, 1, 0
  %v1681 = vsel %vm1665, 1, 0
  %v1682 = vsel %vm907, %v1666, 0
  %v1683 = vsel %vm907, %v1667, 0
  %v1684 = vsel %vm907, %v1668, 0
  %v1685 = vsel %vm907, %v1669, 0
  %v1686 = vsel %vm907, %v1670, 0
  %v1687 = vadd.s32 %v1682, %v1686
  %v1688 = vsel %vm907, %v1671, 0
  %v1689 = vadd.s32 %v1683, %v1688
  %v1690 = vsel %vm907, %v1672, 0
  %v1691 = vadd.s32 %v1684, %v1690
  %v1692 = vsel %vm907, %v1673, 0
  %v1693 = vadd.s32 %v1685, %v1692
  %v1694 = vsel %vm907, %v1674, 0
  %v1695 = vadd.s32 %v1687, %v1694
  %v1696 = vsel %vm907, %v1675, 0
  %v1697 = vadd.s32 %v1689, %v1696
  %v1698 = vsel %vm907, %v1676, 0
  %v1699 = vadd.s32 %v1691, %v1698
  %v1700 = vsel %vm907, %v1677, 0
  %v1701 = vadd.s32 %v1693, %v1700
  %v1702 = vsel %vm907, %v1678, 0
  %v1703 = vadd.s32 %v1695, %v1702
  %v1704 = vsel %vm907, %v1679, 0
  %v1705 = vadd.s32 %v1697, %v1704
  %v1706 = vsel %vm907, %v1680, 0
  %v1707 = vadd.s32 %v1699, %v1706
  %v1708 = vsel %vm907, %v1681, 0
  %v1709 = vadd.s32 %v1701, %v1708
  %v1710 = vadd.s32 %v1703, %v1705
  %v1711 = vadd.s32 %v1707, %v1709
  %v1712 = vadd.s32 %v1710, %v1711
  %v1713 = vand.u32 %v1712, 65535
  %v1714 = vshrl.u32 %v1712, 16
  %v1715 = vcvt.s32.f32 %v1713
  %v1716 = vcvt.s32.f32 %v1714
  %1717 = vadd.xlane.f32.xlu0 %v1715
  %v1718 = vpop.xlane.xlu0 %1717
  %1719 = vadd.xlane.f32.xlu0 %v1716
  %v1720 = vpop.xlane.xlu0 %1719
  %v1721 = vcvt.f32.s32 %v1718
  %v1722 = vcvt.f32.s32 %v1720
  %v1723 = vshll.u32 %v1722, 16
  %v1724 = vadd.s32 %v1723, %v1721
  %v1725 = vrot.slane %v1724, 4
  %v1726 = vadd.s32 %v1724, %v1725
  %v1727 = vrot.slane %v1726, 2
  %v1728 = vadd.s32 %v1726, %v1727
  %v1729 = vrot.slane %v1728, 1
  %v1730 = vadd.s32 %v1728, %v1729
  %s1731 = vtos %v1730
  %p1732 = scmp.ge.s32.totalorder %s1731, 56
  %s1733 = scalar_select %p1732, %s1648, %s1647
  %s1734 = sor.u32 %s1733, 1048576
  %v1735 = vstv %s1734
  %vm1736 = vcmp.ge.s32.totalorder %v843, %v1735
  %vm1737 = vcmp.ge.s32.totalorder %v844, %v1735
  %vm1738 = vcmp.ge.s32.totalorder %v845, %v1735
  %vm1739 = vcmp.ge.s32.totalorder %v846, %v1735
  %vm1740 = vcmp.ge.s32.totalorder %v847, %v1735
  %vm1741 = vcmp.ge.s32.totalorder %v848, %v1735
  %vm1742 = vcmp.ge.s32.totalorder %v849, %v1735
  %vm1743 = vcmp.ge.s32.totalorder %v850, %v1735
  %vm1744 = vcmp.ge.s32.totalorder %v851, %v1735
  %vm1745 = vcmp.ge.s32.totalorder %v852, %v1735
  %vm1746 = vcmp.ge.s32.totalorder %v853, %v1735
  %vm1747 = vcmp.ge.s32.totalorder %v854, %v1735
  %vm1748 = vcmp.ge.s32.totalorder %v855, %v1735
  %vm1749 = vcmp.ge.s32.totalorder %v856, %v1735
  %vm1750 = vcmp.ge.s32.totalorder %v857, %v1735
  %vm1751 = vcmp.ge.s32.totalorder %v858, %v1735
  %v1752 = vsel %vm1736, 1, 0
  %v1753 = vsel %vm1737, 1, 0
  %v1754 = vsel %vm1738, 1, 0
  %v1755 = vsel %vm1739, 1, 0
  %v1756 = vsel %vm1740, 1, 0
  %v1757 = vsel %vm1741, 1, 0
  %v1758 = vsel %vm1742, 1, 0
  %v1759 = vsel %vm1743, 1, 0
  %v1760 = vsel %vm1744, 1, 0
  %v1761 = vsel %vm1745, 1, 0
  %v1762 = vsel %vm1746, 1, 0
  %v1763 = vsel %vm1747, 1, 0
  %v1764 = vsel %vm1748, 1, 0
  %v1765 = vsel %vm1749, 1, 0
  %v1766 = vsel %vm1750, 1, 0
  %v1767 = vsel %vm1751, 1, 0
  %v1768 = vsel %vm907, %v1752, 0
  %v1769 = vsel %vm907, %v1753, 0
  %v1770 = vsel %vm907, %v1754, 0
  %v1771 = vsel %vm907, %v1755, 0
  %v1772 = vsel %vm907, %v1756, 0
  %v1773 = vadd.s32 %v1768, %v1772
  %v1774 = vsel %vm907, %v1757, 0
  %v1775 = vadd.s32 %v1769, %v1774
  %v1776 = vsel %vm907, %v1758, 0
  %v1777 = vadd.s32 %v1770, %v1776
  %v1778 = vsel %vm907, %v1759, 0
  %v1779 = vadd.s32 %v1771, %v1778
  %v1780 = vsel %vm907, %v1760, 0
  %v1781 = vadd.s32 %v1773, %v1780
  %v1782 = vsel %vm907, %v1761, 0
  %v1783 = vadd.s32 %v1775, %v1782
  %v1784 = vsel %vm907, %v1762, 0
  %v1785 = vadd.s32 %v1777, %v1784
  %v1786 = vsel %vm907, %v1763, 0
  %v1787 = vadd.s32 %v1779, %v1786
  %v1788 = vsel %vm907, %v1764, 0
  %v1789 = vadd.s32 %v1781, %v1788
  %v1790 = vsel %vm907, %v1765, 0
  %v1791 = vadd.s32 %v1783, %v1790
  %v1792 = vsel %vm907, %v1766, 0
  %v1793 = vadd.s32 %v1785, %v1792
  %v1794 = vsel %vm907, %v1767, 0
  %v1795 = vadd.s32 %v1787, %v1794
  %v1796 = vadd.s32 %v1789, %v1791
  %v1797 = vadd.s32 %v1793, %v1795
  %v1798 = vadd.s32 %v1796, %v1797
  %v1799 = vand.u32 %v1798, 65535
  %v1800 = vshrl.u32 %v1798, 16
  %v1801 = vcvt.s32.f32 %v1799
  %v1802 = vcvt.s32.f32 %v1800
  %1803 = vadd.xlane.f32.xlu0 %v1801
  %v1804 = vpop.xlane.xlu0 %1803
  %1805 = vadd.xlane.f32.xlu0 %v1802
  %v1806 = vpop.xlane.xlu0 %1805
  %v1807 = vcvt.f32.s32 %v1804
  %v1808 = vcvt.f32.s32 %v1806
  %v1809 = vshll.u32 %v1808, 16
  %v1810 = vadd.s32 %v1809, %v1807
  %v1811 = vrot.slane %v1810, 4
  %v1812 = vadd.s32 %v1810, %v1811
  %v1813 = vrot.slane %v1812, 2
  %v1814 = vadd.s32 %v1812, %v1813
  %v1815 = vrot.slane %v1814, 1
  %v1816 = vadd.s32 %v1814, %v1815
  %s1817 = vtos %v1816
  %p1818 = scmp.ge.s32.totalorder %s1817, 56
  %s1819 = scalar_select %p1818, %s1734, %s1733
  %s1820 = sor.u32 %s1819, 524288
  %v1821 = vstv %s1820
  %vm1822 = vcmp.ge.s32.totalorder %v843, %v1821
  %vm1823 = vcmp.ge.s32.totalorder %v844, %v1821
  %vm1824 = vcmp.ge.s32.totalorder %v845, %v1821
  %vm1825 = vcmp.ge.s32.totalorder %v846, %v1821
  %vm1826 = vcmp.ge.s32.totalorder %v847, %v1821
  %vm1827 = vcmp.ge.s32.totalorder %v848, %v1821
  %vm1828 = vcmp.ge.s32.totalorder %v849, %v1821
  %vm1829 = vcmp.ge.s32.totalorder %v850, %v1821
  %vm1830 = vcmp.ge.s32.totalorder %v851, %v1821
  %vm1831 = vcmp.ge.s32.totalorder %v852, %v1821
  %vm1832 = vcmp.ge.s32.totalorder %v853, %v1821
  %vm1833 = vcmp.ge.s32.totalorder %v854, %v1821
  %vm1834 = vcmp.ge.s32.totalorder %v855, %v1821
  %vm1835 = vcmp.ge.s32.totalorder %v856, %v1821
  %vm1836 = vcmp.ge.s32.totalorder %v857, %v1821
  %vm1837 = vcmp.ge.s32.totalorder %v858, %v1821
  %v1838 = vsel %vm1822, 1, 0
  %v1839 = vsel %vm1823, 1, 0
  %v1840 = vsel %vm1824, 1, 0
  %v1841 = vsel %vm1825, 1, 0
  %v1842 = vsel %vm1826, 1, 0
  %v1843 = vsel %vm1827, 1, 0
  %v1844 = vsel %vm1828, 1, 0
  %v1845 = vsel %vm1829, 1, 0
  %v1846 = vsel %vm1830, 1, 0
  %v1847 = vsel %vm1831, 1, 0
  %v1848 = vsel %vm1832, 1, 0
  %v1849 = vsel %vm1833, 1, 0
  %v1850 = vsel %vm1834, 1, 0
  %v1851 = vsel %vm1835, 1, 0
  %v1852 = vsel %vm1836, 1, 0
  %v1853 = vsel %vm1837, 1, 0
  %v1854 = vsel %vm907, %v1838, 0
  %v1855 = vsel %vm907, %v1839, 0
  %v1856 = vsel %vm907, %v1840, 0
  %v1857 = vsel %vm907, %v1841, 0
  %v1858 = vsel %vm907, %v1842, 0
  %v1859 = vadd.s32 %v1854, %v1858
  %v1860 = vsel %vm907, %v1843, 0
  %v1861 = vadd.s32 %v1855, %v1860
  %v1862 = vsel %vm907, %v1844, 0
  %v1863 = vadd.s32 %v1856, %v1862
  %v1864 = vsel %vm907, %v1845, 0
  %v1865 = vadd.s32 %v1857, %v1864
  %v1866 = vsel %vm907, %v1846, 0
  %v1867 = vadd.s32 %v1859, %v1866
  %v1868 = vsel %vm907, %v1847, 0
  %v1869 = vadd.s32 %v1861, %v1868
  %v1870 = vsel %vm907, %v1848, 0
  %v1871 = vadd.s32 %v1863, %v1870
  %v1872 = vsel %vm907, %v1849, 0
  %v1873 = vadd.s32 %v1865, %v1872
  %v1874 = vsel %vm907, %v1850, 0
  %v1875 = vadd.s32 %v1867, %v1874
  %v1876 = vsel %vm907, %v1851, 0
  %v1877 = vadd.s32 %v1869, %v1876
  %v1878 = vsel %vm907, %v1852, 0
  %v1879 = vadd.s32 %v1871, %v1878
  %v1880 = vsel %vm907, %v1853, 0
  %v1881 = vadd.s32 %v1873, %v1880
  %v1882 = vadd.s32 %v1875, %v1877
  %v1883 = vadd.s32 %v1879, %v1881
  %v1884 = vadd.s32 %v1882, %v1883
  %v1885 = vand.u32 %v1884, 65535
  %v1886 = vshrl.u32 %v1884, 16
  %v1887 = vcvt.s32.f32 %v1885
  %v1888 = vcvt.s32.f32 %v1886
  %1889 = vadd.xlane.f32.xlu0 %v1887
  %v1890 = vpop.xlane.xlu0 %1889
  %1891 = vadd.xlane.f32.xlu0 %v1888
  %v1892 = vpop.xlane.xlu0 %1891
  %v1893 = vcvt.f32.s32 %v1890
  %v1894 = vcvt.f32.s32 %v1892
  %v1895 = vshll.u32 %v1894, 16
  %v1896 = vadd.s32 %v1895, %v1893
  %v1897 = vrot.slane %v1896, 4
  %v1898 = vadd.s32 %v1896, %v1897
  %v1899 = vrot.slane %v1898, 2
  %v1900 = vadd.s32 %v1898, %v1899
  %v1901 = vrot.slane %v1900, 1
  %v1902 = vadd.s32 %v1900, %v1901
  %s1903 = vtos %v1902
  %p1904 = scmp.ge.s32.totalorder %s1903, 56
  %s1905 = scalar_select %p1904, %s1820, %s1819
  %s1906 = sor.u32 %s1905, 262144
  %v1907 = vstv %s1906
  %vm1908 = vcmp.ge.s32.totalorder %v843, %v1907
  %vm1909 = vcmp.ge.s32.totalorder %v844, %v1907
  %vm1910 = vcmp.ge.s32.totalorder %v845, %v1907
  %vm1911 = vcmp.ge.s32.totalorder %v846, %v1907
  %vm1912 = vcmp.ge.s32.totalorder %v847, %v1907
  %vm1913 = vcmp.ge.s32.totalorder %v848, %v1907
  %vm1914 = vcmp.ge.s32.totalorder %v849, %v1907
  %vm1915 = vcmp.ge.s32.totalorder %v850, %v1907
  %vm1916 = vcmp.ge.s32.totalorder %v851, %v1907
  %vm1917 = vcmp.ge.s32.totalorder %v852, %v1907
  %vm1918 = vcmp.ge.s32.totalorder %v853, %v1907
  %vm1919 = vcmp.ge.s32.totalorder %v854, %v1907
  %vm1920 = vcmp.ge.s32.totalorder %v855, %v1907
  %vm1921 = vcmp.ge.s32.totalorder %v856, %v1907
  %vm1922 = vcmp.ge.s32.totalorder %v857, %v1907
  %vm1923 = vcmp.ge.s32.totalorder %v858, %v1907
  %v1924 = vsel %vm1908, 1, 0
  %v1925 = vsel %vm1909, 1, 0
  %v1926 = vsel %vm1910, 1, 0
  %v1927 = vsel %vm1911, 1, 0
  %v1928 = vsel %vm1912, 1, 0
  %v1929 = vsel %vm1913, 1, 0
  %v1930 = vsel %vm1914, 1, 0
  %v1931 = vsel %vm1915, 1, 0
  %v1932 = vsel %vm1916, 1, 0
  %v1933 = vsel %vm1917, 1, 0
  %v1934 = vsel %vm1918, 1, 0
  %v1935 = vsel %vm1919, 1, 0
  %v1936 = vsel %vm1920, 1, 0
  %v1937 = vsel %vm1921, 1, 0
  %v1938 = vsel %vm1922, 1, 0
  %v1939 = vsel %vm1923, 1, 0
  %v1940 = vsel %vm907, %v1924, 0
  %v1941 = vsel %vm907, %v1925, 0
  %v1942 = vsel %vm907, %v1926, 0
  %v1943 = vsel %vm907, %v1927, 0
  %v1944 = vsel %vm907, %v1928, 0
  %v1945 = vadd.s32 %v1940, %v1944
  %v1946 = vsel %vm907, %v1929, 0
  %v1947 = vadd.s32 %v1941, %v1946
  %v1948 = vsel %vm907, %v1930, 0
  %v1949 = vadd.s32 %v1942, %v1948
  %v1950 = vsel %vm907, %v1931, 0
  %v1951 = vadd.s32 %v1943, %v1950
  %v1952 = vsel %vm907, %v1932, 0
  %v1953 = vadd.s32 %v1945, %v1952
  %v1954 = vsel %vm907, %v1933, 0
  %v1955 = vadd.s32 %v1947, %v1954
  %v1956 = vsel %vm907, %v1934, 0
  %v1957 = vadd.s32 %v1949, %v1956
  %v1958 = vsel %vm907, %v1935, 0
  %v1959 = vadd.s32 %v1951, %v1958
  %v1960 = vsel %vm907, %v1936, 0
  %v1961 = vadd.s32 %v1953, %v1960
  %v1962 = vsel %vm907, %v1937, 0
  %v1963 = vadd.s32 %v1955, %v1962
  %v1964 = vsel %vm907, %v1938, 0
  %v1965 = vadd.s32 %v1957, %v1964
  %v1966 = vsel %vm907, %v1939, 0
  %v1967 = vadd.s32 %v1959, %v1966
  %v1968 = vadd.s32 %v1961, %v1963
  %v1969 = vadd.s32 %v1965, %v1967
  %v1970 = vadd.s32 %v1968, %v1969
  %v1971 = vand.u32 %v1970, 65535
  %v1972 = vshrl.u32 %v1970, 16
  %v1973 = vcvt.s32.f32 %v1971
  %v1974 = vcvt.s32.f32 %v1972
  %1975 = vadd.xlane.f32.xlu0 %v1973
  %v1976 = vpop.xlane.xlu0 %1975
  %1977 = vadd.xlane.f32.xlu0 %v1974
  %v1978 = vpop.xlane.xlu0 %1977
  %v1979 = vcvt.f32.s32 %v1976
  %v1980 = vcvt.f32.s32 %v1978
  %v1981 = vshll.u32 %v1980, 16
  %v1982 = vadd.s32 %v1981, %v1979
  %v1983 = vrot.slane %v1982, 4
  %v1984 = vadd.s32 %v1982, %v1983
  %v1985 = vrot.slane %v1984, 2
  %v1986 = vadd.s32 %v1984, %v1985
  %v1987 = vrot.slane %v1986, 1
  %v1988 = vadd.s32 %v1986, %v1987
  %s1989 = vtos %v1988
  %p1990 = scmp.ge.s32.totalorder %s1989, 56
  %s1991 = scalar_select %p1990, %s1906, %s1905
  %s1992 = sor.u32 %s1991, 131072
  %v1993 = vstv %s1992
  %vm1994 = vcmp.ge.s32.totalorder %v843, %v1993
  %vm1995 = vcmp.ge.s32.totalorder %v844, %v1993
  %vm1996 = vcmp.ge.s32.totalorder %v845, %v1993
  %vm1997 = vcmp.ge.s32.totalorder %v846, %v1993
  %vm1998 = vcmp.ge.s32.totalorder %v847, %v1993
  %vm1999 = vcmp.ge.s32.totalorder %v848, %v1993
  %vm2000 = vcmp.ge.s32.totalorder %v849, %v1993
  %vm2001 = vcmp.ge.s32.totalorder %v850, %v1993
  %vm2002 = vcmp.ge.s32.totalorder %v851, %v1993
  %vm2003 = vcmp.ge.s32.totalorder %v852, %v1993
  %vm2004 = vcmp.ge.s32.totalorder %v853, %v1993
  %vm2005 = vcmp.ge.s32.totalorder %v854, %v1993
  %vm2006 = vcmp.ge.s32.totalorder %v855, %v1993
  %vm2007 = vcmp.ge.s32.totalorder %v856, %v1993
  %vm2008 = vcmp.ge.s32.totalorder %v857, %v1993
  %vm2009 = vcmp.ge.s32.totalorder %v858, %v1993
  %v2010 = vsel %vm1994, 1, 0
  %v2011 = vsel %vm1995, 1, 0
  %v2012 = vsel %vm1996, 1, 0
  %v2013 = vsel %vm1997, 1, 0
  %v2014 = vsel %vm1998, 1, 0
  %v2015 = vsel %vm1999, 1, 0
  %v2016 = vsel %vm2000, 1, 0
  %v2017 = vsel %vm2001, 1, 0
  %v2018 = vsel %vm2002, 1, 0
  %v2019 = vsel %vm2003, 1, 0
  %v2020 = vsel %vm2004, 1, 0
  %v2021 = vsel %vm2005, 1, 0
  %v2022 = vsel %vm2006, 1, 0
  %v2023 = vsel %vm2007, 1, 0
  %v2024 = vsel %vm2008, 1, 0
  %v2025 = vsel %vm2009, 1, 0
  %v2026 = vsel %vm907, %v2010, 0
  %v2027 = vsel %vm907, %v2011, 0
  %v2028 = vsel %vm907, %v2012, 0
  %v2029 = vsel %vm907, %v2013, 0
  %v2030 = vsel %vm907, %v2014, 0
  %v2031 = vadd.s32 %v2026, %v2030
  %v2032 = vsel %vm907, %v2015, 0
  %v2033 = vadd.s32 %v2027, %v2032
  %v2034 = vsel %vm907, %v2016, 0
  %v2035 = vadd.s32 %v2028, %v2034
  %v2036 = vsel %vm907, %v2017, 0
  %v2037 = vadd.s32 %v2029, %v2036
  %v2038 = vsel %vm907, %v2018, 0
  %v2039 = vadd.s32 %v2031, %v2038
  %v2040 = vsel %vm907, %v2019, 0
  %v2041 = vadd.s32 %v2033, %v2040
  %v2042 = vsel %vm907, %v2020, 0
  %v2043 = vadd.s32 %v2035, %v2042
  %v2044 = vsel %vm907, %v2021, 0
  %v2045 = vadd.s32 %v2037, %v2044
  %v2046 = vsel %vm907, %v2022, 0
  %v2047 = vadd.s32 %v2039, %v2046
  %v2048 = vsel %vm907, %v2023, 0
  %v2049 = vadd.s32 %v2041, %v2048
  %v2050 = vsel %vm907, %v2024, 0
  %v2051 = vadd.s32 %v2043, %v2050
  %v2052 = vsel %vm907, %v2025, 0
  %v2053 = vadd.s32 %v2045, %v2052
  %v2054 = vadd.s32 %v2047, %v2049
  %v2055 = vadd.s32 %v2051, %v2053
  %v2056 = vadd.s32 %v2054, %v2055
  %v2057 = vand.u32 %v2056, 65535
  %v2058 = vshrl.u32 %v2056, 16
  %v2059 = vcvt.s32.f32 %v2057
  %v2060 = vcvt.s32.f32 %v2058
  %2061 = vadd.xlane.f32.xlu0 %v2059
  %v2062 = vpop.xlane.xlu0 %2061
  %2063 = vadd.xlane.f32.xlu0 %v2060
  %v2064 = vpop.xlane.xlu0 %2063
  %v2065 = vcvt.f32.s32 %v2062
  %v2066 = vcvt.f32.s32 %v2064
  %v2067 = vshll.u32 %v2066, 16
  %v2068 = vadd.s32 %v2067, %v2065
  %v2069 = vrot.slane %v2068, 4
  %v2070 = vadd.s32 %v2068, %v2069
  %v2071 = vrot.slane %v2070, 2
  %v2072 = vadd.s32 %v2070, %v2071
  %v2073 = vrot.slane %v2072, 1
  %v2074 = vadd.s32 %v2072, %v2073
  %s2075 = vtos %v2074
  %p2076 = scmp.ge.s32.totalorder %s2075, 56
  %s2077 = scalar_select %p2076, %s1992, %s1991
  %s2078 = sor.u32 %s2077, 65536
  %v2079 = vstv %s2078
  %vm2080 = vcmp.ge.s32.totalorder %v843, %v2079
  %vm2081 = vcmp.ge.s32.totalorder %v844, %v2079
  %vm2082 = vcmp.ge.s32.totalorder %v845, %v2079
  %vm2083 = vcmp.ge.s32.totalorder %v846, %v2079
  %vm2084 = vcmp.ge.s32.totalorder %v847, %v2079
  %vm2085 = vcmp.ge.s32.totalorder %v848, %v2079
  %vm2086 = vcmp.ge.s32.totalorder %v849, %v2079
  %vm2087 = vcmp.ge.s32.totalorder %v850, %v2079
  %vm2088 = vcmp.ge.s32.totalorder %v851, %v2079
  %vm2089 = vcmp.ge.s32.totalorder %v852, %v2079
  %vm2090 = vcmp.ge.s32.totalorder %v853, %v2079
  %vm2091 = vcmp.ge.s32.totalorder %v854, %v2079
  %vm2092 = vcmp.ge.s32.totalorder %v855, %v2079
  %vm2093 = vcmp.ge.s32.totalorder %v856, %v2079
  %vm2094 = vcmp.ge.s32.totalorder %v857, %v2079
  %vm2095 = vcmp.ge.s32.totalorder %v858, %v2079
  %v2096 = vsel %vm2080, 1, 0
  %v2097 = vsel %vm2081, 1, 0
  %v2098 = vsel %vm2082, 1, 0
  %v2099 = vsel %vm2083, 1, 0
  %v2100 = vsel %vm2084, 1, 0
  %v2101 = vsel %vm2085, 1, 0
  %v2102 = vsel %vm2086, 1, 0
  %v2103 = vsel %vm2087, 1, 0
  %v2104 = vsel %vm2088, 1, 0
  %v2105 = vsel %vm2089, 1, 0
  %v2106 = vsel %vm2090, 1, 0
  %v2107 = vsel %vm2091, 1, 0
  %v2108 = vsel %vm2092, 1, 0
  %v2109 = vsel %vm2093, 1, 0
  %v2110 = vsel %vm2094, 1, 0
  %v2111 = vsel %vm2095, 1, 0
  %v2112 = vsel %vm907, %v2096, 0
  %v2113 = vsel %vm907, %v2097, 0
  %v2114 = vsel %vm907, %v2098, 0
  %v2115 = vsel %vm907, %v2099, 0
  %v2116 = vsel %vm907, %v2100, 0
  %v2117 = vadd.s32 %v2112, %v2116
  %v2118 = vsel %vm907, %v2101, 0
  %v2119 = vadd.s32 %v2113, %v2118
  %v2120 = vsel %vm907, %v2102, 0
  %v2121 = vadd.s32 %v2114, %v2120
  %v2122 = vsel %vm907, %v2103, 0
  %v2123 = vadd.s32 %v2115, %v2122
  %v2124 = vsel %vm907, %v2104, 0
  %v2125 = vadd.s32 %v2117, %v2124
  %v2126 = vsel %vm907, %v2105, 0
  %v2127 = vadd.s32 %v2119, %v2126
  %v2128 = vsel %vm907, %v2106, 0
  %v2129 = vadd.s32 %v2121, %v2128
  %v2130 = vsel %vm907, %v2107, 0
  %v2131 = vadd.s32 %v2123, %v2130
  %v2132 = vsel %vm907, %v2108, 0
  %v2133 = vadd.s32 %v2125, %v2132
  %v2134 = vsel %vm907, %v2109, 0
  %v2135 = vadd.s32 %v2127, %v2134
  %v2136 = vsel %vm907, %v2110, 0
  %v2137 = vadd.s32 %v2129, %v2136
  %v2138 = vsel %vm907, %v2111, 0
  %v2139 = vadd.s32 %v2131, %v2138
  %v2140 = vadd.s32 %v2133, %v2135
  %v2141 = vadd.s32 %v2137, %v2139
  %v2142 = vadd.s32 %v2140, %v2141
  %v2143 = vand.u32 %v2142, 65535
  %v2144 = vshrl.u32 %v2142, 16
  %v2145 = vcvt.s32.f32 %v2143
  %v2146 = vcvt.s32.f32 %v2144
  %2147 = vadd.xlane.f32.xlu0 %v2145
  %v2148 = vpop.xlane.xlu0 %2147
  %2149 = vadd.xlane.f32.xlu0 %v2146
  %v2150 = vpop.xlane.xlu0 %2149
  %v2151 = vcvt.f32.s32 %v2148
  %v2152 = vcvt.f32.s32 %v2150
  %v2153 = vshll.u32 %v2152, 16
  %v2154 = vadd.s32 %v2153, %v2151
  %v2155 = vrot.slane %v2154, 4
  %v2156 = vadd.s32 %v2154, %v2155
  %v2157 = vrot.slane %v2156, 2
  %v2158 = vadd.s32 %v2156, %v2157
  %v2159 = vrot.slane %v2158, 1
  %v2160 = vadd.s32 %v2158, %v2159
  %s2161 = vtos %v2160
  %p2162 = scmp.ge.s32.totalorder %s2161, 56
  %s2163 = scalar_select %p2162, %s2078, %s2077
  %s2164 = sor.u32 %s2163, 32768
  %v2165 = vstv %s2164
  %vm2166 = vcmp.ge.s32.totalorder %v843, %v2165
  %vm2167 = vcmp.ge.s32.totalorder %v844, %v2165
  %vm2168 = vcmp.ge.s32.totalorder %v845, %v2165
  %vm2169 = vcmp.ge.s32.totalorder %v846, %v2165
  %vm2170 = vcmp.ge.s32.totalorder %v847, %v2165
  %vm2171 = vcmp.ge.s32.totalorder %v848, %v2165
  %vm2172 = vcmp.ge.s32.totalorder %v849, %v2165
  %vm2173 = vcmp.ge.s32.totalorder %v850, %v2165
  %vm2174 = vcmp.ge.s32.totalorder %v851, %v2165
  %vm2175 = vcmp.ge.s32.totalorder %v852, %v2165
  %vm2176 = vcmp.ge.s32.totalorder %v853, %v2165
  %vm2177 = vcmp.ge.s32.totalorder %v854, %v2165
  %vm2178 = vcmp.ge.s32.totalorder %v855, %v2165
  %vm2179 = vcmp.ge.s32.totalorder %v856, %v2165
  %vm2180 = vcmp.ge.s32.totalorder %v857, %v2165
  %vm2181 = vcmp.ge.s32.totalorder %v858, %v2165
  %v2182 = vsel %vm2166, 1, 0
  %v2183 = vsel %vm2167, 1, 0
  %v2184 = vsel %vm2168, 1, 0
  %v2185 = vsel %vm2169, 1, 0
  %v2186 = vsel %vm2170, 1, 0
  %v2187 = vsel %vm2171, 1, 0
  %v2188 = vsel %vm2172, 1, 0
  %v2189 = vsel %vm2173, 1, 0
  %v2190 = vsel %vm2174, 1, 0
  %v2191 = vsel %vm2175, 1, 0
  %v2192 = vsel %vm2176, 1, 0
  %v2193 = vsel %vm2177, 1, 0
  %v2194 = vsel %vm2178, 1, 0
  %v2195 = vsel %vm2179, 1, 0
  %v2196 = vsel %vm2180, 1, 0
  %v2197 = vsel %vm2181, 1, 0
  %v2198 = vsel %vm907, %v2182, 0
  %v2199 = vsel %vm907, %v2183, 0
  %v2200 = vsel %vm907, %v2184, 0
  %v2201 = vsel %vm907, %v2185, 0
  %v2202 = vsel %vm907, %v2186, 0
  %v2203 = vadd.s32 %v2198, %v2202
  %v2204 = vsel %vm907, %v2187, 0
  %v2205 = vadd.s32 %v2199, %v2204
  %v2206 = vsel %vm907, %v2188, 0
  %v2207 = vadd.s32 %v2200, %v2206
  %v2208 = vsel %vm907, %v2189, 0
  %v2209 = vadd.s32 %v2201, %v2208
  %v2210 = vsel %vm907, %v2190, 0
  %v2211 = vadd.s32 %v2203, %v2210
  %v2212 = vsel %vm907, %v2191, 0
  %v2213 = vadd.s32 %v2205, %v2212
  %v2214 = vsel %vm907, %v2192, 0
  %v2215 = vadd.s32 %v2207, %v2214
  %v2216 = vsel %vm907, %v2193, 0
  %v2217 = vadd.s32 %v2209, %v2216
  %v2218 = vsel %vm907, %v2194, 0
  %v2219 = vadd.s32 %v2211, %v2218
  %v2220 = vsel %vm907, %v2195, 0
  %v2221 = vadd.s32 %v2213, %v2220
  %v2222 = vsel %vm907, %v2196, 0
  %v2223 = vadd.s32 %v2215, %v2222
  %v2224 = vsel %vm907, %v2197, 0
  %v2225 = vadd.s32 %v2217, %v2224
  %v2226 = vadd.s32 %v2219, %v2221
  %v2227 = vadd.s32 %v2223, %v2225
  %v2228 = vadd.s32 %v2226, %v2227
  %v2229 = vand.u32 %v2228, 65535
  %v2230 = vshrl.u32 %v2228, 16
  %v2231 = vcvt.s32.f32 %v2229
  %v2232 = vcvt.s32.f32 %v2230
  %2233 = vadd.xlane.f32.xlu0 %v2231
  %v2234 = vpop.xlane.xlu0 %2233
  %2235 = vadd.xlane.f32.xlu0 %v2232
  %v2236 = vpop.xlane.xlu0 %2235
  %v2237 = vcvt.f32.s32 %v2234
  %v2238 = vcvt.f32.s32 %v2236
  %v2239 = vshll.u32 %v2238, 16
  %v2240 = vadd.s32 %v2239, %v2237
  %v2241 = vrot.slane %v2240, 4
  %v2242 = vadd.s32 %v2240, %v2241
  %v2243 = vrot.slane %v2242, 2
  %v2244 = vadd.s32 %v2242, %v2243
  %v2245 = vrot.slane %v2244, 1
  %v2246 = vadd.s32 %v2244, %v2245
  %s2247 = vtos %v2246
  %p2248 = scmp.ge.s32.totalorder %s2247, 56
  %s2249 = scalar_select %p2248, %s2164, %s2163
  %s2250 = sor.u32 %s2249, 16384
  %v2251 = vstv %s2250
  %vm2252 = vcmp.ge.s32.totalorder %v843, %v2251
  %vm2253 = vcmp.ge.s32.totalorder %v844, %v2251
  %vm2254 = vcmp.ge.s32.totalorder %v845, %v2251
  %vm2255 = vcmp.ge.s32.totalorder %v846, %v2251
  %vm2256 = vcmp.ge.s32.totalorder %v847, %v2251
  %vm2257 = vcmp.ge.s32.totalorder %v848, %v2251
  %vm2258 = vcmp.ge.s32.totalorder %v849, %v2251
  %vm2259 = vcmp.ge.s32.totalorder %v850, %v2251
  %vm2260 = vcmp.ge.s32.totalorder %v851, %v2251
  %vm2261 = vcmp.ge.s32.totalorder %v852, %v2251
  %vm2262 = vcmp.ge.s32.totalorder %v853, %v2251
  %vm2263 = vcmp.ge.s32.totalorder %v854, %v2251
  %vm2264 = vcmp.ge.s32.totalorder %v855, %v2251
  %vm2265 = vcmp.ge.s32.totalorder %v856, %v2251
  %vm2266 = vcmp.ge.s32.totalorder %v857, %v2251
  %vm2267 = vcmp.ge.s32.totalorder %v858, %v2251
  %v2268 = vsel %vm2252, 1, 0
  %v2269 = vsel %vm2253, 1, 0
  %v2270 = vsel %vm2254, 1, 0
  %v2271 = vsel %vm2255, 1, 0
  %v2272 = vsel %vm2256, 1, 0
  %v2273 = vsel %vm2257, 1, 0
  %v2274 = vsel %vm2258, 1, 0
  %v2275 = vsel %vm2259, 1, 0
  %v2276 = vsel %vm2260, 1, 0
  %v2277 = vsel %vm2261, 1, 0
  %v2278 = vsel %vm2262, 1, 0
  %v2279 = vsel %vm2263, 1, 0
  %v2280 = vsel %vm2264, 1, 0
  %v2281 = vsel %vm2265, 1, 0
  %v2282 = vsel %vm2266, 1, 0
  %v2283 = vsel %vm2267, 1, 0
  %v2284 = vsel %vm907, %v2268, 0
  %v2285 = vsel %vm907, %v2269, 0
  %v2286 = vsel %vm907, %v2270, 0
  %v2287 = vsel %vm907, %v2271, 0
  %v2288 = vsel %vm907, %v2272, 0
  %v2289 = vadd.s32 %v2284, %v2288
  %v2290 = vsel %vm907, %v2273, 0
  %v2291 = vadd.s32 %v2285, %v2290
  %v2292 = vsel %vm907, %v2274, 0
  %v2293 = vadd.s32 %v2286, %v2292
  %v2294 = vsel %vm907, %v2275, 0
  %v2295 = vadd.s32 %v2287, %v2294
  %v2296 = vsel %vm907, %v2276, 0
  %v2297 = vadd.s32 %v2289, %v2296
  %v2298 = vsel %vm907, %v2277, 0
  %v2299 = vadd.s32 %v2291, %v2298
  %v2300 = vsel %vm907, %v2278, 0
  %v2301 = vadd.s32 %v2293, %v2300
  %v2302 = vsel %vm907, %v2279, 0
  %v2303 = vadd.s32 %v2295, %v2302
  %v2304 = vsel %vm907, %v2280, 0
  %v2305 = vadd.s32 %v2297, %v2304
  %v2306 = vsel %vm907, %v2281, 0
  %v2307 = vadd.s32 %v2299, %v2306
  %v2308 = vsel %vm907, %v2282, 0
  %v2309 = vadd.s32 %v2301, %v2308
  %v2310 = vsel %vm907, %v2283, 0
  %v2311 = vadd.s32 %v2303, %v2310
  %v2312 = vadd.s32 %v2305, %v2307
  %v2313 = vadd.s32 %v2309, %v2311
  %v2314 = vadd.s32 %v2312, %v2313
  %v2315 = vand.u32 %v2314, 65535
  %v2316 = vshrl.u32 %v2314, 16
  %v2317 = vcvt.s32.f32 %v2315
  %v2318 = vcvt.s32.f32 %v2316
  %2319 = vadd.xlane.f32.xlu0 %v2317
  %v2320 = vpop.xlane.xlu0 %2319
  %2321 = vadd.xlane.f32.xlu0 %v2318
  %v2322 = vpop.xlane.xlu0 %2321
  %v2323 = vcvt.f32.s32 %v2320
  %v2324 = vcvt.f32.s32 %v2322
  %v2325 = vshll.u32 %v2324, 16
  %v2326 = vadd.s32 %v2325, %v2323
  %v2327 = vrot.slane %v2326, 4
  %v2328 = vadd.s32 %v2326, %v2327
  %v2329 = vrot.slane %v2328, 2
  %v2330 = vadd.s32 %v2328, %v2329
  %v2331 = vrot.slane %v2330, 1
  %v2332 = vadd.s32 %v2330, %v2331
  %s2333 = vtos %v2332
  %p2334 = scmp.ge.s32.totalorder %s2333, 56
  %s2335 = scalar_select %p2334, %s2250, %s2249
  %s2336 = sor.u32 %s2335, 8192
  %v2337 = vstv %s2336
  %vm2338 = vcmp.ge.s32.totalorder %v843, %v2337
  %vm2339 = vcmp.ge.s32.totalorder %v844, %v2337
  %vm2340 = vcmp.ge.s32.totalorder %v845, %v2337
  %vm2341 = vcmp.ge.s32.totalorder %v846, %v2337
  %vm2342 = vcmp.ge.s32.totalorder %v847, %v2337
  %vm2343 = vcmp.ge.s32.totalorder %v848, %v2337
  %vm2344 = vcmp.ge.s32.totalorder %v849, %v2337
  %vm2345 = vcmp.ge.s32.totalorder %v850, %v2337
  %vm2346 = vcmp.ge.s32.totalorder %v851, %v2337
  %vm2347 = vcmp.ge.s32.totalorder %v852, %v2337
  %vm2348 = vcmp.ge.s32.totalorder %v853, %v2337
  %vm2349 = vcmp.ge.s32.totalorder %v854, %v2337
  %vm2350 = vcmp.ge.s32.totalorder %v855, %v2337
  %vm2351 = vcmp.ge.s32.totalorder %v856, %v2337
  %vm2352 = vcmp.ge.s32.totalorder %v857, %v2337
  %vm2353 = vcmp.ge.s32.totalorder %v858, %v2337
  %v2354 = vsel %vm2338, 1, 0
  %v2355 = vsel %vm2339, 1, 0
  %v2356 = vsel %vm2340, 1, 0
  %v2357 = vsel %vm2341, 1, 0
  %v2358 = vsel %vm2342, 1, 0
  %v2359 = vsel %vm2343, 1, 0
  %v2360 = vsel %vm2344, 1, 0
  %v2361 = vsel %vm2345, 1, 0
  %v2362 = vsel %vm2346, 1, 0
  %v2363 = vsel %vm2347, 1, 0
  %v2364 = vsel %vm2348, 1, 0
  %v2365 = vsel %vm2349, 1, 0
  %v2366 = vsel %vm2350, 1, 0
  %v2367 = vsel %vm2351, 1, 0
  %v2368 = vsel %vm2352, 1, 0
  %v2369 = vsel %vm2353, 1, 0
  %v2370 = vsel %vm907, %v2354, 0
  %v2371 = vsel %vm907, %v2355, 0
  %v2372 = vsel %vm907, %v2356, 0
  %v2373 = vsel %vm907, %v2357, 0
  %v2374 = vsel %vm907, %v2358, 0
  %v2375 = vadd.s32 %v2370, %v2374
  %v2376 = vsel %vm907, %v2359, 0
  %v2377 = vadd.s32 %v2371, %v2376
  %v2378 = vsel %vm907, %v2360, 0
  %v2379 = vadd.s32 %v2372, %v2378
  %v2380 = vsel %vm907, %v2361, 0
  %v2381 = vadd.s32 %v2373, %v2380
  %v2382 = vsel %vm907, %v2362, 0
  %v2383 = vadd.s32 %v2375, %v2382
  %v2384 = vsel %vm907, %v2363, 0
  %v2385 = vadd.s32 %v2377, %v2384
  %v2386 = vsel %vm907, %v2364, 0
  %v2387 = vadd.s32 %v2379, %v2386
  %v2388 = vsel %vm907, %v2365, 0
  %v2389 = vadd.s32 %v2381, %v2388
  %v2390 = vsel %vm907, %v2366, 0
  %v2391 = vadd.s32 %v2383, %v2390
  %v2392 = vsel %vm907, %v2367, 0
  %v2393 = vadd.s32 %v2385, %v2392
  %v2394 = vsel %vm907, %v2368, 0
  %v2395 = vadd.s32 %v2387, %v2394
  %v2396 = vsel %vm907, %v2369, 0
  %v2397 = vadd.s32 %v2389, %v2396
  %v2398 = vadd.s32 %v2391, %v2393
  %v2399 = vadd.s32 %v2395, %v2397
  %v2400 = vadd.s32 %v2398, %v2399
  %v2401 = vand.u32 %v2400, 65535
  %v2402 = vshrl.u32 %v2400, 16
  %v2403 = vcvt.s32.f32 %v2401
  %v2404 = vcvt.s32.f32 %v2402
  %2405 = vadd.xlane.f32.xlu0 %v2403
  %v2406 = vpop.xlane.xlu0 %2405
  %2407 = vadd.xlane.f32.xlu0 %v2404
  %v2408 = vpop.xlane.xlu0 %2407
  %v2409 = vcvt.f32.s32 %v2406
  %v2410 = vcvt.f32.s32 %v2408
  %v2411 = vshll.u32 %v2410, 16
  %v2412 = vadd.s32 %v2411, %v2409
  %v2413 = vrot.slane %v2412, 4
  %v2414 = vadd.s32 %v2412, %v2413
  %v2415 = vrot.slane %v2414, 2
  %v2416 = vadd.s32 %v2414, %v2415
  %v2417 = vrot.slane %v2416, 1
  %v2418 = vadd.s32 %v2416, %v2417
  %s2419 = vtos %v2418
  %p2420 = scmp.ge.s32.totalorder %s2419, 56
  %s2421 = scalar_select %p2420, %s2336, %s2335
  %s2422 = sor.u32 %s2421, 4096
  %v2423 = vstv %s2422
  %vm2424 = vcmp.ge.s32.totalorder %v843, %v2423
  %vm2425 = vcmp.ge.s32.totalorder %v844, %v2423
  %vm2426 = vcmp.ge.s32.totalorder %v845, %v2423
  %vm2427 = vcmp.ge.s32.totalorder %v846, %v2423
  %vm2428 = vcmp.ge.s32.totalorder %v847, %v2423
  %vm2429 = vcmp.ge.s32.totalorder %v848, %v2423
  %vm2430 = vcmp.ge.s32.totalorder %v849, %v2423
  %vm2431 = vcmp.ge.s32.totalorder %v850, %v2423
  %vm2432 = vcmp.ge.s32.totalorder %v851, %v2423
  %vm2433 = vcmp.ge.s32.totalorder %v852, %v2423
  %vm2434 = vcmp.ge.s32.totalorder %v853, %v2423
  %vm2435 = vcmp.ge.s32.totalorder %v854, %v2423
  %vm2436 = vcmp.ge.s32.totalorder %v855, %v2423
  %vm2437 = vcmp.ge.s32.totalorder %v856, %v2423
  %vm2438 = vcmp.ge.s32.totalorder %v857, %v2423
  %vm2439 = vcmp.ge.s32.totalorder %v858, %v2423
  %v2440 = vsel %vm2424, 1, 0
  %v2441 = vsel %vm2425, 1, 0
  %v2442 = vsel %vm2426, 1, 0
  %v2443 = vsel %vm2427, 1, 0
  %v2444 = vsel %vm2428, 1, 0
  %v2445 = vsel %vm2429, 1, 0
  %v2446 = vsel %vm2430, 1, 0
  %v2447 = vsel %vm2431, 1, 0
  %v2448 = vsel %vm2432, 1, 0
  %v2449 = vsel %vm2433, 1, 0
  %v2450 = vsel %vm2434, 1, 0
  %v2451 = vsel %vm2435, 1, 0
  %v2452 = vsel %vm2436, 1, 0
  %v2453 = vsel %vm2437, 1, 0
  %v2454 = vsel %vm2438, 1, 0
  %v2455 = vsel %vm2439, 1, 0
  %v2456 = vsel %vm907, %v2440, 0
  %v2457 = vsel %vm907, %v2441, 0
  %v2458 = vsel %vm907, %v2442, 0
  %v2459 = vsel %vm907, %v2443, 0
  %v2460 = vsel %vm907, %v2444, 0
  %v2461 = vadd.s32 %v2456, %v2460
  %v2462 = vsel %vm907, %v2445, 0
  %v2463 = vadd.s32 %v2457, %v2462
  %v2464 = vsel %vm907, %v2446, 0
  %v2465 = vadd.s32 %v2458, %v2464
  %v2466 = vsel %vm907, %v2447, 0
  %v2467 = vadd.s32 %v2459, %v2466
  %v2468 = vsel %vm907, %v2448, 0
  %v2469 = vadd.s32 %v2461, %v2468
  %v2470 = vsel %vm907, %v2449, 0
  %v2471 = vadd.s32 %v2463, %v2470
  %v2472 = vsel %vm907, %v2450, 0
  %v2473 = vadd.s32 %v2465, %v2472
  %v2474 = vsel %vm907, %v2451, 0
  %v2475 = vadd.s32 %v2467, %v2474
  %v2476 = vsel %vm907, %v2452, 0
  %v2477 = vadd.s32 %v2469, %v2476
  %v2478 = vsel %vm907, %v2453, 0
  %v2479 = vadd.s32 %v2471, %v2478
  %v2480 = vsel %vm907, %v2454, 0
  %v2481 = vadd.s32 %v2473, %v2480
  %v2482 = vsel %vm907, %v2455, 0
  %v2483 = vadd.s32 %v2475, %v2482
  %v2484 = vadd.s32 %v2477, %v2479
  %v2485 = vadd.s32 %v2481, %v2483
  %v2486 = vadd.s32 %v2484, %v2485
  %v2487 = vand.u32 %v2486, 65535
  %v2488 = vshrl.u32 %v2486, 16
  %v2489 = vcvt.s32.f32 %v2487
  %v2490 = vcvt.s32.f32 %v2488
  %2491 = vadd.xlane.f32.xlu0 %v2489
  %v2492 = vpop.xlane.xlu0 %2491
  %2493 = vadd.xlane.f32.xlu0 %v2490
  %v2494 = vpop.xlane.xlu0 %2493
  %v2495 = vcvt.f32.s32 %v2492
  %v2496 = vcvt.f32.s32 %v2494
  %v2497 = vshll.u32 %v2496, 16
  %v2498 = vadd.s32 %v2497, %v2495
  %v2499 = vrot.slane %v2498, 4
  %v2500 = vadd.s32 %v2498, %v2499
  %v2501 = vrot.slane %v2500, 2
  %v2502 = vadd.s32 %v2500, %v2501
  %v2503 = vrot.slane %v2502, 1
  %v2504 = vadd.s32 %v2502, %v2503
  %s2505 = vtos %v2504
  %p2506 = scmp.ge.s32.totalorder %s2505, 56
  %s2507 = scalar_select %p2506, %s2422, %s2421
  %s2508 = sor.u32 %s2507, 2048
  %v2509 = vstv %s2508
  %vm2510 = vcmp.ge.s32.totalorder %v843, %v2509
  %vm2511 = vcmp.ge.s32.totalorder %v844, %v2509
  %vm2512 = vcmp.ge.s32.totalorder %v845, %v2509
  %vm2513 = vcmp.ge.s32.totalorder %v846, %v2509
  %vm2514 = vcmp.ge.s32.totalorder %v847, %v2509
  %vm2515 = vcmp.ge.s32.totalorder %v848, %v2509
  %vm2516 = vcmp.ge.s32.totalorder %v849, %v2509
  %vm2517 = vcmp.ge.s32.totalorder %v850, %v2509
  %vm2518 = vcmp.ge.s32.totalorder %v851, %v2509
  %vm2519 = vcmp.ge.s32.totalorder %v852, %v2509
  %vm2520 = vcmp.ge.s32.totalorder %v853, %v2509
  %vm2521 = vcmp.ge.s32.totalorder %v854, %v2509
  %vm2522 = vcmp.ge.s32.totalorder %v855, %v2509
  %vm2523 = vcmp.ge.s32.totalorder %v856, %v2509
  %vm2524 = vcmp.ge.s32.totalorder %v857, %v2509
  %vm2525 = vcmp.ge.s32.totalorder %v858, %v2509
  %v2526 = vsel %vm2510, 1, 0
  %v2527 = vsel %vm2511, 1, 0
  %v2528 = vsel %vm2512, 1, 0
  %v2529 = vsel %vm2513, 1, 0
  %v2530 = vsel %vm2514, 1, 0
  %v2531 = vsel %vm2515, 1, 0
  %v2532 = vsel %vm2516, 1, 0
  %v2533 = vsel %vm2517, 1, 0
  %v2534 = vsel %vm2518, 1, 0
  %v2535 = vsel %vm2519, 1, 0
  %v2536 = vsel %vm2520, 1, 0
  %v2537 = vsel %vm2521, 1, 0
  %v2538 = vsel %vm2522, 1, 0
  %v2539 = vsel %vm2523, 1, 0
  %v2540 = vsel %vm2524, 1, 0
  %v2541 = vsel %vm2525, 1, 0
  %v2542 = vsel %vm907, %v2526, 0
  %v2543 = vsel %vm907, %v2527, 0
  %v2544 = vsel %vm907, %v2528, 0
  %v2545 = vsel %vm907, %v2529, 0
  %v2546 = vsel %vm907, %v2530, 0
  %v2547 = vadd.s32 %v2542, %v2546
  %v2548 = vsel %vm907, %v2531, 0
  %v2549 = vadd.s32 %v2543, %v2548
  %v2550 = vsel %vm907, %v2532, 0
  %v2551 = vadd.s32 %v2544, %v2550
  %v2552 = vsel %vm907, %v2533, 0
  %v2553 = vadd.s32 %v2545, %v2552
  %v2554 = vsel %vm907, %v2534, 0
  %v2555 = vadd.s32 %v2547, %v2554
  %v2556 = vsel %vm907, %v2535, 0
  %v2557 = vadd.s32 %v2549, %v2556
  %v2558 = vsel %vm907, %v2536, 0
  %v2559 = vadd.s32 %v2551, %v2558
  %v2560 = vsel %vm907, %v2537, 0
  %v2561 = vadd.s32 %v2553, %v2560
  %v2562 = vsel %vm907, %v2538, 0
  %v2563 = vadd.s32 %v2555, %v2562
  %v2564 = vsel %vm907, %v2539, 0
  %v2565 = vadd.s32 %v2557, %v2564
  %v2566 = vsel %vm907, %v2540, 0
  %v2567 = vadd.s32 %v2559, %v2566
  %v2568 = vsel %vm907, %v2541, 0
  %v2569 = vadd.s32 %v2561, %v2568
  %v2570 = vadd.s32 %v2563, %v2565
  %v2571 = vadd.s32 %v2567, %v2569
  %v2572 = vadd.s32 %v2570, %v2571
  %v2573 = vand.u32 %v2572, 65535
  %v2574 = vshrl.u32 %v2572, 16
  %v2575 = vcvt.s32.f32 %v2573
  %v2576 = vcvt.s32.f32 %v2574
  %2577 = vadd.xlane.f32.xlu0 %v2575
  %v2578 = vpop.xlane.xlu0 %2577
  %2579 = vadd.xlane.f32.xlu0 %v2576
  %v2580 = vpop.xlane.xlu0 %2579
  %v2581 = vcvt.f32.s32 %v2578
  %v2582 = vcvt.f32.s32 %v2580
  %v2583 = vshll.u32 %v2582, 16
  %v2584 = vadd.s32 %v2583, %v2581
  %v2585 = vrot.slane %v2584, 4
  %v2586 = vadd.s32 %v2584, %v2585
  %v2587 = vrot.slane %v2586, 2
  %v2588 = vadd.s32 %v2586, %v2587
  %v2589 = vrot.slane %v2588, 1
  %v2590 = vadd.s32 %v2588, %v2589
  %s2591 = vtos %v2590
  %p2592 = scmp.ge.s32.totalorder %s2591, 56
  %s2593 = scalar_select %p2592, %s2508, %s2507
  %s2594 = sor.u32 %s2593, 1024
  %v2595 = vstv %s2594
  %vm2596 = vcmp.ge.s32.totalorder %v843, %v2595
  %vm2597 = vcmp.ge.s32.totalorder %v844, %v2595
  %vm2598 = vcmp.ge.s32.totalorder %v845, %v2595
  %vm2599 = vcmp.ge.s32.totalorder %v846, %v2595
  %vm2600 = vcmp.ge.s32.totalorder %v847, %v2595
  %vm2601 = vcmp.ge.s32.totalorder %v848, %v2595
  %vm2602 = vcmp.ge.s32.totalorder %v849, %v2595
  %vm2603 = vcmp.ge.s32.totalorder %v850, %v2595
  %vm2604 = vcmp.ge.s32.totalorder %v851, %v2595
  %vm2605 = vcmp.ge.s32.totalorder %v852, %v2595
  %vm2606 = vcmp.ge.s32.totalorder %v853, %v2595
  %vm2607 = vcmp.ge.s32.totalorder %v854, %v2595
  %vm2608 = vcmp.ge.s32.totalorder %v855, %v2595
  %vm2609 = vcmp.ge.s32.totalorder %v856, %v2595
  %vm2610 = vcmp.ge.s32.totalorder %v857, %v2595
  %vm2611 = vcmp.ge.s32.totalorder %v858, %v2595
  %v2612 = vsel %vm2596, 1, 0
  %v2613 = vsel %vm2597, 1, 0
  %v2614 = vsel %vm2598, 1, 0
  %v2615 = vsel %vm2599, 1, 0
  %v2616 = vsel %vm2600, 1, 0
  %v2617 = vsel %vm2601, 1, 0
  %v2618 = vsel %vm2602, 1, 0
  %v2619 = vsel %vm2603, 1, 0
  %v2620 = vsel %vm2604, 1, 0
  %v2621 = vsel %vm2605, 1, 0
  %v2622 = vsel %vm2606, 1, 0
  %v2623 = vsel %vm2607, 1, 0
  %v2624 = vsel %vm2608, 1, 0
  %v2625 = vsel %vm2609, 1, 0
  %v2626 = vsel %vm2610, 1, 0
  %v2627 = vsel %vm2611, 1, 0
  %v2628 = vsel %vm907, %v2612, 0
  %v2629 = vsel %vm907, %v2613, 0
  %v2630 = vsel %vm907, %v2614, 0
  %v2631 = vsel %vm907, %v2615, 0
  %v2632 = vsel %vm907, %v2616, 0
  %v2633 = vadd.s32 %v2628, %v2632
  %v2634 = vsel %vm907, %v2617, 0
  %v2635 = vadd.s32 %v2629, %v2634
  %v2636 = vsel %vm907, %v2618, 0
  %v2637 = vadd.s32 %v2630, %v2636
  %v2638 = vsel %vm907, %v2619, 0
  %v2639 = vadd.s32 %v2631, %v2638
  %v2640 = vsel %vm907, %v2620, 0
  %v2641 = vadd.s32 %v2633, %v2640
  %v2642 = vsel %vm907, %v2621, 0
  %v2643 = vadd.s32 %v2635, %v2642
  %v2644 = vsel %vm907, %v2622, 0
  %v2645 = vadd.s32 %v2637, %v2644
  %v2646 = vsel %vm907, %v2623, 0
  %v2647 = vadd.s32 %v2639, %v2646
  %v2648 = vsel %vm907, %v2624, 0
  %v2649 = vadd.s32 %v2641, %v2648
  %v2650 = vsel %vm907, %v2625, 0
  %v2651 = vadd.s32 %v2643, %v2650
  %v2652 = vsel %vm907, %v2626, 0
  %v2653 = vadd.s32 %v2645, %v2652
  %v2654 = vsel %vm907, %v2627, 0
  %v2655 = vadd.s32 %v2647, %v2654
  %v2656 = vadd.s32 %v2649, %v2651
  %v2657 = vadd.s32 %v2653, %v2655
  %v2658 = vadd.s32 %v2656, %v2657
  %v2659 = vand.u32 %v2658, 65535
  %v2660 = vshrl.u32 %v2658, 16
  %v2661 = vcvt.s32.f32 %v2659
  %v2662 = vcvt.s32.f32 %v2660
  %2663 = vadd.xlane.f32.xlu0 %v2661
  %v2664 = vpop.xlane.xlu0 %2663
  %2665 = vadd.xlane.f32.xlu0 %v2662
  %v2666 = vpop.xlane.xlu0 %2665
  %v2667 = vcvt.f32.s32 %v2664
  %v2668 = vcvt.f32.s32 %v2666
  %v2669 = vshll.u32 %v2668, 16
  %v2670 = vadd.s32 %v2669, %v2667
  %v2671 = vrot.slane %v2670, 4
  %v2672 = vadd.s32 %v2670, %v2671
  %v2673 = vrot.slane %v2672, 2
  %v2674 = vadd.s32 %v2672, %v2673
  %v2675 = vrot.slane %v2674, 1
  %v2676 = vadd.s32 %v2674, %v2675
  %s2677 = vtos %v2676
  %p2678 = scmp.ge.s32.totalorder %s2677, 56
  %s2679 = scalar_select %p2678, %s2594, %s2593
  %s2680 = sor.u32 %s2679, 512
  %v2681 = vstv %s2680
  %vm2682 = vcmp.ge.s32.totalorder %v843, %v2681
  %vm2683 = vcmp.ge.s32.totalorder %v844, %v2681
  %vm2684 = vcmp.ge.s32.totalorder %v845, %v2681
  %vm2685 = vcmp.ge.s32.totalorder %v846, %v2681
  %vm2686 = vcmp.ge.s32.totalorder %v847, %v2681
  %vm2687 = vcmp.ge.s32.totalorder %v848, %v2681
  %vm2688 = vcmp.ge.s32.totalorder %v849, %v2681
  %vm2689 = vcmp.ge.s32.totalorder %v850, %v2681
  %vm2690 = vcmp.ge.s32.totalorder %v851, %v2681
  %vm2691 = vcmp.ge.s32.totalorder %v852, %v2681
  %vm2692 = vcmp.ge.s32.totalorder %v853, %v2681
  %vm2693 = vcmp.ge.s32.totalorder %v854, %v2681
  %vm2694 = vcmp.ge.s32.totalorder %v855, %v2681
  %vm2695 = vcmp.ge.s32.totalorder %v856, %v2681
  %vm2696 = vcmp.ge.s32.totalorder %v857, %v2681
  %vm2697 = vcmp.ge.s32.totalorder %v858, %v2681
  %v2698 = vsel %vm2682, 1, 0
  %v2699 = vsel %vm2683, 1, 0
  %v2700 = vsel %vm2684, 1, 0
  %v2701 = vsel %vm2685, 1, 0
  %v2702 = vsel %vm2686, 1, 0
  %v2703 = vsel %vm2687, 1, 0
  %v2704 = vsel %vm2688, 1, 0
  %v2705 = vsel %vm2689, 1, 0
  %v2706 = vsel %vm2690, 1, 0
  %v2707 = vsel %vm2691, 1, 0
  %v2708 = vsel %vm2692, 1, 0
  %v2709 = vsel %vm2693, 1, 0
  %v2710 = vsel %vm2694, 1, 0
  %v2711 = vsel %vm2695, 1, 0
  %v2712 = vsel %vm2696, 1, 0
  %v2713 = vsel %vm2697, 1, 0
  %v2714 = vsel %vm907, %v2698, 0
  %v2715 = vsel %vm907, %v2699, 0
  %v2716 = vsel %vm907, %v2700, 0
  %v2717 = vsel %vm907, %v2701, 0
  %v2718 = vsel %vm907, %v2702, 0
  %v2719 = vadd.s32 %v2714, %v2718
  %v2720 = vsel %vm907, %v2703, 0
  %v2721 = vadd.s32 %v2715, %v2720
  %v2722 = vsel %vm907, %v2704, 0
  %v2723 = vadd.s32 %v2716, %v2722
  %v2724 = vsel %vm907, %v2705, 0
  %v2725 = vadd.s32 %v2717, %v2724
  %v2726 = vsel %vm907, %v2706, 0
  %v2727 = vadd.s32 %v2719, %v2726
  %v2728 = vsel %vm907, %v2707, 0
  %v2729 = vadd.s32 %v2721, %v2728
  %v2730 = vsel %vm907, %v2708, 0
  %v2731 = vadd.s32 %v2723, %v2730
  %v2732 = vsel %vm907, %v2709, 0
  %v2733 = vadd.s32 %v2725, %v2732
  %v2734 = vsel %vm907, %v2710, 0
  %v2735 = vadd.s32 %v2727, %v2734
  %v2736 = vsel %vm907, %v2711, 0
  %v2737 = vadd.s32 %v2729, %v2736
  %v2738 = vsel %vm907, %v2712, 0
  %v2739 = vadd.s32 %v2731, %v2738
  %v2740 = vsel %vm907, %v2713, 0
  %v2741 = vadd.s32 %v2733, %v2740
  %v2742 = vadd.s32 %v2735, %v2737
  %v2743 = vadd.s32 %v2739, %v2741
  %v2744 = vadd.s32 %v2742, %v2743
  %v2745 = vand.u32 %v2744, 65535
  %v2746 = vshrl.u32 %v2744, 16
  %v2747 = vcvt.s32.f32 %v2745
  %v2748 = vcvt.s32.f32 %v2746
  %2749 = vadd.xlane.f32.xlu0 %v2747
  %v2750 = vpop.xlane.xlu0 %2749
  %2751 = vadd.xlane.f32.xlu0 %v2748
  %v2752 = vpop.xlane.xlu0 %2751
  %v2753 = vcvt.f32.s32 %v2750
  %v2754 = vcvt.f32.s32 %v2752
  %v2755 = vshll.u32 %v2754, 16
  %v2756 = vadd.s32 %v2755, %v2753
  %v2757 = vrot.slane %v2756, 4
  %v2758 = vadd.s32 %v2756, %v2757
  %v2759 = vrot.slane %v2758, 2
  %v2760 = vadd.s32 %v2758, %v2759
  %v2761 = vrot.slane %v2760, 1
  %v2762 = vadd.s32 %v2760, %v2761
  %s2763 = vtos %v2762
  %p2764 = scmp.ge.s32.totalorder %s2763, 56
  %s2765 = scalar_select %p2764, %s2680, %s2679
  %s2766 = sor.u32 %s2765, 256
  %v2767 = vstv %s2766
  %vm2768 = vcmp.ge.s32.totalorder %v843, %v2767
  %vm2769 = vcmp.ge.s32.totalorder %v844, %v2767
  %vm2770 = vcmp.ge.s32.totalorder %v845, %v2767
  %vm2771 = vcmp.ge.s32.totalorder %v846, %v2767
  %vm2772 = vcmp.ge.s32.totalorder %v847, %v2767
  %vm2773 = vcmp.ge.s32.totalorder %v848, %v2767
  %vm2774 = vcmp.ge.s32.totalorder %v849, %v2767
  %vm2775 = vcmp.ge.s32.totalorder %v850, %v2767
  %vm2776 = vcmp.ge.s32.totalorder %v851, %v2767
  %vm2777 = vcmp.ge.s32.totalorder %v852, %v2767
  %vm2778 = vcmp.ge.s32.totalorder %v853, %v2767
  %vm2779 = vcmp.ge.s32.totalorder %v854, %v2767
  %vm2780 = vcmp.ge.s32.totalorder %v855, %v2767
  %vm2781 = vcmp.ge.s32.totalorder %v856, %v2767
  %vm2782 = vcmp.ge.s32.totalorder %v857, %v2767
  %vm2783 = vcmp.ge.s32.totalorder %v858, %v2767
  %v2784 = vsel %vm2768, 1, 0
  %v2785 = vsel %vm2769, 1, 0
  %v2786 = vsel %vm2770, 1, 0
  %v2787 = vsel %vm2771, 1, 0
  %v2788 = vsel %vm2772, 1, 0
  %v2789 = vsel %vm2773, 1, 0
  %v2790 = vsel %vm2774, 1, 0
  %v2791 = vsel %vm2775, 1, 0
  %v2792 = vsel %vm2776, 1, 0
  %v2793 = vsel %vm2777, 1, 0
  %v2794 = vsel %vm2778, 1, 0
  %v2795 = vsel %vm2779, 1, 0
  %v2796 = vsel %vm2780, 1, 0
  %v2797 = vsel %vm2781, 1, 0
  %v2798 = vsel %vm2782, 1, 0
  %v2799 = vsel %vm2783, 1, 0
  %v2800 = vsel %vm907, %v2784, 0
  %v2801 = vsel %vm907, %v2785, 0
  %v2802 = vsel %vm907, %v2786, 0
  %v2803 = vsel %vm907, %v2787, 0
  %v2804 = vsel %vm907, %v2788, 0
  %v2805 = vadd.s32 %v2800, %v2804
  %v2806 = vsel %vm907, %v2789, 0
  %v2807 = vadd.s32 %v2801, %v2806
  %v2808 = vsel %vm907, %v2790, 0
  %v2809 = vadd.s32 %v2802, %v2808
  %v2810 = vsel %vm907, %v2791, 0
  %v2811 = vadd.s32 %v2803, %v2810
  %v2812 = vsel %vm907, %v2792, 0
  %v2813 = vadd.s32 %v2805, %v2812
  %v2814 = vsel %vm907, %v2793, 0
  %v2815 = vadd.s32 %v2807, %v2814
  %v2816 = vsel %vm907, %v2794, 0
  %v2817 = vadd.s32 %v2809, %v2816
  %v2818 = vsel %vm907, %v2795, 0
  %v2819 = vadd.s32 %v2811, %v2818
  %v2820 = vsel %vm907, %v2796, 0
  %v2821 = vadd.s32 %v2813, %v2820
  %v2822 = vsel %vm907, %v2797, 0
  %v2823 = vadd.s32 %v2815, %v2822
  %v2824 = vsel %vm907, %v2798, 0
  %v2825 = vadd.s32 %v2817, %v2824
  %v2826 = vsel %vm907, %v2799, 0
  %v2827 = vadd.s32 %v2819, %v2826
  %v2828 = vadd.s32 %v2821, %v2823
  %v2829 = vadd.s32 %v2825, %v2827
  %v2830 = vadd.s32 %v2828, %v2829
  %v2831 = vand.u32 %v2830, 65535
  %v2832 = vshrl.u32 %v2830, 16
  %v2833 = vcvt.s32.f32 %v2831
  %v2834 = vcvt.s32.f32 %v2832
  %2835 = vadd.xlane.f32.xlu0 %v2833
  %v2836 = vpop.xlane.xlu0 %2835
  %2837 = vadd.xlane.f32.xlu0 %v2834
  %v2838 = vpop.xlane.xlu0 %2837
  %v2839 = vcvt.f32.s32 %v2836
  %v2840 = vcvt.f32.s32 %v2838
  %v2841 = vshll.u32 %v2840, 16
  %v2842 = vadd.s32 %v2841, %v2839
  %v2843 = vrot.slane %v2842, 4
  %v2844 = vadd.s32 %v2842, %v2843
  %v2845 = vrot.slane %v2844, 2
  %v2846 = vadd.s32 %v2844, %v2845
  %v2847 = vrot.slane %v2846, 1
  %v2848 = vadd.s32 %v2846, %v2847
  %s2849 = vtos %v2848
  %p2850 = scmp.ge.s32.totalorder %s2849, 56
  %s2851 = scalar_select %p2850, %s2766, %s2765
  %s2852 = sor.u32 %s2851, 128
  %v2853 = vstv %s2852
  %vm2854 = vcmp.ge.s32.totalorder %v843, %v2853
  %vm2855 = vcmp.ge.s32.totalorder %v844, %v2853
  %vm2856 = vcmp.ge.s32.totalorder %v845, %v2853
  %vm2857 = vcmp.ge.s32.totalorder %v846, %v2853
  %vm2858 = vcmp.ge.s32.totalorder %v847, %v2853
  %vm2859 = vcmp.ge.s32.totalorder %v848, %v2853
  %vm2860 = vcmp.ge.s32.totalorder %v849, %v2853
  %vm2861 = vcmp.ge.s32.totalorder %v850, %v2853
  %vm2862 = vcmp.ge.s32.totalorder %v851, %v2853
  %vm2863 = vcmp.ge.s32.totalorder %v852, %v2853
  %vm2864 = vcmp.ge.s32.totalorder %v853, %v2853
  %vm2865 = vcmp.ge.s32.totalorder %v854, %v2853
  %vm2866 = vcmp.ge.s32.totalorder %v855, %v2853
  %vm2867 = vcmp.ge.s32.totalorder %v856, %v2853
  %vm2868 = vcmp.ge.s32.totalorder %v857, %v2853
  %vm2869 = vcmp.ge.s32.totalorder %v858, %v2853
  %v2870 = vsel %vm2854, 1, 0
  %v2871 = vsel %vm2855, 1, 0
  %v2872 = vsel %vm2856, 1, 0
  %v2873 = vsel %vm2857, 1, 0
  %v2874 = vsel %vm2858, 1, 0
  %v2875 = vsel %vm2859, 1, 0
  %v2876 = vsel %vm2860, 1, 0
  %v2877 = vsel %vm2861, 1, 0
  %v2878 = vsel %vm2862, 1, 0
  %v2879 = vsel %vm2863, 1, 0
  %v2880 = vsel %vm2864, 1, 0
  %v2881 = vsel %vm2865, 1, 0
  %v2882 = vsel %vm2866, 1, 0
  %v2883 = vsel %vm2867, 1, 0
  %v2884 = vsel %vm2868, 1, 0
  %v2885 = vsel %vm2869, 1, 0
  %v2886 = vsel %vm907, %v2870, 0
  %v2887 = vsel %vm907, %v2871, 0
  %v2888 = vsel %vm907, %v2872, 0
  %v2889 = vsel %vm907, %v2873, 0
  %v2890 = vsel %vm907, %v2874, 0
  %v2891 = vadd.s32 %v2886, %v2890
  %v2892 = vsel %vm907, %v2875, 0
  %v2893 = vadd.s32 %v2887, %v2892
  %v2894 = vsel %vm907, %v2876, 0
  %v2895 = vadd.s32 %v2888, %v2894
  %v2896 = vsel %vm907, %v2877, 0
  %v2897 = vadd.s32 %v2889, %v2896
  %v2898 = vsel %vm907, %v2878, 0
  %v2899 = vadd.s32 %v2891, %v2898
  %v2900 = vsel %vm907, %v2879, 0
  %v2901 = vadd.s32 %v2893, %v2900
  %v2902 = vsel %vm907, %v2880, 0
  %v2903 = vadd.s32 %v2895, %v2902
  %v2904 = vsel %vm907, %v2881, 0
  %v2905 = vadd.s32 %v2897, %v2904
  %v2906 = vsel %vm907, %v2882, 0
  %v2907 = vadd.s32 %v2899, %v2906
  %v2908 = vsel %vm907, %v2883, 0
  %v2909 = vadd.s32 %v2901, %v2908
  %v2910 = vsel %vm907, %v2884, 0
  %v2911 = vadd.s32 %v2903, %v2910
  %v2912 = vsel %vm907, %v2885, 0
  %v2913 = vadd.s32 %v2905, %v2912
  %v2914 = vadd.s32 %v2907, %v2909
  %v2915 = vadd.s32 %v2911, %v2913
  %v2916 = vadd.s32 %v2914, %v2915
  %v2917 = vand.u32 %v2916, 65535
  %v2918 = vshrl.u32 %v2916, 16
  %v2919 = vcvt.s32.f32 %v2917
  %v2920 = vcvt.s32.f32 %v2918
  %2921 = vadd.xlane.f32.xlu0 %v2919
  %v2922 = vpop.xlane.xlu0 %2921
  %2923 = vadd.xlane.f32.xlu0 %v2920
  %v2924 = vpop.xlane.xlu0 %2923
  %v2925 = vcvt.f32.s32 %v2922
  %v2926 = vcvt.f32.s32 %v2924
  %v2927 = vshll.u32 %v2926, 16
  %v2928 = vadd.s32 %v2927, %v2925
  %v2929 = vrot.slane %v2928, 4
  %v2930 = vadd.s32 %v2928, %v2929
  %v2931 = vrot.slane %v2930, 2
  %v2932 = vadd.s32 %v2930, %v2931
  %v2933 = vrot.slane %v2932, 1
  %v2934 = vadd.s32 %v2932, %v2933
  %s2935 = vtos %v2934
  %p2936 = scmp.ge.s32.totalorder %s2935, 56
  %s2937 = scalar_select %p2936, %s2852, %s2851
  %s2938 = sor.u32 %s2937, 64
  %v2939 = vstv %s2938
  %vm2940 = vcmp.ge.s32.totalorder %v843, %v2939
  %vm2941 = vcmp.ge.s32.totalorder %v844, %v2939
  %vm2942 = vcmp.ge.s32.totalorder %v845, %v2939
  %vm2943 = vcmp.ge.s32.totalorder %v846, %v2939
  %vm2944 = vcmp.ge.s32.totalorder %v847, %v2939
  %vm2945 = vcmp.ge.s32.totalorder %v848, %v2939
  %vm2946 = vcmp.ge.s32.totalorder %v849, %v2939
  %vm2947 = vcmp.ge.s32.totalorder %v850, %v2939
  %vm2948 = vcmp.ge.s32.totalorder %v851, %v2939
  %vm2949 = vcmp.ge.s32.totalorder %v852, %v2939
  %vm2950 = vcmp.ge.s32.totalorder %v853, %v2939
  %vm2951 = vcmp.ge.s32.totalorder %v854, %v2939
  %vm2952 = vcmp.ge.s32.totalorder %v855, %v2939
  %vm2953 = vcmp.ge.s32.totalorder %v856, %v2939
  %vm2954 = vcmp.ge.s32.totalorder %v857, %v2939
  %vm2955 = vcmp.ge.s32.totalorder %v858, %v2939
  %v2956 = vsel %vm2940, 1, 0
  %v2957 = vsel %vm2941, 1, 0
  %v2958 = vsel %vm2942, 1, 0
  %v2959 = vsel %vm2943, 1, 0
  %v2960 = vsel %vm2944, 1, 0
  %v2961 = vsel %vm2945, 1, 0
  %v2962 = vsel %vm2946, 1, 0
  %v2963 = vsel %vm2947, 1, 0
  %v2964 = vsel %vm2948, 1, 0
  %v2965 = vsel %vm2949, 1, 0
  %v2966 = vsel %vm2950, 1, 0
  %v2967 = vsel %vm2951, 1, 0
  %v2968 = vsel %vm2952, 1, 0
  %v2969 = vsel %vm2953, 1, 0
  %v2970 = vsel %vm2954, 1, 0
  %v2971 = vsel %vm2955, 1, 0
  %v2972 = vsel %vm907, %v2956, 0
  %v2973 = vsel %vm907, %v2957, 0
  %v2974 = vsel %vm907, %v2958, 0
  %v2975 = vsel %vm907, %v2959, 0
  %v2976 = vsel %vm907, %v2960, 0
  %v2977 = vadd.s32 %v2972, %v2976
  %v2978 = vsel %vm907, %v2961, 0
  %v2979 = vadd.s32 %v2973, %v2978
  %v2980 = vsel %vm907, %v2962, 0
  %v2981 = vadd.s32 %v2974, %v2980
  %v2982 = vsel %vm907, %v2963, 0
  %v2983 = vadd.s32 %v2975, %v2982
  %v2984 = vsel %vm907, %v2964, 0
  %v2985 = vadd.s32 %v2977, %v2984
  %v2986 = vsel %vm907, %v2965, 0
  %v2987 = vadd.s32 %v2979, %v2986
  %v2988 = vsel %vm907, %v2966, 0
  %v2989 = vadd.s32 %v2981, %v2988
  %v2990 = vsel %vm907, %v2967, 0
  %v2991 = vadd.s32 %v2983, %v2990
  %v2992 = vsel %vm907, %v2968, 0
  %v2993 = vadd.s32 %v2985, %v2992
  %v2994 = vsel %vm907, %v2969, 0
  %v2995 = vadd.s32 %v2987, %v2994
  %v2996 = vsel %vm907, %v2970, 0
  %v2997 = vadd.s32 %v2989, %v2996
  %v2998 = vsel %vm907, %v2971, 0
  %v2999 = vadd.s32 %v2991, %v2998
  %v3000 = vadd.s32 %v2993, %v2995
  %v3001 = vadd.s32 %v2997, %v2999
  %v3002 = vadd.s32 %v3000, %v3001
  %v3003 = vand.u32 %v3002, 65535
  %v3004 = vshrl.u32 %v3002, 16
  %v3005 = vcvt.s32.f32 %v3003
  %v3006 = vcvt.s32.f32 %v3004
  %3007 = vadd.xlane.f32.xlu0 %v3005
  %v3008 = vpop.xlane.xlu0 %3007
  %3009 = vadd.xlane.f32.xlu0 %v3006
  %v3010 = vpop.xlane.xlu0 %3009
  %v3011 = vcvt.f32.s32 %v3008
  %v3012 = vcvt.f32.s32 %v3010
  %v3013 = vshll.u32 %v3012, 16
  %v3014 = vadd.s32 %v3013, %v3011
  %v3015 = vrot.slane %v3014, 4
  %v3016 = vadd.s32 %v3014, %v3015
  %v3017 = vrot.slane %v3016, 2
  %v3018 = vadd.s32 %v3016, %v3017
  %v3019 = vrot.slane %v3018, 1
  %v3020 = vadd.s32 %v3018, %v3019
  %s3021 = vtos %v3020
  %p3022 = scmp.ge.s32.totalorder %s3021, 56
  %s3023 = scalar_select %p3022, %s2938, %s2937
  %s3024 = sor.u32 %s3023, 32
  %v3025 = vstv %s3024
  %vm3026 = vcmp.ge.s32.totalorder %v843, %v3025
  %vm3027 = vcmp.ge.s32.totalorder %v844, %v3025
  %vm3028 = vcmp.ge.s32.totalorder %v845, %v3025
  %vm3029 = vcmp.ge.s32.totalorder %v846, %v3025
  %vm3030 = vcmp.ge.s32.totalorder %v847, %v3025
  %vm3031 = vcmp.ge.s32.totalorder %v848, %v3025
  %vm3032 = vcmp.ge.s32.totalorder %v849, %v3025
  %vm3033 = vcmp.ge.s32.totalorder %v850, %v3025
  %vm3034 = vcmp.ge.s32.totalorder %v851, %v3025
  %vm3035 = vcmp.ge.s32.totalorder %v852, %v3025
  %vm3036 = vcmp.ge.s32.totalorder %v853, %v3025
  %vm3037 = vcmp.ge.s32.totalorder %v854, %v3025
  %vm3038 = vcmp.ge.s32.totalorder %v855, %v3025
  %vm3039 = vcmp.ge.s32.totalorder %v856, %v3025
  %vm3040 = vcmp.ge.s32.totalorder %v857, %v3025
  %vm3041 = vcmp.ge.s32.totalorder %v858, %v3025
  %v3042 = vsel %vm3026, 1, 0
  %v3043 = vsel %vm3027, 1, 0
  %v3044 = vsel %vm3028, 1, 0
  %v3045 = vsel %vm3029, 1, 0
  %v3046 = vsel %vm3030, 1, 0
  %v3047 = vsel %vm3031, 1, 0
  %v3048 = vsel %vm3032, 1, 0
  %v3049 = vsel %vm3033, 1, 0
  %v3050 = vsel %vm3034, 1, 0
  %v3051 = vsel %vm3035, 1, 0
  %v3052 = vsel %vm3036, 1, 0
  %v3053 = vsel %vm3037, 1, 0
  %v3054 = vsel %vm3038, 1, 0
  %v3055 = vsel %vm3039, 1, 0
  %v3056 = vsel %vm3040, 1, 0
  %v3057 = vsel %vm3041, 1, 0
  %v3058 = vsel %vm907, %v3042, 0
  %v3059 = vsel %vm907, %v3043, 0
  %v3060 = vsel %vm907, %v3044, 0
  %v3061 = vsel %vm907, %v3045, 0
  %v3062 = vsel %vm907, %v3046, 0
  %v3063 = vadd.s32 %v3058, %v3062
  %v3064 = vsel %vm907, %v3047, 0
  %v3065 = vadd.s32 %v3059, %v3064
  %v3066 = vsel %vm907, %v3048, 0
  %v3067 = vadd.s32 %v3060, %v3066
  %v3068 = vsel %vm907, %v3049, 0
  %v3069 = vadd.s32 %v3061, %v3068
  %v3070 = vsel %vm907, %v3050, 0
  %v3071 = vadd.s32 %v3063, %v3070
  %v3072 = vsel %vm907, %v3051, 0
  %v3073 = vadd.s32 %v3065, %v3072
  %v3074 = vsel %vm907, %v3052, 0
  %v3075 = vadd.s32 %v3067, %v3074
  %v3076 = vsel %vm907, %v3053, 0
  %v3077 = vadd.s32 %v3069, %v3076
  %v3078 = vsel %vm907, %v3054, 0
  %v3079 = vadd.s32 %v3071, %v3078
  %v3080 = vsel %vm907, %v3055, 0
  %v3081 = vadd.s32 %v3073, %v3080
  %v3082 = vsel %vm907, %v3056, 0
  %v3083 = vadd.s32 %v3075, %v3082
  %v3084 = vsel %vm907, %v3057, 0
  %v3085 = vadd.s32 %v3077, %v3084
  %v3086 = vadd.s32 %v3079, %v3081
  %v3087 = vadd.s32 %v3083, %v3085
  %v3088 = vadd.s32 %v3086, %v3087
  %v3089 = vand.u32 %v3088, 65535
  %v3090 = vshrl.u32 %v3088, 16
  %v3091 = vcvt.s32.f32 %v3089
  %v3092 = vcvt.s32.f32 %v3090
  %3093 = vadd.xlane.f32.xlu0 %v3091
  %v3094 = vpop.xlane.xlu0 %3093
  %3095 = vadd.xlane.f32.xlu0 %v3092
  %v3096 = vpop.xlane.xlu0 %3095
  %v3097 = vcvt.f32.s32 %v3094
  %v3098 = vcvt.f32.s32 %v3096
  %v3099 = vshll.u32 %v3098, 16
  %v3100 = vadd.s32 %v3099, %v3097
  %v3101 = vrot.slane %v3100, 4
  %v3102 = vadd.s32 %v3100, %v3101
  %v3103 = vrot.slane %v3102, 2
  %v3104 = vadd.s32 %v3102, %v3103
  %v3105 = vrot.slane %v3104, 1
  %v3106 = vadd.s32 %v3104, %v3105
  %s3107 = vtos %v3106
  %p3108 = scmp.ge.s32.totalorder %s3107, 56
  %s3109 = scalar_select %p3108, %s3024, %s3023
  %s3110 = sor.u32 %s3109, 16
  %v3111 = vstv %s3110
  %vm3112 = vcmp.ge.s32.totalorder %v843, %v3111
  %vm3113 = vcmp.ge.s32.totalorder %v844, %v3111
  %vm3114 = vcmp.ge.s32.totalorder %v845, %v3111
  %vm3115 = vcmp.ge.s32.totalorder %v846, %v3111
  %vm3116 = vcmp.ge.s32.totalorder %v847, %v3111
  %vm3117 = vcmp.ge.s32.totalorder %v848, %v3111
  %vm3118 = vcmp.ge.s32.totalorder %v849, %v3111
  %vm3119 = vcmp.ge.s32.totalorder %v850, %v3111
  %vm3120 = vcmp.ge.s32.totalorder %v851, %v3111
  %vm3121 = vcmp.ge.s32.totalorder %v852, %v3111
  %vm3122 = vcmp.ge.s32.totalorder %v853, %v3111
  %vm3123 = vcmp.ge.s32.totalorder %v854, %v3111
  %vm3124 = vcmp.ge.s32.totalorder %v855, %v3111
  %vm3125 = vcmp.ge.s32.totalorder %v856, %v3111
  %vm3126 = vcmp.ge.s32.totalorder %v857, %v3111
  %vm3127 = vcmp.ge.s32.totalorder %v858, %v3111
  %v3128 = vsel %vm3112, 1, 0
  %v3129 = vsel %vm3113, 1, 0
  %v3130 = vsel %vm3114, 1, 0
  %v3131 = vsel %vm3115, 1, 0
  %v3132 = vsel %vm3116, 1, 0
  %v3133 = vsel %vm3117, 1, 0
  %v3134 = vsel %vm3118, 1, 0
  %v3135 = vsel %vm3119, 1, 0
  %v3136 = vsel %vm3120, 1, 0
  %v3137 = vsel %vm3121, 1, 0
  %v3138 = vsel %vm3122, 1, 0
  %v3139 = vsel %vm3123, 1, 0
  %v3140 = vsel %vm3124, 1, 0
  %v3141 = vsel %vm3125, 1, 0
  %v3142 = vsel %vm3126, 1, 0
  %v3143 = vsel %vm3127, 1, 0
  %v3144 = vsel %vm907, %v3128, 0
  %v3145 = vsel %vm907, %v3129, 0
  %v3146 = vsel %vm907, %v3130, 0
  %v3147 = vsel %vm907, %v3131, 0
  %v3148 = vsel %vm907, %v3132, 0
  %v3149 = vadd.s32 %v3144, %v3148
  %v3150 = vsel %vm907, %v3133, 0
  %v3151 = vadd.s32 %v3145, %v3150
  %v3152 = vsel %vm907, %v3134, 0
  %v3153 = vadd.s32 %v3146, %v3152
  %v3154 = vsel %vm907, %v3135, 0
  %v3155 = vadd.s32 %v3147, %v3154
  %v3156 = vsel %vm907, %v3136, 0
  %v3157 = vadd.s32 %v3149, %v3156
  %v3158 = vsel %vm907, %v3137, 0
  %v3159 = vadd.s32 %v3151, %v3158
  %v3160 = vsel %vm907, %v3138, 0
  %v3161 = vadd.s32 %v3153, %v3160
  %v3162 = vsel %vm907, %v3139, 0
  %v3163 = vadd.s32 %v3155, %v3162
  %v3164 = vsel %vm907, %v3140, 0
  %v3165 = vadd.s32 %v3157, %v3164
  %v3166 = vsel %vm907, %v3141, 0
  %v3167 = vadd.s32 %v3159, %v3166
  %v3168 = vsel %vm907, %v3142, 0
  %v3169 = vadd.s32 %v3161, %v3168
  %v3170 = vsel %vm907, %v3143, 0
  %v3171 = vadd.s32 %v3163, %v3170
  %v3172 = vadd.s32 %v3165, %v3167
  %v3173 = vadd.s32 %v3169, %v3171
  %v3174 = vadd.s32 %v3172, %v3173
  %v3175 = vand.u32 %v3174, 65535
  %v3176 = vshrl.u32 %v3174, 16
  %v3177 = vcvt.s32.f32 %v3175
  %v3178 = vcvt.s32.f32 %v3176
  %3179 = vadd.xlane.f32.xlu0 %v3177
  %v3180 = vpop.xlane.xlu0 %3179
  %3181 = vadd.xlane.f32.xlu0 %v3178
  %v3182 = vpop.xlane.xlu0 %3181
  %v3183 = vcvt.f32.s32 %v3180
  %v3184 = vcvt.f32.s32 %v3182
  %v3185 = vshll.u32 %v3184, 16
  %v3186 = vadd.s32 %v3185, %v3183
  %v3187 = vrot.slane %v3186, 4
  %v3188 = vadd.s32 %v3186, %v3187
  %v3189 = vrot.slane %v3188, 2
  %v3190 = vadd.s32 %v3188, %v3189
  %v3191 = vrot.slane %v3190, 1
  %v3192 = vadd.s32 %v3190, %v3191
  %s3193 = vtos %v3192
  %p3194 = scmp.ge.s32.totalorder %s3193, 56
  %s3195 = scalar_select %p3194, %s3110, %s3109
  %s3196 = sor.u32 %s3195, 8
  %v3197 = vstv %s3196
  %vm3198 = vcmp.ge.s32.totalorder %v843, %v3197
  %vm3199 = vcmp.ge.s32.totalorder %v844, %v3197
  %vm3200 = vcmp.ge.s32.totalorder %v845, %v3197
  %vm3201 = vcmp.ge.s32.totalorder %v846, %v3197
  %vm3202 = vcmp.ge.s32.totalorder %v847, %v3197
  %vm3203 = vcmp.ge.s32.totalorder %v848, %v3197
  %vm3204 = vcmp.ge.s32.totalorder %v849, %v3197
  %vm3205 = vcmp.ge.s32.totalorder %v850, %v3197
  %vm3206 = vcmp.ge.s32.totalorder %v851, %v3197
  %vm3207 = vcmp.ge.s32.totalorder %v852, %v3197
  %vm3208 = vcmp.ge.s32.totalorder %v853, %v3197
  %vm3209 = vcmp.ge.s32.totalorder %v854, %v3197
  %vm3210 = vcmp.ge.s32.totalorder %v855, %v3197
  %vm3211 = vcmp.ge.s32.totalorder %v856, %v3197
  %vm3212 = vcmp.ge.s32.totalorder %v857, %v3197
  %vm3213 = vcmp.ge.s32.totalorder %v858, %v3197
  %v3214 = vsel %vm3198, 1, 0
  %v3215 = vsel %vm3199, 1, 0
  %v3216 = vsel %vm3200, 1, 0
  %v3217 = vsel %vm3201, 1, 0
  %v3218 = vsel %vm3202, 1, 0
  %v3219 = vsel %vm3203, 1, 0
  %v3220 = vsel %vm3204, 1, 0
  %v3221 = vsel %vm3205, 1, 0
  %v3222 = vsel %vm3206, 1, 0
  %v3223 = vsel %vm3207, 1, 0
  %v3224 = vsel %vm3208, 1, 0
  %v3225 = vsel %vm3209, 1, 0
  %v3226 = vsel %vm3210, 1, 0
  %v3227 = vsel %vm3211, 1, 0
  %v3228 = vsel %vm3212, 1, 0
  %v3229 = vsel %vm3213, 1, 0
  %v3230 = vsel %vm907, %v3214, 0
  %v3231 = vsel %vm907, %v3215, 0
  %v3232 = vsel %vm907, %v3216, 0
  %v3233 = vsel %vm907, %v3217, 0
  %v3234 = vsel %vm907, %v3218, 0
  %v3235 = vadd.s32 %v3230, %v3234
  %v3236 = vsel %vm907, %v3219, 0
  %v3237 = vadd.s32 %v3231, %v3236
  %v3238 = vsel %vm907, %v3220, 0
  %v3239 = vadd.s32 %v3232, %v3238
  %v3240 = vsel %vm907, %v3221, 0
  %v3241 = vadd.s32 %v3233, %v3240
  %v3242 = vsel %vm907, %v3222, 0
  %v3243 = vadd.s32 %v3235, %v3242
  %v3244 = vsel %vm907, %v3223, 0
  %v3245 = vadd.s32 %v3237, %v3244
  %v3246 = vsel %vm907, %v3224, 0
  %v3247 = vadd.s32 %v3239, %v3246
  %v3248 = vsel %vm907, %v3225, 0
  %v3249 = vadd.s32 %v3241, %v3248
  %v3250 = vsel %vm907, %v3226, 0
  %v3251 = vadd.s32 %v3243, %v3250
  %v3252 = vsel %vm907, %v3227, 0
  %v3253 = vadd.s32 %v3245, %v3252
  %v3254 = vsel %vm907, %v3228, 0
  %v3255 = vadd.s32 %v3247, %v3254
  %v3256 = vsel %vm907, %v3229, 0
  %v3257 = vadd.s32 %v3249, %v3256
  %v3258 = vadd.s32 %v3251, %v3253
  %v3259 = vadd.s32 %v3255, %v3257
  %v3260 = vadd.s32 %v3258, %v3259
  %v3261 = vand.u32 %v3260, 65535
  %v3262 = vshrl.u32 %v3260, 16
  %v3263 = vcvt.s32.f32 %v3261
  %v3264 = vcvt.s32.f32 %v3262
  %3265 = vadd.xlane.f32.xlu0 %v3263
  %v3266 = vpop.xlane.xlu0 %3265
  %3267 = vadd.xlane.f32.xlu0 %v3264
  %v3268 = vpop.xlane.xlu0 %3267
  %v3269 = vcvt.f32.s32 %v3266
  %v3270 = vcvt.f32.s32 %v3268
  %v3271 = vshll.u32 %v3270, 16
  %v3272 = vadd.s32 %v3271, %v3269
  %v3273 = vrot.slane %v3272, 4
  %v3274 = vadd.s32 %v3272, %v3273
  %v3275 = vrot.slane %v3274, 2
  %v3276 = vadd.s32 %v3274, %v3275
  %v3277 = vrot.slane %v3276, 1
  %v3278 = vadd.s32 %v3276, %v3277
  %s3279 = vtos %v3278
  %p3280 = scmp.ge.s32.totalorder %s3279, 56
  %s3281 = scalar_select %p3280, %s3196, %s3195
  %s3282 = sor.u32 %s3281, 4
  %v3283 = vstv %s3282
  %vm3284 = vcmp.ge.s32.totalorder %v843, %v3283
  %vm3285 = vcmp.ge.s32.totalorder %v844, %v3283
  %vm3286 = vcmp.ge.s32.totalorder %v845, %v3283
  %vm3287 = vcmp.ge.s32.totalorder %v846, %v3283
  %vm3288 = vcmp.ge.s32.totalorder %v847, %v3283
  %vm3289 = vcmp.ge.s32.totalorder %v848, %v3283
  %vm3290 = vcmp.ge.s32.totalorder %v849, %v3283
  %vm3291 = vcmp.ge.s32.totalorder %v850, %v3283
  %vm3292 = vcmp.ge.s32.totalorder %v851, %v3283
  %vm3293 = vcmp.ge.s32.totalorder %v852, %v3283
  %vm3294 = vcmp.ge.s32.totalorder %v853, %v3283
  %vm3295 = vcmp.ge.s32.totalorder %v854, %v3283
  %vm3296 = vcmp.ge.s32.totalorder %v855, %v3283
  %vm3297 = vcmp.ge.s32.totalorder %v856, %v3283
  %vm3298 = vcmp.ge.s32.totalorder %v857, %v3283
  %vm3299 = vcmp.ge.s32.totalorder %v858, %v3283
  %v3300 = vsel %vm3284, 1, 0
  %v3301 = vsel %vm3285, 1, 0
  %v3302 = vsel %vm3286, 1, 0
  %v3303 = vsel %vm3287, 1, 0
  %v3304 = vsel %vm3288, 1, 0
  %v3305 = vsel %vm3289, 1, 0
  %v3306 = vsel %vm3290, 1, 0
  %v3307 = vsel %vm3291, 1, 0
  %v3308 = vsel %vm3292, 1, 0
  %v3309 = vsel %vm3293, 1, 0
  %v3310 = vsel %vm3294, 1, 0
  %v3311 = vsel %vm3295, 1, 0
  %v3312 = vsel %vm3296, 1, 0
  %v3313 = vsel %vm3297, 1, 0
  %v3314 = vsel %vm3298, 1, 0
  %v3315 = vsel %vm3299, 1, 0
  %v3316 = vsel %vm907, %v3300, 0
  %v3317 = vsel %vm907, %v3301, 0
  %v3318 = vsel %vm907, %v3302, 0
  %v3319 = vsel %vm907, %v3303, 0
  %v3320 = vsel %vm907, %v3304, 0
  %v3321 = vadd.s32 %v3316, %v3320
  %v3322 = vsel %vm907, %v3305, 0
  %v3323 = vadd.s32 %v3317, %v3322
  %v3324 = vsel %vm907, %v3306, 0
  %v3325 = vadd.s32 %v3318, %v3324
  %v3326 = vsel %vm907, %v3307, 0
  %v3327 = vadd.s32 %v3319, %v3326
  %v3328 = vsel %vm907, %v3308, 0
  %v3329 = vadd.s32 %v3321, %v3328
  %v3330 = vsel %vm907, %v3309, 0
  %v3331 = vadd.s32 %v3323, %v3330
  %v3332 = vsel %vm907, %v3310, 0
  %v3333 = vadd.s32 %v3325, %v3332
  %v3334 = vsel %vm907, %v3311, 0
  %v3335 = vadd.s32 %v3327, %v3334
  %v3336 = vsel %vm907, %v3312, 0
  %v3337 = vadd.s32 %v3329, %v3336
  %v3338 = vsel %vm907, %v3313, 0
  %v3339 = vadd.s32 %v3331, %v3338
  %v3340 = vsel %vm907, %v3314, 0
  %v3341 = vadd.s32 %v3333, %v3340
  %v3342 = vsel %vm907, %v3315, 0
  %v3343 = vadd.s32 %v3335, %v3342
  %v3344 = vadd.s32 %v3337, %v3339
  %v3345 = vadd.s32 %v3341, %v3343
  %v3346 = vadd.s32 %v3344, %v3345
  %v3347 = vand.u32 %v3346, 65535
  %v3348 = vshrl.u32 %v3346, 16
  %v3349 = vcvt.s32.f32 %v3347
  %v3350 = vcvt.s32.f32 %v3348
  %3351 = vadd.xlane.f32.xlu0 %v3349
  %v3352 = vpop.xlane.xlu0 %3351
  %3353 = vadd.xlane.f32.xlu0 %v3350
  %v3354 = vpop.xlane.xlu0 %3353
  %v3355 = vcvt.f32.s32 %v3352
  %v3356 = vcvt.f32.s32 %v3354
  %v3357 = vshll.u32 %v3356, 16
  %v3358 = vadd.s32 %v3357, %v3355
  %v3359 = vrot.slane %v3358, 4
  %v3360 = vadd.s32 %v3358, %v3359
  %v3361 = vrot.slane %v3360, 2
  %v3362 = vadd.s32 %v3360, %v3361
  %v3363 = vrot.slane %v3362, 1
  %v3364 = vadd.s32 %v3362, %v3363
  %s3365 = vtos %v3364
  %p3366 = scmp.ge.s32.totalorder %s3365, 56
  %s3367 = scalar_select %p3366, %s3282, %s3281
  %s3368 = sor.u32 %s3367, 2
  %v3369 = vstv %s3368
  %vm3370 = vcmp.ge.s32.totalorder %v843, %v3369
  %vm3371 = vcmp.ge.s32.totalorder %v844, %v3369
  %vm3372 = vcmp.ge.s32.totalorder %v845, %v3369
  %vm3373 = vcmp.ge.s32.totalorder %v846, %v3369
  %vm3374 = vcmp.ge.s32.totalorder %v847, %v3369
  %vm3375 = vcmp.ge.s32.totalorder %v848, %v3369
  %vm3376 = vcmp.ge.s32.totalorder %v849, %v3369
  %vm3377 = vcmp.ge.s32.totalorder %v850, %v3369
  %vm3378 = vcmp.ge.s32.totalorder %v851, %v3369
  %vm3379 = vcmp.ge.s32.totalorder %v852, %v3369
  %vm3380 = vcmp.ge.s32.totalorder %v853, %v3369
  %vm3381 = vcmp.ge.s32.totalorder %v854, %v3369
  %vm3382 = vcmp.ge.s32.totalorder %v855, %v3369
  %vm3383 = vcmp.ge.s32.totalorder %v856, %v3369
  %vm3384 = vcmp.ge.s32.totalorder %v857, %v3369
  %vm3385 = vcmp.ge.s32.totalorder %v858, %v3369
  %v3386 = vsel %vm3370, 1, 0
  %v3387 = vsel %vm3371, 1, 0
  %v3388 = vsel %vm3372, 1, 0
  %v3389 = vsel %vm3373, 1, 0
  %v3390 = vsel %vm3374, 1, 0
  %v3391 = vsel %vm3375, 1, 0
  %v3392 = vsel %vm3376, 1, 0
  %v3393 = vsel %vm3377, 1, 0
  %v3394 = vsel %vm3378, 1, 0
  %v3395 = vsel %vm3379, 1, 0
  %v3396 = vsel %vm3380, 1, 0
  %v3397 = vsel %vm3381, 1, 0
  %v3398 = vsel %vm3382, 1, 0
  %v3399 = vsel %vm3383, 1, 0
  %v3400 = vsel %vm3384, 1, 0
  %v3401 = vsel %vm3385, 1, 0
  %v3402 = vsel %vm907, %v3386, 0
  %v3403 = vsel %vm907, %v3387, 0
  %v3404 = vsel %vm907, %v3388, 0
  %v3405 = vsel %vm907, %v3389, 0
  %v3406 = vsel %vm907, %v3390, 0
  %v3407 = vadd.s32 %v3402, %v3406
  %v3408 = vsel %vm907, %v3391, 0
  %v3409 = vadd.s32 %v3403, %v3408
  %v3410 = vsel %vm907, %v3392, 0
  %v3411 = vadd.s32 %v3404, %v3410
  %v3412 = vsel %vm907, %v3393, 0
  %v3413 = vadd.s32 %v3405, %v3412
  %v3414 = vsel %vm907, %v3394, 0
  %v3415 = vadd.s32 %v3407, %v3414
  %v3416 = vsel %vm907, %v3395, 0
  %v3417 = vadd.s32 %v3409, %v3416
  %v3418 = vsel %vm907, %v3396, 0
  %v3419 = vadd.s32 %v3411, %v3418
  %v3420 = vsel %vm907, %v3397, 0
  %v3421 = vadd.s32 %v3413, %v3420
  %v3422 = vsel %vm907, %v3398, 0
  %v3423 = vadd.s32 %v3415, %v3422
  %v3424 = vsel %vm907, %v3399, 0
  %v3425 = vadd.s32 %v3417, %v3424
  %v3426 = vsel %vm907, %v3400, 0
  %v3427 = vadd.s32 %v3419, %v3426
  %v3428 = vsel %vm907, %v3401, 0
  %v3429 = vadd.s32 %v3421, %v3428
  %v3430 = vadd.s32 %v3423, %v3425
  %v3431 = vadd.s32 %v3427, %v3429
  %v3432 = vadd.s32 %v3430, %v3431
  %v3433 = vand.u32 %v3432, 65535
  %v3434 = vshrl.u32 %v3432, 16
  %v3435 = vcvt.s32.f32 %v3433
  %v3436 = vcvt.s32.f32 %v3434
  %3437 = vadd.xlane.f32.xlu0 %v3435
  %v3438 = vpop.xlane.xlu0 %3437
  %3439 = vadd.xlane.f32.xlu0 %v3436
  %v3440 = vpop.xlane.xlu0 %3439
  %v3441 = vcvt.f32.s32 %v3438
  %v3442 = vcvt.f32.s32 %v3440
  %v3443 = vshll.u32 %v3442, 16
  %v3444 = vadd.s32 %v3443, %v3441
  %v3445 = vrot.slane %v3444, 4
  %v3446 = vadd.s32 %v3444, %v3445
  %v3447 = vrot.slane %v3446, 2
  %v3448 = vadd.s32 %v3446, %v3447
  %v3449 = vrot.slane %v3448, 1
  %v3450 = vadd.s32 %v3448, %v3449
  %s3451 = vtos %v3450
  %p3452 = scmp.ge.s32.totalorder %s3451, 56
  %s3453 = scalar_select %p3452, %s3368, %s3367
  %s3454 = sor.u32 %s3453, 1
  %v3455 = vstv %s3454
  %vm3456 = vcmp.ge.s32.totalorder %v843, %v3455
  %vm3457 = vcmp.ge.s32.totalorder %v844, %v3455
  %vm3458 = vcmp.ge.s32.totalorder %v845, %v3455
  %vm3459 = vcmp.ge.s32.totalorder %v846, %v3455
  %vm3460 = vcmp.ge.s32.totalorder %v847, %v3455
  %vm3461 = vcmp.ge.s32.totalorder %v848, %v3455
  %vm3462 = vcmp.ge.s32.totalorder %v849, %v3455
  %vm3463 = vcmp.ge.s32.totalorder %v850, %v3455
  %vm3464 = vcmp.ge.s32.totalorder %v851, %v3455
  %vm3465 = vcmp.ge.s32.totalorder %v852, %v3455
  %vm3466 = vcmp.ge.s32.totalorder %v853, %v3455
  %vm3467 = vcmp.ge.s32.totalorder %v854, %v3455
  %vm3468 = vcmp.ge.s32.totalorder %v855, %v3455
  %vm3469 = vcmp.ge.s32.totalorder %v856, %v3455
  %vm3470 = vcmp.ge.s32.totalorder %v857, %v3455
  %vm3471 = vcmp.ge.s32.totalorder %v858, %v3455
  %v3472 = vsel %vm3456, 1, 0
  %v3473 = vsel %vm3457, 1, 0
  %v3474 = vsel %vm3458, 1, 0
  %v3475 = vsel %vm3459, 1, 0
  %v3476 = vsel %vm3460, 1, 0
  %v3477 = vsel %vm3461, 1, 0
  %v3478 = vsel %vm3462, 1, 0
  %v3479 = vsel %vm3463, 1, 0
  %v3480 = vsel %vm3464, 1, 0
  %v3481 = vsel %vm3465, 1, 0
  %v3482 = vsel %vm3466, 1, 0
  %v3483 = vsel %vm3467, 1, 0
  %v3484 = vsel %vm3468, 1, 0
  %v3485 = vsel %vm3469, 1, 0
  %v3486 = vsel %vm3470, 1, 0
  %v3487 = vsel %vm3471, 1, 0
  %v3488 = vsel %vm907, %v3472, 0
  %v3489 = vsel %vm907, %v3473, 0
  %v3490 = vsel %vm907, %v3474, 0
  %v3491 = vsel %vm907, %v3475, 0
  %v3492 = vsel %vm907, %v3476, 0
  %v3493 = vadd.s32 %v3488, %v3492
  %v3494 = vsel %vm907, %v3477, 0
  %v3495 = vadd.s32 %v3489, %v3494
  %v3496 = vsel %vm907, %v3478, 0
  %v3497 = vadd.s32 %v3490, %v3496
  %v3498 = vsel %vm907, %v3479, 0
  %v3499 = vadd.s32 %v3491, %v3498
  %v3500 = vsel %vm907, %v3480, 0
  %v3501 = vadd.s32 %v3493, %v3500
  %v3502 = vsel %vm907, %v3481, 0
  %v3503 = vadd.s32 %v3495, %v3502
  %v3504 = vsel %vm907, %v3482, 0
  %v3505 = vadd.s32 %v3497, %v3504
  %v3506 = vsel %vm907, %v3483, 0
  %v3507 = vadd.s32 %v3499, %v3506
  %v3508 = vsel %vm907, %v3484, 0
  %v3509 = vadd.s32 %v3501, %v3508
  %v3510 = vsel %vm907, %v3485, 0
  %v3511 = vadd.s32 %v3503, %v3510
  %v3512 = vsel %vm907, %v3486, 0
  %v3513 = vadd.s32 %v3505, %v3512
  %v3514 = vsel %vm907, %v3487, 0
  %v3515 = vadd.s32 %v3507, %v3514
  %v3516 = vadd.s32 %v3509, %v3511
  %v3517 = vadd.s32 %v3513, %v3515
  %v3518 = vadd.s32 %v3516, %v3517
  %v3519 = vand.u32 %v3518, 65535
  %v3520 = vshrl.u32 %v3518, 16
  %v3521 = vcvt.s32.f32 %v3519
  %v3522 = vcvt.s32.f32 %v3520
  %3523 = vadd.xlane.f32.xlu0 %v3521
  %v3524 = vpop.xlane.xlu0 %3523
  %3525 = vadd.xlane.f32.xlu0 %v3522
  %v3526 = vpop.xlane.xlu0 %3525
  %v3527 = vcvt.f32.s32 %v3524
  %v3528 = vcvt.f32.s32 %v3526
  %v3529 = vshll.u32 %v3528, 16
  %v3530 = vadd.s32 %v3529, %v3527
  %v3531 = vrot.slane %v3530, 4
  %v3532 = vadd.s32 %v3530, %v3531
  %v3533 = vrot.slane %v3532, 2
  %v3534 = vadd.s32 %v3532, %v3533
  %v3535 = vrot.slane %v3534, 1
  %v3536 = vadd.s32 %v3534, %v3535
  %s3537 = vtos %v3536
  %p3538 = scmp.ge.s32.totalorder %s3537, 56
  %s3539 = scalar_select %p3538, %s3454, %s3453
  %v3540 = vstv %s3539
  %vm3541 = vcmp.gt.s32.totalorder %v843, %v3540
  %vm3542 = vcmp.gt.s32.totalorder %v844, %v3540
  %vm3543 = vcmp.gt.s32.totalorder %v845, %v3540
  %vm3544 = vcmp.gt.s32.totalorder %v846, %v3540
  %vm3545 = vcmp.gt.s32.totalorder %v847, %v3540
  %vm3546 = vcmp.gt.s32.totalorder %v848, %v3540
  %vm3547 = vcmp.gt.s32.totalorder %v849, %v3540
  %vm3548 = vcmp.gt.s32.totalorder %v850, %v3540
  %vm3549 = vcmp.gt.s32.totalorder %v851, %v3540
  %vm3550 = vcmp.gt.s32.totalorder %v852, %v3540
  %vm3551 = vcmp.gt.s32.totalorder %v853, %v3540
  %vm3552 = vcmp.gt.s32.totalorder %v854, %v3540
  %vm3553 = vcmp.gt.s32.totalorder %v855, %v3540
  %vm3554 = vcmp.gt.s32.totalorder %v856, %v3540
  %vm3555 = vcmp.gt.s32.totalorder %v857, %v3540
  %vm3556 = vcmp.gt.s32.totalorder %v858, %v3540
  %v3557 = vsel %vm3541, 1, 0
  %v3558 = vsel %vm3542, 1, 0
  %v3559 = vsel %vm3543, 1, 0
  %v3560 = vsel %vm3544, 1, 0
  %v3561 = vsel %vm3545, 1, 0
  %v3562 = vsel %vm3546, 1, 0
  %v3563 = vsel %vm3547, 1, 0
  %v3564 = vsel %vm3548, 1, 0
  %v3565 = vsel %vm3549, 1, 0
  %v3566 = vsel %vm3550, 1, 0
  %v3567 = vsel %vm3551, 1, 0
  %v3568 = vsel %vm3552, 1, 0
  %v3569 = vsel %vm3553, 1, 0
  %v3570 = vsel %vm3554, 1, 0
  %v3571 = vsel %vm3555, 1, 0
  %v3572 = vsel %vm3556, 1, 0
  %v3573 = vcvt.s32.f32 %v3557
  %v3574 = vcvt.s32.f32 %v3558
  %v3575 = vcvt.s32.f32 %v3559
  %v3576 = vcvt.s32.f32 %v3560
  %v3577 = vcvt.s32.f32 %v3561
  %v3578 = vcvt.s32.f32 %v3562
  %v3579 = vcvt.s32.f32 %v3563
  %v3580 = vcvt.s32.f32 %v3564
  %v3581 = vcvt.s32.f32 %v3565
  %v3582 = vcvt.s32.f32 %v3566
  %v3583 = vcvt.s32.f32 %v3567
  %v3584 = vcvt.s32.f32 %v3568
  %v3585 = vcvt.s32.f32 %v3569
  %v3586 = vcvt.s32.f32 %v3570
  %v3587 = vcvt.s32.f32 %v3571
  %v3588 = vcvt.s32.f32 %v3572
  %v3589 = vlaneseq
  %v3590 = vshrl.u32 %v3589, 7
  %v3591 = vadd.s32 %v3590, 8
  %v3592 = vsub.s32 %v44, 1
  %vm3593 = vcmp.ge.s32.totalorder %v3590, %v3592
  %vm3594 = vcmp.ge.s32.totalorder %v3591, %v3592
  %vm3595 = vcmp.le.s32.totalorder %v3590, %v807
  %vm3596 = vcmp.le.s32.totalorder %v3591, %v807
  %vm3597 = vmand %vm3593, %vm3595
  %vm3598 = vmand %vm3594, %vm3596
  %v3599 = vsel %vm3597, 1, 0
  %v3600 = vsel %vm3598, 1, 0
  %v3601 = vcvt.s32.f32 %v3599
  %v3602 = vcvt.s32.f32 %v3600
  %v3604 = vsel %vm907, %v3573, 0
  %v3607 = vsel %vm907, %v3574, 0
  %v3610 = vsel %vm907, %v3575, 0
  %v3613 = vsel %vm907, %v3576, 0
  %v3616 = vsel %vm907, %v3577, 0
  %v3619 = vsel %vm907, %v3578, 0
  %v3622 = vsel %vm907, %v3579, 0
  %v3625 = vsel %vm907, %v3580, 0
  %v3628 = vsel %vm907, %v3581, 0
  %v3631 = vsel %vm907, %v3582, 0
  %v3634 = vsel %vm907, %v3583, 0
  %v3637 = vsel %vm907, %v3584, 0
  %v3640 = vsel %vm907, %v3585, 0
  %v3643 = vsel %vm907, %v3586, 0
  %v3646 = vsel %vm907, %v3587, 0
  %v3649 = vsel %vm907, %v3588, 0
  %3651 = vmatprep.subr.mxu0 0.0
  %3652 = vmatpush1.msra.mxu0 %v3601
  %3653 = vmatprep.subr.mxu0 0.0
  %3654 = vmatpush1.msra.mxu0 %v3602
  %3655 = vmatprep.subr.mxu0 0.0
  %3656 = vmatpush1.msra.mxu0 0.0
  %3657 = vmatprep.subr.mxu0 0.0
  %3658 = vmatpush1.msra.mxu0 0.0
  %3659 = vmatprep.subr.mxu0 0.0
  %3660 = vmatpush1.msra.mxu0 0.0
  %3661 = vmatprep.subr.mxu0 0.0
  %3662 = vmatpush1.msra.mxu0 0.0
  %3663 = vmatprep.subr.mxu0 0.0
  %3664 = vmatpush1.msra.mxu0 0.0
  %3665 = vmatprep.subr.mxu0 0.0
  %3666 = vmatpush1.msra.mxu0 0.0
  %3667 = vmatprep.subr.mxu0 0.0
  %3668 = vmatpush1.msra.mxu0 0.0
  %3669 = vmatprep.subr.mxu0 0.0
  %3670 = vmatpush1.msra.mxu0 0.0
  %3671 = vmatprep.subr.mxu0 0.0
  %3672 = vmatpush1.msra.mxu0 0.0
  %3673 = vmatprep.subr.mxu0 0.0
  %3674 = vmatpush1.msra.mxu0 0.0
  %3675 = vmatprep.subr.mxu0 0.0
  %3676 = vmatpush1.msra.mxu0 0.0
  %3677 = vmatprep.subr.mxu0 0.0
  %3678 = vmatpush1.msra.mxu0 0.0
  %3679 = vmatprep.subr.mxu0 0.0
  %3680 = vmatpush1.msra.mxu0 0.0
  %3681 = vmatprep.subr.mxu0 0.0
  %3682 = vmatpush1.msra.mxu0 0.0
  %3683 = vmatprep.subr.mxu0 0.0
  %3684 = vmatpush1.msra.mxu0 0.0
  %3685 = vmatprep.subr.mxu0 0.0
  %3686 = vmatpush1.msra.mxu0 0.0
  %3687 = vmatprep.subr.mxu0 0.0
  %3688 = vmatpush1.msra.mxu0 0.0
  %3689 = vmatprep.subr.mxu0 0.0
  %3690 = vmatpush1.msra.mxu0 0.0
  %3691 = vmatprep.subr.mxu0 0.0
  %3692 = vmatpush1.msra.mxu0 0.0
  %3693 = vmatprep.subr.mxu0 0.0
  %3694 = vmatpush1.msra.mxu0 0.0
  %3695 = vmatprep.subr.mxu0 0.0
  %3696 = vmatpush1.msra.mxu0 0.0
  %3697 = vmatprep.subr.mxu0 0.0
  %3698 = vmatpush1.msra.mxu0 0.0
  %3699 = vmatprep.subr.mxu0 0.0
  %3700 = vmatpush1.msra.mxu0 0.0
  %3701 = vmatprep.subr.mxu0 0.0
  %3702 = vmatpush1.msra.mxu0 0.0
  %3703 = vmatprep.subr.mxu0 0.0
  %3704 = vmatpush1.msra.mxu0 0.0
  %3705 = vmatprep.subr.mxu0 0.0
  %3706 = vmatpush1.msra.mxu0 0.0
  %3707 = vmatprep.subr.mxu0 0.0
  %3708 = vmatpush1.msra.mxu0 0.0
  %3709 = vmatprep.subr.mxu0 0.0
  %3710 = vmatpush1.msra.mxu0 0.0
  %3711 = vmatprep.subr.mxu0 0.0
  %3712 = vmatpush1.msra.mxu0 0.0
  %3713 = vmatprep.subr.mxu0 0.0
  %3714 = vmatpush1.msra.mxu0 0.0
  %3715 = vmatprep.mubr.f32.mxu0 0.0
  %3716 = vmatmul.mubr.f32.gmra.mrb[0].mxu0 %v3604
  %v3717 = vpop.f32.mrb[0].mxu0
  %v3718 = vadd.f32 0.0, %v3717
  %v3719 = vpop.f32.mrb[0].mxu0
  %3720 = vmatprep.mubr.f32.mxu0 0.0
  %3721 = vmatmul.mubr.f32.gmra.mrb[0].mxu0 %v3607
  %v3722 = vpop.f32.mrb[0].mxu0
  %v3723 = vadd.f32 0.0, %v3722
  %v3724 = vpop.f32.mrb[0].mxu0
  %3725 = vmatprep.mubr.f32.mxu0 0.0
  %3726 = vmatmul.mubr.f32.gmra.mrb[0].mxu0 %v3610
  %v3727 = vpop.f32.mrb[0].mxu0
  %v3728 = vadd.f32 0.0, %v3727
  %v3729 = vpop.f32.mrb[0].mxu0
  %3730 = vmatprep.mubr.f32.mxu0 0.0
  %3731 = vmatmul.mubr.f32.gmra.mrb[0].mxu0 %v3613
  %v3732 = vpop.f32.mrb[0].mxu0
  %v3733 = vadd.f32 0.0, %v3732
  %v3734 = vpop.f32.mrb[0].mxu0
  %3735 = vmatprep.mubr.f32.mxu0 0.0
  %3736 = vmatmul.mubr.f32.gmra.mrb[0].mxu0 %v3616
  %v3737 = vpop.f32.mrb[0].mxu0
  %v3738 = vadd.f32 0.0, %v3737
  %v3739 = vpop.f32.mrb[0].mxu0
  %3740 = vmatprep.mubr.f32.mxu0 0.0
  %3741 = vmatmul.mubr.f32.gmra.mrb[0].mxu0 %v3619
  %v3742 = vpop.f32.mrb[0].mxu0
  %v3743 = vadd.f32 0.0, %v3742
  %v3744 = vpop.f32.mrb[0].mxu0
  %3745 = vmatprep.mubr.f32.mxu0 0.0
  %3746 = vmatmul.mubr.f32.gmra.mrb[0].mxu0 %v3622
  %v3747 = vpop.f32.mrb[0].mxu0
  %v3748 = vadd.f32 0.0, %v3747
  %v3749 = vpop.f32.mrb[0].mxu0
  %3750 = vmatprep.mubr.f32.mxu0 0.0
  %3751 = vmatmul.mubr.f32.gmra.mrb[0].mxu0 %v3625
  %v3752 = vpop.f32.mrb[0].mxu0
  %v3753 = vadd.f32 0.0, %v3752
  %v3754 = vpop.f32.mrb[0].mxu0
  %3755 = vmatprep.mubr.f32.mxu0 0.0
  %3756 = vmatmul.mubr.f32.gmra.mrb[0].mxu0 %v3628
  %v3757 = vpop.f32.mrb[0].mxu0
  %v3758 = vadd.f32 0.0, %v3757
  %v3759 = vpop.f32.mrb[0].mxu0
  %3760 = vmatprep.mubr.f32.mxu0 0.0
  %3761 = vmatmul.mubr.f32.gmra.mrb[0].mxu0 %v3631
  %v3762 = vpop.f32.mrb[0].mxu0
  %v3763 = vadd.f32 0.0, %v3762
  %v3764 = vpop.f32.mrb[0].mxu0
  %3765 = vmatprep.mubr.f32.mxu0 0.0
  %3766 = vmatmul.mubr.f32.gmra.mrb[0].mxu0 %v3634
  %v3767 = vpop.f32.mrb[0].mxu0
  %v3768 = vadd.f32 0.0, %v3767
  %v3769 = vpop.f32.mrb[0].mxu0
  %3770 = vmatprep.mubr.f32.mxu0 0.0
  %3771 = vmatmul.mubr.f32.gmra.mrb[0].mxu0 %v3637
  %v3772 = vpop.f32.mrb[0].mxu0
  %v3773 = vadd.f32 0.0, %v3772
  %v3774 = vpop.f32.mrb[0].mxu0
  %3775 = vmatprep.mubr.f32.mxu0 0.0
  %3776 = vmatmul.mubr.f32.gmra.mrb[0].mxu0 %v3640
  %v3777 = vpop.f32.mrb[0].mxu0
  %v3778 = vadd.f32 0.0, %v3777
  %v3779 = vpop.f32.mrb[0].mxu0
  %3780 = vmatprep.mubr.f32.mxu0 0.0
  %3781 = vmatmul.mubr.f32.gmra.mrb[0].mxu0 %v3643
  %v3782 = vpop.f32.mrb[0].mxu0
  %v3783 = vadd.f32 0.0, %v3782
  %v3784 = vpop.f32.mrb[0].mxu0
  %3785 = vmatprep.mubr.f32.mxu0 0.0
  %3786 = vmatmul.mubr.f32.gmra.mrb[0].mxu0 %v3646
  %v3787 = vpop.f32.mrb[0].mxu0
  %v3788 = vadd.f32 0.0, %v3787
  %v3789 = vpop.f32.mrb[0].mxu0
  %3790 = vmatprep.mubr.f32.mxu0 0.0
  %3791 = vmatmul.mubr.f32.gmra.mrb[0].mxu0 %v3649
  %v3792 = vpop.f32.mrb[0].mxu0
  %v3793 = vadd.f32 0.0, %v3792
  %v3794 = vpop.f32.mrb[0].mxu0
  %3795 = vdwg.mxu0
  %v3797 = vrot.slane %v3793, 7
  %v3814 = vrot.slane %v3718, 7
  %v3815 = vrot.slane %v3723, 7
  %v3816 = vsel %vm79, %v3814, %v3815
  %v3817 = vrot.slane %v3728, 7
  %v3818 = vsel %vm79, %v3815, %v3817
  %v3819 = vrot.slane %v3733, 7
  %v3820 = vsel %vm79, %v3817, %v3819
  %v3821 = vrot.slane %v3738, 7
  %v3822 = vsel %vm79, %v3819, %v3821
  %v3823 = vrot.slane %v3743, 7
  %v3824 = vsel %vm79, %v3821, %v3823
  %v3825 = vrot.slane %v3748, 7
  %v3826 = vsel %vm79, %v3823, %v3825
  %v3827 = vrot.slane %v3753, 7
  %v3828 = vsel %vm79, %v3825, %v3827
  %v3829 = vrot.slane %v3758, 7
  %v3830 = vsel %vm79, %v3827, %v3829
  %v3831 = vrot.slane %v3763, 7
  %v3832 = vsel %vm79, %v3829, %v3831
  %v3833 = vrot.slane %v3768, 7
  %v3834 = vsel %vm79, %v3831, %v3833
  %v3835 = vrot.slane %v3773, 7
  %v3836 = vsel %vm79, %v3833, %v3835
  %v3837 = vrot.slane %v3778, 7
  %v3838 = vsel %vm79, %v3835, %v3837
  %v3839 = vrot.slane %v3783, 7
  %v3840 = vsel %vm79, %v3837, %v3839
  %v3841 = vrot.slane %v3788, 7
  %v3842 = vsel %vm79, %v3839, %v3841
  %v3843 = vsel %vm79, %v3841, %v3797
  %v3860 = vsel %vm79, %v3797, %v3814
  %v3861 = vsel %vm255, %v3860, 0.0
  %v3862 = vsel %vm256, %v3816, 0.0
  %v3863 = vsel %vm257, %v3818, 0.0
  %v3864 = vsel %vm258, %v3820, 0.0
  %v3865 = vsel %vm259, %v3822, 0.0
  %v3866 = vsel %vm260, %v3824, 0.0
  %v3867 = vsel %vm261, %v3826, 0.0
  %v3868 = vsel %vm262, %v3828, 0.0
  %v3869 = vsel %vm263, %v3830, 0.0
  %v3870 = vsel %vm264, %v3832, 0.0
  %v3871 = vsel %vm265, %v3834, 0.0
  %v3872 = vsel %vm266, %v3836, 0.0
  %v3873 = vsel %vm267, %v3838, 0.0
  %v3874 = vsel %vm268, %v3840, 0.0
  %v3875 = vsel %vm269, %v3842, 0.0
  %v3876 = vsel %vm270, %v3843, 0.0
  %v3877 = vadd.f32 %v3861, %v3718
  %v3878 = vadd.f32 %v3862, %v3723
  %v3879 = vadd.f32 %v3863, %v3728
  %v3880 = vadd.f32 %v3864, %v3733
  %v3881 = vadd.f32 %v3865, %v3738
  %v3882 = vadd.f32 %v3866, %v3743
  %v3883 = vadd.f32 %v3867, %v3748
  %v3884 = vadd.f32 %v3868, %v3753
  %v3885 = vadd.f32 %v3869, %v3758
  %v3886 = vadd.f32 %v3870, %v3763
  %v3887 = vadd.f32 %v3871, %v3768
  %v3888 = vadd.f32 %v3872, %v3773
  %v3889 = vadd.f32 %v3873, %v3778
  %v3890 = vadd.f32 %v3874, %v3783
  %v3891 = vadd.f32 %v3875, %v3788
  %v3892 = vadd.f32 %v3876, %v3793
  %v3893 = vrot.slane %v3718, 1
  %v3894 = vrot.slane %v3723, 1
  %v3895 = vsel %vm303, %v3893, %v3894
  %v3896 = vrot.slane %v3728, 1
  %v3897 = vsel %vm303, %v3894, %v3896
  %v3898 = vrot.slane %v3733, 1
  %v3899 = vsel %vm303, %v3896, %v3898
  %v3900 = vrot.slane %v3738, 1
  %v3901 = vsel %vm303, %v3898, %v3900
  %v3902 = vrot.slane %v3743, 1
  %v3903 = vsel %vm303, %v3900, %v3902
  %v3904 = vrot.slane %v3748, 1
  %v3905 = vsel %vm303, %v3902, %v3904
  %v3906 = vrot.slane %v3753, 1
  %v3907 = vsel %vm303, %v3904, %v3906
  %v3908 = vrot.slane %v3758, 1
  %v3909 = vsel %vm303, %v3906, %v3908
  %v3910 = vrot.slane %v3763, 1
  %v3911 = vsel %vm303, %v3908, %v3910
  %v3912 = vrot.slane %v3768, 1
  %v3913 = vsel %vm303, %v3910, %v3912
  %v3914 = vrot.slane %v3773, 1
  %v3915 = vsel %vm303, %v3912, %v3914
  %v3916 = vrot.slane %v3778, 1
  %v3917 = vsel %vm303, %v3914, %v3916
  %v3918 = vrot.slane %v3783, 1
  %v3919 = vsel %vm303, %v3916, %v3918
  %v3920 = vrot.slane %v3788, 1
  %v3921 = vsel %vm303, %v3918, %v3920
  %v3922 = vrot.slane %v3793, 1
  %v3923 = vsel %vm303, %v3920, %v3922
  %v3941 = vsel %vm303, %v3922, %v3893
  %v3942 = vsel %vm481, %v3895, 0.0
  %v3943 = vsel %vm482, %v3897, 0.0
  %v3944 = vsel %vm483, %v3899, 0.0
  %v3945 = vsel %vm484, %v3901, 0.0
  %v3946 = vsel %vm485, %v3903, 0.0
  %v3947 = vsel %vm486, %v3905, 0.0
  %v3948 = vsel %vm487, %v3907, 0.0
  %v3949 = vsel %vm488, %v3909, 0.0
  %v3950 = vsel %vm489, %v3911, 0.0
  %v3951 = vsel %vm490, %v3913, 0.0
  %v3952 = vsel %vm491, %v3915, 0.0
  %v3953 = vsel %vm492, %v3917, 0.0
  %v3954 = vsel %vm493, %v3919, 0.0
  %v3955 = vsel %vm494, %v3921, 0.0
  %v3956 = vsel %vm495, %v3923, 0.0
  %v3957 = vsel %vm496, %v3941, 0.0
  %v3958 = vadd.f32 %v3877, %v3942
  %v3959 = vadd.f32 %v3878, %v3943
  %v3960 = vadd.f32 %v3879, %v3944
  %v3961 = vadd.f32 %v3880, %v3945
  %v3962 = vadd.f32 %v3881, %v3946
  %v3963 = vadd.f32 %v3882, %v3947
  %v3964 = vadd.f32 %v3883, %v3948
  %v3965 = vadd.f32 %v3884, %v3949
  %v3966 = vadd.f32 %v3885, %v3950
  %v3967 = vadd.f32 %v3886, %v3951
  %v3968 = vadd.f32 %v3887, %v3952
  %v3969 = vadd.f32 %v3888, %v3953
  %v3970 = vadd.f32 %v3889, %v3954
  %v3971 = vadd.f32 %v3890, %v3955
  %v3972 = vadd.f32 %v3891, %v3956
  %v3973 = vadd.f32 %v3892, %v3957
  %vm3974 = vcmp.gt.f32.partialorder %v3958, 0.5
  %vm3975 = vcmp.gt.f32.partialorder %v3959, 0.5
  %vm3976 = vcmp.gt.f32.partialorder %v3960, 0.5
  %vm3977 = vcmp.gt.f32.partialorder %v3961, 0.5
  %vm3978 = vcmp.gt.f32.partialorder %v3962, 0.5
  %vm3979 = vcmp.gt.f32.partialorder %v3963, 0.5
  %vm3980 = vcmp.gt.f32.partialorder %v3964, 0.5
  %vm3981 = vcmp.gt.f32.partialorder %v3965, 0.5
  %vm3982 = vcmp.gt.f32.partialorder %v3966, 0.5
  %vm3983 = vcmp.gt.f32.partialorder %v3967, 0.5
  %vm3984 = vcmp.gt.f32.partialorder %v3968, 0.5
  %vm3985 = vcmp.gt.f32.partialorder %v3969, 0.5
  %vm3986 = vcmp.gt.f32.partialorder %v3970, 0.5
  %vm3987 = vcmp.gt.f32.partialorder %v3971, 0.5
  %vm3988 = vcmp.gt.f32.partialorder %v3972, 0.5
  %vm3989 = vcmp.gt.f32.partialorder %v3973, 0.5
  %v3990 = vsel %vm3974, 0.0, %v11
  %v3991 = vsel %vm3975, 0.0, %v12
  %v3992 = vsel %vm3976, 0.0, %v13
  %v3993 = vsel %vm3977, 0.0, %v14
  %v3994 = vsel %vm3978, 0.0, %v15
  %v3995 = vsel %vm3979, 0.0, %v16
  %v3996 = vsel %vm3980, 0.0, %v17
  %v3997 = vsel %vm3981, 0.0, %v18
  %v3998 = vsel %vm3982, 0.0, %v19
  %v3999 = vsel %vm3983, 0.0, %v20
  %v4000 = vsel %vm3984, 0.0, %v21
  %v4001 = vsel %vm3985, 0.0, %v22
  %v4002 = vsel %vm3986, 0.0, %v23
  %v4003 = vsel %vm3987, 0.0, %v24
  %v4004 = vsel %vm3988, 0.0, %v25
  %v4005 = vsel %vm3989, 0.0, %v26
  %4006 = vst.msk [vmem:[%s2] sm:$0xff] %vm907, %v3990
  %4007 = vst.msk [vmem:[%s2 + $0x8] sm:$0xff] %vm907, %v3991
  %4008 = vst.msk [vmem:[%s2 + $0x10] sm:$0xff] %vm907, %v3992
  %4009 = vst.msk [vmem:[%s2 + $0x18] sm:$0xff] %vm907, %v3993
  %4010 = vst.msk [vmem:[%s2 + $0x20] sm:$0xff] %vm907, %v3994
  %4011 = vst.msk [vmem:[%s2 + $0x28] sm:$0xff] %vm907, %v3995
  %4012 = vst.msk [vmem:[%s2 + $0x30] sm:$0xff] %vm907, %v3996
  %4013 = vst.msk [vmem:[%s2 + $0x38] sm:$0xff] %vm907, %v3997
  %4014 = vst.msk [vmem:[%s2 + $0x40] sm:$0xff] %vm907, %v3998
  %4015 = vst.msk [vmem:[%s2 + $0x48] sm:$0xff] %vm907, %v3999
  %4016 = vst.msk [vmem:[%s2 + $0x50] sm:$0xff] %vm907, %v4000
  %4017 = vst.msk [vmem:[%s2 + $0x58] sm:$0xff] %vm907, %v4001
  %4018 = vst.msk [vmem:[%s2 + $0x60] sm:$0xff] %vm907, %v4002
  %4019 = vst.msk [vmem:[%s2 + $0x68] sm:$0xff] %vm907, %v4003
  %4020 = vst.msk [vmem:[%s2 + $0x70] sm:$0xff] %vm907, %v4004
  %4021 = vst.msk [vmem:[%s2 + $0x78] sm:$0xff] %vm907, %v4005
  // Predicated region
  $region10: #{tpu_custom_call.1} parent=0 // pred_check
    _
  $region11: #{tpu_custom_call.1} parent=0 // pred_check_branch
    %4023 = sbr.rel (0) target = $region13
  $region12: #{tpu_custom_call.1} parent=0 // pred_region
    _
  $region13: #{tpu_custom_call.1} parent=0 // pred_fallthru
    _
  // Predicated region
  $region14: #{tpu_custom_call.1} parent=0 // pred_check
    _
  $region15: #{tpu_custom_call.1} parent=0 // pred_check_branch
    %4025 = sbr.rel (0) target = $region17
  $region16: #{tpu_custom_call.1} parent=0 // pred_region
    _
  $region17: #{tpu_custom_call.1} parent=0 // pred_fallthru
    _

</llo_original>
